<compile_context>
chip_gen: v7x
topology: tpu7x:2x2x1
jax: 0.10.0
libtpu: 0.0.40
codegen_flags: <defaults>
</compile_context>

<pallas_src>
import functools

import jax
import jax.numpy as jnp
from jax import lax
from jax.experimental import pallas as pl
from jax.experimental.pallas import tpu as pltpu

CFG = dict(
    vocab_size=128,
    context_length=16,
    emb_dim=32,
    n_heads=4,
    n_layers=2,
    drop_rate=0.0,   # dropout == identity (exact eval-mode semantics)
    qkv_bias=False,
)

_EPS = 1e-5
_NEG_INF = -1e30


# ---------------------------------------------------------------------------
# In-kernel math helpers (traced inside the Pallas kernel)
# ---------------------------------------------------------------------------
def _layer_norm(x, scale, shift):
    # matches book LayerNorm: mean/var over last dim, unbiased=False, eps=1e-5
    mean = jnp.mean(x, axis=-1, keepdims=True)
    xc = x - mean
    var = jnp.mean(xc * xc, axis=-1, keepdims=True)
    return xc * lax.rsqrt(var + _EPS) * scale + shift


def _gelu(x):
    # matches book GELU (tanh approximation)
    return 0.5 * x * (1.0 + jnp.tanh(
        jnp.sqrt(2.0 / jnp.pi) * (x + 0.044715 * x ** 3)))


# ---------------------------------------------------------------------------
# Fused Pallas kernel: embeddings -> n_layers blocks -> final LN -> vocab head
# ---------------------------------------------------------------------------
def gpt_forward_kernel(num_heads, n_layers,
                       idx_ref, tok_emb_ref, pos_ref, bias_ref,
                       ln1_s_ref, ln1_b_ref, wqkv_ref, wo_ref, bo_ref,
                       ln2_s_ref, ln2_b_ref, w1_ref, b1_ref, w2_ref, b2_ref,
                       fin_s_ref, fin_b_ref, wout_ref, o_ref):
    bt = idx_ref.shape[0]                      # flattened B*T rows
    vocab, d = tok_emb_ref.shape
    head_dim = d // num_heads
    inv_scale = 1.0 / (head_dim ** 0.5)

    # ---- token embedding as one-hot @ tok_emb (MXU), plus position add ----
    idx = idx_ref[...]                                            # (BT, 1) i32
    onehot = (idx == lax.broadcasted_iota(jnp.int32, (bt, vocab), 1)
              ).astype(jnp.float32)                               # (BT, V)
    x = jnp.dot(onehot, tok_emb_ref[...], preferred_element_type=jnp.float32)
    x = x + pos_ref[...]                                          # (BT, D)
    # drop_emb: drop_rate = 0.0 -> identity

    # Block-diagonal causal additive bias over flattened rows (precomputed in
    # the jitted wrapper): 0 where attendable, -1e30 elsewhere.
    bias = bias_ref[...]                                          # (BT, BT)

    for l in range(n_layers):                  # static unroll over layers
        # ---- attention sub-block: x + att(norm1(x)) ----
        h = _layer_norm(x, ln1_s_ref[l], ln1_b_ref[l])
        qkv = jnp.dot(h, wqkv_ref[l], preferred_element_type=jnp.float32)  # (BT, 3D)
        wo = wo_ref[l]                                            # (D, D)

        # Per-head attention; output projection folded in per head so we never
        # need an in-kernel concat: ctx @ Wo == sum_h ctx_h @ Wo[h_rows, :]
        attn = jnp.zeros((bt, d), jnp.float32)
        for hh in range(num_heads):
            lo = hh * head_dim
            qh = qkv[:, lo:lo + head_dim] * inv_scale
            kh = qkv[:, d + lo:d + lo + head_dim]
            vh = qkv[:, 2 * d + lo:2 * d + lo + head_dim]
            s = lax.dot_general(qh, kh, (((1,), (1,)), ((), ())),
                                preferred_element_type=jnp.float32)
            s = s + bias
            s = s - jnp.max(s, axis=-1, keepdims=True)
            p = jnp.exp(s)
            p = p * pl.reciprocal(jnp.sum(p, axis=-1, keepdims=True), approx=True)
            ctx = jnp.dot(p, vh, preferred_element_type=jnp.float32)
            attn = attn + jnp.dot(ctx, wo[lo:lo + head_dim, :],
                                  preferred_element_type=jnp.float32)
        x = x + attn + bo_ref[l]               # residual (dropout == identity)

        # ---- feed-forward sub-block: x + ff(norm2(x)) ----
        h2 = _layer_norm(x, ln2_s_ref[l], ln2_b_ref[l])
        ff = jnp.dot(h2, w1_ref[l], preferred_element_type=jnp.float32) + b1_ref[l]
        ff = _gelu(ff)
        ff = jnp.dot(ff, w2_ref[l], preferred_element_type=jnp.float32) + b2_ref[l]
        x = x + ff                             # residual (dropout == identity)

    # ---- final LayerNorm + vocab head (lane-dense V=128 output) ----
    hf = _layer_norm(x, fin_s_ref[...], fin_b_ref[...])
    o_ref[...] = jnp.dot(hf, wout_ref[...],
                         preferred_element_type=jnp.float32).astype(o_ref.dtype)


# ---------------------------------------------------------------------------
# Wrapper (single pallas_call for the whole forward pass)
# ---------------------------------------------------------------------------
def _full_spec(shape):
    nd = len(shape)
    return pl.BlockSpec(shape, lambda i, _nd=nd: (0,) * _nd)


def gpt_forward(in_idx, params, cfg):
    b, t = in_idx.shape
    d = cfg["emb_dim"]
    v = cfg["vocab_size"]
    bt = b * t

    idx_flat = in_idx.reshape(bt, 1).astype(jnp.int32)
    pos_bt = jnp.tile(params["pos_emb"][:t], (b, 1))              # (BT, D)

    # Block-diagonal causal additive bias over the flattened B*T rows.
    row = jnp.arange(bt)[:, None]
    col = jnp.arange(bt)[None, :]
    valid = ((row // t) == (col // t)) & (col <= row)
    attn_bias = jnp.where(valid, 0.0, _NEG_INF).astype(jnp.float32)

    args = [idx_flat, params["tok_emb"], pos_bt, attn_bias,
            params["ln1_scale"], params["ln1_shift"], params["wqkv"],
            params["wo"], params["bo"], params["ln2_scale"],
            params["ln2_shift"], params["w1"], params["b1"],
            params["w2"], params["b2"],
            params["final_ln_scale"], params["final_ln_shift"],
            params["out_head"]]

    logits_flat = pl.pallas_call(
        functools.partial(gpt_forward_kernel, cfg["n_heads"], cfg["n_layers"]),
        out_shape=jax.ShapeDtypeStruct((bt, v), jnp.float32),
        grid=(1,),
        in_specs=[_full_spec(a.shape) for a in args],
        out_specs=pl.BlockSpec((bt, v), lambda i: (0, 0)),
        compiler_params=pltpu.CompilerParams(
            dimension_semantics=("arbitrary",)),
    )(*args)
    return logits_flat.reshape(b, t, v)


# ---------------------------------------------------------------------------
# Parameter init (deterministic, synthetic) -- per-layer weights stacked along
# a leading n_layers axis so the kernel gets one ref per weight kind.
# ---------------------------------------------------------------------------
def init_params(key, cfg):
    d = cfg["emb_dim"]
    v = cfg["vocab_size"]
    c = cfg["context_length"]
    n_layers = cfg["n_layers"]

    keys = jax.random.split(key, 3 + n_layers)

    def _layer(k):
        kq, kk, kv, ko, k1, k2 = jax.random.split(k, 6)
        wq = 0.02 * jax.random.normal(kq, (d, d), jnp.float32)
        wk = 0.02 * jax.random.normal(kk, (d, d), jnp.float32)
        wv = 0.02 * jax.random.normal(kv, (d, d), jnp.float32)
        return dict(
            wqkv=jnp.concatenate([wq, wk, wv], axis=1),           # fused (D, 3D)
            wo=0.02 * jax.random.normal(ko, (d, d), jnp.float32),
            w1=0.02 * jax.random.normal(k1, (d, 4 * d), jnp.float32),
            w2=0.02 * jax.random.normal(k2, (4 * d, d), jnp.float32),
        )

    layers = [_layer(keys[3 + i]) for i in range(n_layers)]

    params = {
        "tok_emb": 0.02 * jax.random.normal(keys[0], (v, d), jnp.float32),
        "pos_emb": 0.02 * jax.random.normal(keys[1], (c, d), jnp.float32),
        "final_ln_scale": jnp.ones((1, d), jnp.float32),
        "final_ln_shift": jnp.zeros((1, d), jnp.float32),
        "out_head": 0.02 * jax.random.normal(keys[2], (d, v), jnp.float32),
        # stacked per-layer parameters (leading axis = layer)
        "ln1_scale": jnp.ones((n_layers, 1, d), jnp.float32),
        "ln1_shift": jnp.zeros((n_layers, 1, d), jnp.float32),
        "wqkv": jnp.stack([l["wqkv"] for l in layers]),           # (L, D, 3D)
        "wo": jnp.stack([l["wo"] for l in layers]),               # (L, D, D)
        "bo": jnp.zeros((n_layers, 1, d), jnp.float32),
        "ln2_scale": jnp.ones((n_layers, 1, d), jnp.float32),
        "ln2_shift": jnp.zeros((n_layers, 1, d), jnp.float32),
        "w1": jnp.stack([l["w1"] for l in layers]),               # (L, D, 4D)
        "b1": jnp.zeros((n_layers, 1, 4 * d), jnp.float32),
        "w2": jnp.stack([l["w2"] for l in layers]),               # (L, 4D, D)
        "b2": jnp.zeros((n_layers, 1, d), jnp.float32),
    }
    return params


if __name__ == "__main__":
    key = jax.random.PRNGKey(0)
    k_params, k_idx = jax.random.split(key)

    params = init_params(k_params, CFG)

    batch, seq_len = 2, 8
    in_idx = jax.random.randint(k_idx, (batch, seq_len), 0, CFG["vocab_size"],
                                dtype=jnp.int32)

    # Jit the whole forward: the tiny wrapper ops fuse and the single fused
    # pallas_call is cached (cfg is static via closure, params are traced).
    fwd = jax.jit(lambda idx, p: gpt_forward(idx, p, CFG))

    logits = fwd(in_idx, params)
    logits = jax.block_until_ready(logits)

    assert logits.shape == (batch, seq_len, CFG["vocab_size"])
    assert logits.dtype == jnp.float32
    print("KERNEL_OK")
</pallas_src>

<mosaic_0001>
module attributes {stable_mosaic.version = 11 : i64} {
  func.func @gpt_forward_kernel(%arg0: i32, %arg1: memref<16x1xi32, #tpu.memory_space<vmem>>, %arg2: memref<128x32xf32, #tpu.memory_space<vmem>>, %arg3: memref<16x32xf32, #tpu.memory_space<vmem>>, %arg4: memref<16x16xf32, #tpu.memory_space<vmem>>, %arg5: memref<2x1x32xf32, #tpu.memory_space<vmem>>, %arg6: memref<2x1x32xf32, #tpu.memory_space<vmem>>, %arg7: memref<2x32x96xf32, #tpu.memory_space<vmem>>, %arg8: memref<2x32x32xf32, #tpu.memory_space<vmem>>, %arg9: memref<2x1x32xf32, #tpu.memory_space<vmem>>, %arg10: memref<2x1x32xf32, #tpu.memory_space<vmem>>, %arg11: memref<2x1x32xf32, #tpu.memory_space<vmem>>, %arg12: memref<2x32x128xf32, #tpu.memory_space<vmem>>, %arg13: memref<2x1x128xf32, #tpu.memory_space<vmem>>, %arg14: memref<2x128x32xf32, #tpu.memory_space<vmem>>, %arg15: memref<2x1x32xf32, #tpu.memory_space<vmem>>, %arg16: memref<1x32xf32, #tpu.memory_space<vmem>>, %arg17: memref<1x32xf32, #tpu.memory_space<vmem>>, %arg18: memref<32x128xf32, #tpu.memory_space<vmem>>, %arg19: memref<16x128xf32, #tpu.memory_space<vmem>>) attributes {dimension_semantics = [#tpu.dimension_semantics<arbitrary>], iteration_bounds = array<i64: 1>, scalar_prefetch = 0 : i64, scratch_operands = 0 : i64, tpu.core_type = #tpu.core_type<tc>, window_params = [{pipeline_mode = #tpu.pipeline_mode<synchronous>, transform_indices = @transform_0, window_bounds = array<i64: 16, 1>}, {pipeline_mode = #tpu.pipeline_mode<synchronous>, transform_indices = @transform_1, window_bounds = array<i64: 128, 32>}, {pipeline_mode = #tpu.pipeline_mode<synchronous>, transform_indices = @transform_2, window_bounds = array<i64: 16, 32>}, {pipeline_mode = #tpu.pipeline_mode<synchronous>, transform_indices = @transform_3, window_bounds = array<i64: 16, 16>}, {pipeline_mode = #tpu.pipeline_mode<synchronous>, transform_indices = @transform_4, window_bounds = array<i64: 2, 1, 32>}, {pipeline_mode = #tpu.pipeline_mode<synchronous>, transform_indices = @transform_5, window_bounds = array<i64: 2, 1, 32>}, {pipeline_mode = #tpu.pipeline_mode<synchronous>, transform_indices = @transform_6, window_bounds = array<i64: 2, 32, 96>}, {pipeline_mode = #tpu.pipeline_mode<synchronous>, transform_indices = @transform_7, window_bounds = array<i64: 2, 32, 32>}, {pipeline_mode = #tpu.pipeline_mode<synchronous>, transform_indices = @transform_8, window_bounds = array<i64: 2, 1, 32>}, {pipeline_mode = #tpu.pipeline_mode<synchronous>, transform_indices = @transform_9, window_bounds = array<i64: 2, 1, 32>}, {pipeline_mode = #tpu.pipeline_mode<synchronous>, transform_indices = @transform_10, window_bounds = array<i64: 2, 1, 32>}, {pipeline_mode = #tpu.pipeline_mode<synchronous>, transform_indices = @transform_11, window_bounds = array<i64: 2, 32, 128>}, {pipeline_mode = #tpu.pipeline_mode<synchronous>, transform_indices = @transform_12, window_bounds = array<i64: 2, 1, 128>}, {pipeline_mode = #tpu.pipeline_mode<synchronous>, transform_indices = @transform_13, window_bounds = array<i64: 2, 128, 32>}, {pipeline_mode = #tpu.pipeline_mode<synchronous>, transform_indices = @transform_14, window_bounds = array<i64: 2, 1, 32>}, {pipeline_mode = #tpu.pipeline_mode<synchronous>, transform_indices = @transform_15, window_bounds = array<i64: 1, 32>}, {pipeline_mode = #tpu.pipeline_mode<synchronous>, transform_indices = @transform_16, window_bounds = array<i64: 1, 32>}, {pipeline_mode = #tpu.pipeline_mode<synchronous>, transform_indices = @transform_17, window_bounds = array<i64: 32, 128>}, {pipeline_mode = #tpu.pipeline_mode<synchronous>, transform_indices = @transform_18, window_bounds = array<i64: 16, 128>}]} {
    %c0 = arith.constant 0 : index
    %c0_0 = arith.constant 0 : index
    %0 = vector.load %arg1[%c0, %c0_0] : memref<16x1xi32, #tpu.memory_space<vmem>>, vector<16x1xi32>
    %1 = tpu.iota {dimensions = array<i32: 1>} : vector<16x128xi32>
    %2 = vector.broadcast %0 : vector<16x1xi32> to vector<16x128xi32>
    %3 = arith.cmpi eq, %2, %1 : vector<16x128xi32>
    %4 = arith.extui %3 : vector<16x128xi1> to vector<16x128xi32>
    %5 = arith.sitofp %4 : vector<16x128xi32> to vector<16x128xf32>
    %c0_1 = arith.constant 0 : index
    %c0_2 = arith.constant 0 : index
    %6 = vector.load %arg2[%c0_1, %c0_2] : memref<128x32xf32, #tpu.memory_space<vmem>>, vector<128x32xf32>
    %cst = arith.constant dense<0.000000e+00> : vector<16x32xf32>
    %7 = tpu.matmul %5, %6, %cst {dimension_numbers = #tpu.dot_dimension_numbers<[1], [0], [0], [1], [0, 0, 1, 1], [], []>} : vector<16x128xf32>, vector<128x32xf32>, vector<16x32xf32> -> vector<16x32xf32>
    %c0_3 = arith.constant 0 : index
    %c0_4 = arith.constant 0 : index
    %8 = vector.load %arg3[%c0_3, %c0_4] : memref<16x32xf32, #tpu.memory_space<vmem>>, vector<16x32xf32>
    %9 = arith.addf %7, %8 : vector<16x32xf32>
    %c0_5 = arith.constant 0 : index
    %c0_6 = arith.constant 0 : index
    %10 = vector.load %arg4[%c0_5, %c0_6] : memref<16x16xf32, #tpu.memory_space<vmem>>, vector<16x16xf32>
    %c0_7 = arith.constant 0 : index
    %c0_8 = arith.constant 0 : index
    %c0_9 = arith.constant 0 : index
    %11 = vector.load %arg5[%c0_7, %c0_8, %c0_9] : memref<2x1x32xf32, #tpu.memory_space<vmem>>, vector<1x1x32xf32>
    %12 = vector.shape_cast %11 : vector<1x1x32xf32> to vector<1x32xf32>
    %c0_10 = arith.constant 0 : index
    %c0_11 = arith.constant 0 : index
    %c0_12 = arith.constant 0 : index
    %13 = vector.load %arg6[%c0_10, %c0_11, %c0_12] : memref<2x1x32xf32, #tpu.memory_space<vmem>>, vector<1x1x32xf32>
    %14 = vector.shape_cast %13 : vector<1x1x32xf32> to vector<1x32xf32>
    %cst_13 = arith.constant dense<0.000000e+00> : vector<16xf32>
    %15 = vector.multi_reduction <add>, %9, %cst_13 [1] : vector<16x32xf32> to vector<16xf32>
    %16 = vector.shape_cast %15 : vector<16xf32> to vector<16x1xf32>
    %cst_14 = arith.constant 3.200000e+01 : f32
    %17 = vector.broadcast %cst_14 : f32 to vector<16x1xf32>
    %18 = arith.divf %16, %17 : vector<16x1xf32>
    %19 = vector.broadcast %18 : vector<16x1xf32> to vector<16x32xf32>
    %20 = arith.subf %9, %19 : vector<16x32xf32>
    %21 = arith.mulf %20, %20 : vector<16x32xf32>
    %cst_15 = arith.constant dense<0.000000e+00> : vector<16xf32>
    %22 = vector.multi_reduction <add>, %21, %cst_15 [1] : vector<16x32xf32> to vector<16xf32>
    %23 = vector.shape_cast %22 : vector<16xf32> to vector<16x1xf32>
    %cst_16 = arith.constant 3.200000e+01 : f32
    %24 = vector.broadcast %cst_16 : f32 to vector<16x1xf32>
    %25 = arith.divf %23, %24 : vector<16x1xf32>
    %cst_17 = arith.constant 9.99999974E-6 : f32
    %26 = vector.broadcast %cst_17 : f32 to vector<16x1xf32>
    %27 = arith.addf %25, %26 : vector<16x1xf32>
    %28 = math.rsqrt %27 : vector<16x1xf32>
    %29 = vector.broadcast %28 : vector<16x1xf32> to vector<16x32xf32>
    %30 = arith.mulf %20, %29 : vector<16x32xf32>
    %31 = vector.broadcast %12 : vector<1x32xf32> to vector<16x32xf32>
    %32 = arith.mulf %30, %31 : vector<16x32xf32>
    %33 = vector.broadcast %14 : vector<1x32xf32> to vector<16x32xf32>
    %34 = arith.addf %32, %33 : vector<16x32xf32>
    %c0_18 = arith.constant 0 : index
    %c0_19 = arith.constant 0 : index
    %c0_20 = arith.constant 0 : index
    %35 = vector.load %arg7[%c0_18, %c0_19, %c0_20] : memref<2x32x96xf32, #tpu.memory_space<vmem>>, vector<1x32x96xf32>
    %36 = vector.shape_cast %35 : vector<1x32x96xf32> to vector<32x96xf32>
    %cst_21 = arith.constant dense<0.000000e+00> : vector<16x96xf32>
    %37 = tpu.matmul %34, %36, %cst_21 {dimension_numbers = #tpu.dot_dimension_numbers<[1], [0], [0], [1], [0, 0, 1, 1], [], []>} : vector<16x32xf32>, vector<32x96xf32>, vector<16x96xf32> -> vector<16x96xf32>
    %c0_22 = arith.constant 0 : index
    %c0_23 = arith.constant 0 : index
    %c0_24 = arith.constant 0 : index
    %38 = vector.load %arg8[%c0_22, %c0_23, %c0_24] : memref<2x32x32xf32, #tpu.memory_space<vmem>>, vector<1x32x32xf32>
    %39 = vector.shape_cast %38 : vector<1x32x32xf32> to vector<32x32xf32>
    %cst_25 = arith.constant 0.000000e+00 : f32
    %40 = vector.broadcast %cst_25 : f32 to vector<16x32xf32>
    %41 = vector.extract_strided_slice %37 {offsets = [0, 0], sizes = [16, 8], strides = [1, 1]} : vector<16x96xf32> to vector<16x8xf32>
    %cst_26 = arith.constant 0.353553385 : f32
    %42 = vector.broadcast %cst_26 : f32 to vector<16x8xf32>
    %43 = arith.mulf %41, %42 : vector<16x8xf32>
    %44 = vector.extract_strided_slice %37 {offsets = [0, 32], sizes = [16, 8], strides = [1, 1]} : vector<16x96xf32> to vector<16x8xf32>
    %45 = vector.extract_strided_slice %37 {offsets = [0, 64], sizes = [16, 8], strides = [1, 1]} : vector<16x96xf32> to vector<16x8xf32>
    %cst_27 = arith.constant dense<0.000000e+00> : vector<16x16xf32>
    %46 = tpu.matmul %43, %44, %cst_27 {dimension_numbers = #tpu.dot_dimension_numbers<[1], [1], [0], [0], [0, 0, 1, 0], [], []>} : vector<16x8xf32>, vector<16x8xf32>, vector<16x16xf32> -> vector<16x16xf32>
    %47 = arith.addf %46, %10 : vector<16x16xf32>
    %cst_28 = arith.constant dense<0xFF800000> : vector<16xf32>
    %48 = vector.multi_reduction <maximumf>, %47, %cst_28 [1] : vector<16x16xf32> to vector<16xf32>
    %49 = vector.shape_cast %48 : vector<16xf32> to vector<16x1xf32>
    %50 = vector.broadcast %49 : vector<16x1xf32> to vector<16x16xf32>
    %51 = arith.subf %47, %50 : vector<16x16xf32>
    %52 = math.exp %51 : vector<16x16xf32>
    %cst_29 = arith.constant dense<0.000000e+00> : vector<16xf32>
    %53 = vector.multi_reduction <add>, %52, %cst_29 [1] : vector<16x16xf32> to vector<16xf32>
    %54 = vector.shape_cast %53 : vector<16xf32> to vector<16x1xf32>
    %55 = tpu.reciprocal %54 {approx = true} : vector<16x1xf32> -> vector<16x1xf32>
    %56 = vector.broadcast %55 : vector<16x1xf32> to vector<16x16xf32>
    %57 = arith.mulf %52, %56 : vector<16x16xf32>
    %cst_30 = arith.constant dense<0.000000e+00> : vector<16x8xf32>
    %58 = tpu.matmul %57, %45, %cst_30 {dimension_numbers = #tpu.dot_dimension_numbers<[1], [0], [0], [1], [0, 0, 1, 1], [], []>} : vector<16x16xf32>, vector<16x8xf32>, vector<16x8xf32> -> vector<16x8xf32>
    %59 = vector.extract_strided_slice %39 {offsets = [0, 0], sizes = [8, 32], strides = [1, 1]} : vector<32x32xf32> to vector<8x32xf32>
    %cst_31 = arith.constant dense<0.000000e+00> : vector<16x32xf32>
    %60 = tpu.matmul %58, %59, %cst_31 {dimension_numbers = #tpu.dot_dimension_numbers<[1], [0], [0], [1], [0, 0, 1, 1], [], []>} : vector<16x8xf32>, vector<8x32xf32>, vector<16x32xf32> -> vector<16x32xf32>
    %61 = arith.addf %40, %60 : vector<16x32xf32>
    %62 = vector.extract_strided_slice %37 {offsets = [0, 8], sizes = [16, 8], strides = [1, 1]} : vector<16x96xf32> to vector<16x8xf32>
    %cst_32 = arith.constant 0.353553385 : f32
    %63 = vector.broadcast %cst_32 : f32 to vector<16x8xf32>
    %64 = arith.mulf %62, %63 : vector<16x8xf32>
    %65 = vector.extract_strided_slice %37 {offsets = [0, 40], sizes = [16, 8], strides = [1, 1]} : vector<16x96xf32> to vector<16x8xf32>
    %66 = vector.extract_strided_slice %37 {offsets = [0, 72], sizes = [16, 8], strides = [1, 1]} : vector<16x96xf32> to vector<16x8xf32>
    %cst_33 = arith.constant dense<0.000000e+00> : vector<16x16xf32>
    %67 = tpu.matmul %64, %65, %cst_33 {dimension_numbers = #tpu.dot_dimension_numbers<[1], [1], [0], [0], [0, 0, 1, 0], [], []>} : vector<16x8xf32>, vector<16x8xf32>, vector<16x16xf32> -> vector<16x16xf32>
    %68 = arith.addf %67, %10 : vector<16x16xf32>
    %cst_34 = arith.constant dense<0xFF800000> : vector<16xf32>
    %69 = vector.multi_reduction <maximumf>, %68, %cst_34 [1] : vector<16x16xf32> to vector<16xf32>
    %70 = vector.shape_cast %69 : vector<16xf32> to vector<16x1xf32>
    %71 = vector.broadcast %70 : vector<16x1xf32> to vector<16x16xf32>
    %72 = arith.subf %68, %71 : vector<16x16xf32>
    %73 = math.exp %72 : vector<16x16xf32>
    %cst_35 = arith.constant dense<0.000000e+00> : vector<16xf32>
    %74 = vector.multi_reduction <add>, %73, %cst_35 [1] : vector<16x16xf32> to vector<16xf32>
    %75 = vector.shape_cast %74 : vector<16xf32> to vector<16x1xf32>
    %76 = tpu.reciprocal %75 {approx = true} : vector<16x1xf32> -> vector<16x1xf32>
    %77 = vector.broadcast %76 : vector<16x1xf32> to vector<16x16xf32>
    %78 = arith.mulf %73, %77 : vector<16x16xf32>
    %cst_36 = arith.constant dense<0.000000e+00> : vector<16x8xf32>
    %79 = tpu.matmul %78, %66, %cst_36 {dimension_numbers = #tpu.dot_dimension_numbers<[1], [0], [0], [1], [0, 0, 1, 1], [], []>} : vector<16x16xf32>, vector<16x8xf32>, vector<16x8xf32> -> vector<16x8xf32>
    %80 = vector.extract_strided_slice %39 {offsets = [8, 0], sizes = [8, 32], strides = [1, 1]} : vector<32x32xf32> to vector<8x32xf32>
    %cst_37 = arith.constant dense<0.000000e+00> : vector<16x32xf32>
    %81 = tpu.matmul %79, %80, %cst_37 {dimension_numbers = #tpu.dot_dimension_numbers<[1], [0], [0], [1], [0, 0, 1, 1], [], []>} : vector<16x8xf32>, vector<8x32xf32>, vector<16x32xf32> -> vector<16x32xf32>
    %82 = arith.addf %61, %81 : vector<16x32xf32>
    %83 = vector.extract_strided_slice %37 {offsets = [0, 16], sizes = [16, 8], strides = [1, 1]} : vector<16x96xf32> to vector<16x8xf32>
    %cst_38 = arith.constant 0.353553385 : f32
    %84 = vector.broadcast %cst_38 : f32 to vector<16x8xf32>
    %85 = arith.mulf %83, %84 : vector<16x8xf32>
    %86 = vector.extract_strided_slice %37 {offsets = [0, 48], sizes = [16, 8], strides = [1, 1]} : vector<16x96xf32> to vector<16x8xf32>
    %87 = vector.extract_strided_slice %37 {offsets = [0, 80], sizes = [16, 8], strides = [1, 1]} : vector<16x96xf32> to vector<16x8xf32>
    %cst_39 = arith.constant dense<0.000000e+00> : vector<16x16xf32>
    %88 = tpu.matmul %85, %86, %cst_39 {dimension_numbers = #tpu.dot_dimension_numbers<[1], [1], [0], [0], [0, 0, 1, 0], [], []>} : vector<16x8xf32>, vector<16x8xf32>, vector<16x16xf32> -> vector<16x16xf32>
    %89 = arith.addf %88, %10 : vector<16x16xf32>
    %cst_40 = arith.constant dense<0xFF800000> : vector<16xf32>
    %90 = vector.multi_reduction <maximumf>, %89, %cst_40 [1] : vector<16x16xf32> to vector<16xf32>
    %91 = vector.shape_cast %90 : vector<16xf32> to vector<16x1xf32>
    %92 = vector.broadcast %91 : vector<16x1xf32> to vector<16x16xf32>
    %93 = arith.subf %89, %92 : vector<16x16xf32>
    %94 = math.exp %93 : vector<16x16xf32>
    %cst_41 = arith.constant dense<0.000000e+00> : vector<16xf32>
    %95 = vector.multi_reduction <add>, %94, %cst_41 [1] : vector<16x16xf32> to vector<16xf32>
    %96 = vector.shape_cast %95 : vector<16xf32> to vector<16x1xf32>
    %97 = tpu.reciprocal %96 {approx = true} : vector<16x1xf32> -> vector<16x1xf32>
    %98 = vector.broadcast %97 : vector<16x1xf32> to vector<16x16xf32>
    %99 = arith.mulf %94, %98 : vector<16x16xf32>
    %cst_42 = arith.constant dense<0.000000e+00> : vector<16x8xf32>
    %100 = tpu.matmul %99, %87, %cst_42 {dimension_numbers = #tpu.dot_dimension_numbers<[1], [0], [0], [1], [0, 0, 1, 1], [], []>} : vector<16x16xf32>, vector<16x8xf32>, vector<16x8xf32> -> vector<16x8xf32>
    %101 = vector.extract_strided_slice %39 {offsets = [16, 0], sizes = [8, 32], strides = [1, 1]} : vector<32x32xf32> to vector<8x32xf32>
    %cst_43 = arith.constant dense<0.000000e+00> : vector<16x32xf32>
    %102 = tpu.matmul %100, %101, %cst_43 {dimension_numbers = #tpu.dot_dimension_numbers<[1], [0], [0], [1], [0, 0, 1, 1], [], []>} : vector<16x8xf32>, vector<8x32xf32>, vector<16x32xf32> -> vector<16x32xf32>
    %103 = arith.addf %82, %102 : vector<16x32xf32>
    %104 = vector.extract_strided_slice %37 {offsets = [0, 24], sizes = [16, 8], strides = [1, 1]} : vector<16x96xf32> to vector<16x8xf32>
    %cst_44 = arith.constant 0.353553385 : f32
    %105 = vector.broadcast %cst_44 : f32 to vector<16x8xf32>
    %106 = arith.mulf %104, %105 : vector<16x8xf32>
    %107 = vector.extract_strided_slice %37 {offsets = [0, 56], sizes = [16, 8], strides = [1, 1]} : vector<16x96xf32> to vector<16x8xf32>
    %108 = vector.extract_strided_slice %37 {offsets = [0, 88], sizes = [16, 8], strides = [1, 1]} : vector<16x96xf32> to vector<16x8xf32>
    %cst_45 = arith.constant dense<0.000000e+00> : vector<16x16xf32>
    %109 = tpu.matmul %106, %107, %cst_45 {dimension_numbers = #tpu.dot_dimension_numbers<[1], [1], [0], [0], [0, 0, 1, 0], [], []>} : vector<16x8xf32>, vector<16x8xf32>, vector<16x16xf32> -> vector<16x16xf32>
    %110 = arith.addf %109, %10 : vector<16x16xf32>
    %cst_46 = arith.constant dense<0xFF800000> : vector<16xf32>
    %111 = vector.multi_reduction <maximumf>, %110, %cst_46 [1] : vector<16x16xf32> to vector<16xf32>
    %112 = vector.shape_cast %111 : vector<16xf32> to vector<16x1xf32>
    %113 = vector.broadcast %112 : vector<16x1xf32> to vector<16x16xf32>
    %114 = arith.subf %110, %113 : vector<16x16xf32>
    %115 = math.exp %114 : vector<16x16xf32>
    %cst_47 = arith.constant dense<0.000000e+00> : vector<16xf32>
    %116 = vector.multi_reduction <add>, %115, %cst_47 [1] : vector<16x16xf32> to vector<16xf32>
    %117 = vector.shape_cast %116 : vector<16xf32> to vector<16x1xf32>
    %118 = tpu.reciprocal %117 {approx = true} : vector<16x1xf32> -> vector<16x1xf32>
    %119 = vector.broadcast %118 : vector<16x1xf32> to vector<16x16xf32>
    %120 = arith.mulf %115, %119 : vector<16x16xf32>
    %cst_48 = arith.constant dense<0.000000e+00> : vector<16x8xf32>
    %121 = tpu.matmul %120, %108, %cst_48 {dimension_numbers = #tpu.dot_dimension_numbers<[1], [0], [0], [1], [0, 0, 1, 1], [], []>} : vector<16x16xf32>, vector<16x8xf32>, vector<16x8xf32> -> vector<16x8xf32>
    %122 = vector.extract_strided_slice %39 {offsets = [24, 0], sizes = [8, 32], strides = [1, 1]} : vector<32x32xf32> to vector<8x32xf32>
    %cst_49 = arith.constant dense<0.000000e+00> : vector<16x32xf32>
    %123 = tpu.matmul %121, %122, %cst_49 {dimension_numbers = #tpu.dot_dimension_numbers<[1], [0], [0], [1], [0, 0, 1, 1], [], []>} : vector<16x8xf32>, vector<8x32xf32>, vector<16x32xf32> -> vector<16x32xf32>
    %124 = arith.addf %103, %123 : vector<16x32xf32>
    %125 = arith.addf %9, %124 : vector<16x32xf32>
    %c0_50 = arith.constant 0 : index
    %c0_51 = arith.constant 0 : index
    %c0_52 = arith.constant 0 : index
    %126 = vector.load %arg9[%c0_50, %c0_51, %c0_52] : memref<2x1x32xf32, #tpu.memory_space<vmem>>, vector<1x1x32xf32>
    %127 = vector.shape_cast %126 : vector<1x1x32xf32> to vector<1x32xf32>
    %128 = vector.broadcast %127 : vector<1x32xf32> to vector<16x32xf32>
    %129 = arith.addf %125, %128 : vector<16x32xf32>
    %c0_53 = arith.constant 0 : index
    %c0_54 = arith.constant 0 : index
    %c0_55 = arith.constant 0 : index
    %130 = vector.load %arg10[%c0_53, %c0_54, %c0_55] : memref<2x1x32xf32, #tpu.memory_space<vmem>>, vector<1x1x32xf32>
    %131 = vector.shape_cast %130 : vector<1x1x32xf32> to vector<1x32xf32>
    %c0_56 = arith.constant 0 : index
    %c0_57 = arith.constant 0 : index
    %c0_58 = arith.constant 0 : index
    %132 = vector.load %arg11[%c0_56, %c0_57, %c0_58] : memref<2x1x32xf32, #tpu.memory_space<vmem>>, vector<1x1x32xf32>
    %133 = vector.shape_cast %132 : vector<1x1x32xf32> to vector<1x32xf32>
    %cst_59 = arith.constant dense<0.000000e+00> : vector<16xf32>
    %134 = vector.multi_reduction <add>, %129, %cst_59 [1] : vector<16x32xf32> to vector<16xf32>
    %135 = vector.shape_cast %134 : vector<16xf32> to vector<16x1xf32>
    %cst_60 = arith.constant 3.200000e+01 : f32
    %136 = vector.broadcast %cst_60 : f32 to vector<16x1xf32>
    %137 = arith.divf %135, %136 : vector<16x1xf32>
    %138 = vector.broadcast %137 : vector<16x1xf32> to vector<16x32xf32>
    %139 = arith.subf %129, %138 : vector<16x32xf32>
    %140 = arith.mulf %139, %139 : vector<16x32xf32>
    %cst_61 = arith.constant dense<0.000000e+00> : vector<16xf32>
    %141 = vector.multi_reduction <add>, %140, %cst_61 [1] : vector<16x32xf32> to vector<16xf32>
    %142 = vector.shape_cast %141 : vector<16xf32> to vector<16x1xf32>
    %cst_62 = arith.constant 3.200000e+01 : f32
    %143 = vector.broadcast %cst_62 : f32 to vector<16x1xf32>
    %144 = arith.divf %142, %143 : vector<16x1xf32>
    %cst_63 = arith.constant 9.99999974E-6 : f32
    %145 = vector.broadcast %cst_63 : f32 to vector<16x1xf32>
    %146 = arith.addf %144, %145 : vector<16x1xf32>
    %147 = math.rsqrt %146 : vector<16x1xf32>
    %148 = vector.broadcast %147 : vector<16x1xf32> to vector<16x32xf32>
    %149 = arith.mulf %139, %148 : vector<16x32xf32>
    %150 = vector.broadcast %131 : vector<1x32xf32> to vector<16x32xf32>
    %151 = arith.mulf %149, %150 : vector<16x32xf32>
    %152 = vector.broadcast %133 : vector<1x32xf32> to vector<16x32xf32>
    %153 = arith.addf %151, %152 : vector<16x32xf32>
    %c0_64 = arith.constant 0 : index
    %c0_65 = arith.constant 0 : index
    %c0_66 = arith.constant 0 : index
    %154 = vector.load %arg12[%c0_64, %c0_65, %c0_66] : memref<2x32x128xf32, #tpu.memory_space<vmem>>, vector<1x32x128xf32>
    %155 = vector.shape_cast %154 : vector<1x32x128xf32> to vector<32x128xf32>
    %cst_67 = arith.constant dense<0.000000e+00> : vector<16x128xf32>
    %156 = tpu.matmul %153, %155, %cst_67 {dimension_numbers = #tpu.dot_dimension_numbers<[1], [0], [0], [1], [0, 0, 1, 1], [], []>} : vector<16x32xf32>, vector<32x128xf32>, vector<16x128xf32> -> vector<16x128xf32>
    %c0_68 = arith.constant 0 : index
    %c0_69 = arith.constant 0 : index
    %c0_70 = arith.constant 0 : index
    %157 = vector.load %arg13[%c0_68, %c0_69, %c0_70] : memref<2x1x128xf32, #tpu.memory_space<vmem>>, vector<1x1x128xf32>
    %158 = vector.shape_cast %157 : vector<1x1x128xf32> to vector<1x128xf32>
    %159 = vector.broadcast %158 : vector<1x128xf32> to vector<16x128xf32>
    %160 = arith.addf %156, %159 : vector<16x128xf32>
    %cst_71 = arith.constant 5.000000e-01 : f32
    %161 = vector.broadcast %cst_71 : f32 to vector<16x128xf32>
    %162 = arith.mulf %161, %160 : vector<16x128xf32>
    %cst_72 = arith.constant 0.636619746 : f32
    %163 = math.sqrt %cst_72 : f32
    %164 = arith.mulf %160, %160 : vector<16x128xf32>
    %165 = arith.mulf %160, %164 : vector<16x128xf32>
    %cst_73 = arith.constant 4.471500e-02 : f32
    %166 = vector.broadcast %cst_73 : f32 to vector<16x128xf32>
    %167 = arith.mulf %166, %165 : vector<16x128xf32>
    %168 = arith.addf %160, %167 : vector<16x128xf32>
    %169 = vector.broadcast %163 : f32 to vector<16x128xf32>
    %170 = arith.mulf %169, %168 : vector<16x128xf32>
    %171 = math.tanh %170 : vector<16x128xf32>
    %cst_74 = arith.constant 1.000000e+00 : f32
    %172 = vector.broadcast %cst_74 : f32 to vector<16x128xf32>
    %173 = arith.addf %172, %171 : vector<16x128xf32>
    %174 = arith.mulf %162, %173 : vector<16x128xf32>
    %c0_75 = arith.constant 0 : index
    %c0_76 = arith.constant 0 : index
    %c0_77 = arith.constant 0 : index
    %175 = vector.load %arg14[%c0_75, %c0_76, %c0_77] : memref<2x128x32xf32, #tpu.memory_space<vmem>>, vector<1x128x32xf32>
    %176 = vector.shape_cast %175 : vector<1x128x32xf32> to vector<128x32xf32>
    %cst_78 = arith.constant dense<0.000000e+00> : vector<16x32xf32>
    %177 = tpu.matmul %174, %176, %cst_78 {dimension_numbers = #tpu.dot_dimension_numbers<[1], [0], [0], [1], [0, 0, 1, 1], [], []>} : vector<16x128xf32>, vector<128x32xf32>, vector<16x32xf32> -> vector<16x32xf32>
    %c0_79 = arith.constant 0 : index
    %c0_80 = arith.constant 0 : index
    %c0_81 = arith.constant 0 : index
    %178 = vector.load %arg15[%c0_79, %c0_80, %c0_81] : memref<2x1x32xf32, #tpu.memory_space<vmem>>, vector<1x1x32xf32>
    %179 = vector.shape_cast %178 : vector<1x1x32xf32> to vector<1x32xf32>
    %180 = vector.broadcast %179 : vector<1x32xf32> to vector<16x32xf32>
    %181 = arith.addf %177, %180 : vector<16x32xf32>
    %182 = arith.addf %129, %181 : vector<16x32xf32>
    %c1 = arith.constant 1 : index
    %c0_82 = arith.constant 0 : index
    %c0_83 = arith.constant 0 : index
    %183 = vector.load %arg5[%c1, %c0_82, %c0_83] : memref<2x1x32xf32, #tpu.memory_space<vmem>>, vector<1x1x32xf32>
    %184 = vector.shape_cast %183 : vector<1x1x32xf32> to vector<1x32xf32>
    %c1_84 = arith.constant 1 : index
    %c0_85 = arith.constant 0 : index
    %c0_86 = arith.constant 0 : index
    %185 = vector.load %arg6[%c1_84, %c0_85, %c0_86] : memref<2x1x32xf32, #tpu.memory_space<vmem>>, vector<1x1x32xf32>
    %186 = vector.shape_cast %185 : vector<1x1x32xf32> to vector<1x32xf32>
    %cst_87 = arith.constant dense<0.000000e+00> : vector<16xf32>
    %187 = vector.multi_reduction <add>, %182, %cst_87 [1] : vector<16x32xf32> to vector<16xf32>
    %188 = vector.shape_cast %187 : vector<16xf32> to vector<16x1xf32>
    %cst_88 = arith.constant 3.200000e+01 : f32
    %189 = vector.broadcast %cst_88 : f32 to vector<16x1xf32>
    %190 = arith.divf %188, %189 : vector<16x1xf32>
    %191 = vector.broadcast %190 : vector<16x1xf32> to vector<16x32xf32>
    %192 = arith.subf %182, %191 : vector<16x32xf32>
    %193 = arith.mulf %192, %192 : vector<16x32xf32>
    %cst_89 = arith.constant dense<0.000000e+00> : vector<16xf32>
    %194 = vector.multi_reduction <add>, %193, %cst_89 [1] : vector<16x32xf32> to vector<16xf32>
    %195 = vector.shape_cast %194 : vector<16xf32> to vector<16x1xf32>
    %cst_90 = arith.constant 3.200000e+01 : f32
    %196 = vector.broadcast %cst_90 : f32 to vector<16x1xf32>
    %197 = arith.divf %195, %196 : vector<16x1xf32>
    %cst_91 = arith.constant 9.99999974E-6 : f32
    %198 = vector.broadcast %cst_91 : f32 to vector<16x1xf32>
    %199 = arith.addf %197, %198 : vector<16x1xf32>
    %200 = math.rsqrt %199 : vector<16x1xf32>
    %201 = vector.broadcast %200 : vector<16x1xf32> to vector<16x32xf32>
    %202 = arith.mulf %192, %201 : vector<16x32xf32>
    %203 = vector.broadcast %184 : vector<1x32xf32> to vector<16x32xf32>
    %204 = arith.mulf %202, %203 : vector<16x32xf32>
    %205 = vector.broadcast %186 : vector<1x32xf32> to vector<16x32xf32>
    %206 = arith.addf %204, %205 : vector<16x32xf32>
    %c1_92 = arith.constant 1 : index
    %c0_93 = arith.constant 0 : index
    %c0_94 = arith.constant 0 : index
    %207 = vector.load %arg7[%c1_92, %c0_93, %c0_94] : memref<2x32x96xf32, #tpu.memory_space<vmem>>, vector<1x32x96xf32>
    %208 = vector.shape_cast %207 : vector<1x32x96xf32> to vector<32x96xf32>
    %cst_95 = arith.constant dense<0.000000e+00> : vector<16x96xf32>
    %209 = tpu.matmul %206, %208, %cst_95 {dimension_numbers = #tpu.dot_dimension_numbers<[1], [0], [0], [1], [0, 0, 1, 1], [], []>} : vector<16x32xf32>, vector<32x96xf32>, vector<16x96xf32> -> vector<16x96xf32>
    %c1_96 = arith.constant 1 : index
    %c0_97 = arith.constant 0 : index
    %c0_98 = arith.constant 0 : index
    %210 = vector.load %arg8[%c1_96, %c0_97, %c0_98] : memref<2x32x32xf32, #tpu.memory_space<vmem>>, vector<1x32x32xf32>
    %211 = vector.shape_cast %210 : vector<1x32x32xf32> to vector<32x32xf32>
    %cst_99 = arith.constant 0.000000e+00 : f32
    %212 = vector.broadcast %cst_99 : f32 to vector<16x32xf32>
    %213 = vector.extract_strided_slice %209 {offsets = [0, 0], sizes = [16, 8], strides = [1, 1]} : vector<16x96xf32> to vector<16x8xf32>
    %cst_100 = arith.constant 0.353553385 : f32
    %214 = vector.broadcast %cst_100 : f32 to vector<16x8xf32>
    %215 = arith.mulf %213, %214 : vector<16x8xf32>
    %216 = vector.extract_strided_slice %209 {offsets = [0, 32], sizes = [16, 8], strides = [1, 1]} : vector<16x96xf32> to vector<16x8xf32>
    %217 = vector.extract_strided_slice %209 {offsets = [0, 64], sizes = [16, 8], strides = [1, 1]} : vector<16x96xf32> to vector<16x8xf32>
    %cst_101 = arith.constant dense<0.000000e+00> : vector<16x16xf32>
    %218 = tpu.matmul %215, %216, %cst_101 {dimension_numbers = #tpu.dot_dimension_numbers<[1], [1], [0], [0], [0, 0, 1, 0], [], []>} : vector<16x8xf32>, vector<16x8xf32>, vector<16x16xf32> -> vector<16x16xf32>
    %219 = arith.addf %218, %10 : vector<16x16xf32>
    %cst_102 = arith.constant dense<0xFF800000> : vector<16xf32>
    %220 = vector.multi_reduction <maximumf>, %219, %cst_102 [1] : vector<16x16xf32> to vector<16xf32>
    %221 = vector.shape_cast %220 : vector<16xf32> to vector<16x1xf32>
    %222 = vector.broadcast %221 : vector<16x1xf32> to vector<16x16xf32>
    %223 = arith.subf %219, %222 : vector<16x16xf32>
    %224 = math.exp %223 : vector<16x16xf32>
    %cst_103 = arith.constant dense<0.000000e+00> : vector<16xf32>
    %225 = vector.multi_reduction <add>, %224, %cst_103 [1] : vector<16x16xf32> to vector<16xf32>
    %226 = vector.shape_cast %225 : vector<16xf32> to vector<16x1xf32>
    %227 = tpu.reciprocal %226 {approx = true} : vector<16x1xf32> -> vector<16x1xf32>
    %228 = vector.broadcast %227 : vector<16x1xf32> to vector<16x16xf32>
    %229 = arith.mulf %224, %228 : vector<16x16xf32>
    %cst_104 = arith.constant dense<0.000000e+00> : vector<16x8xf32>
    %230 = tpu.matmul %229, %217, %cst_104 {dimension_numbers = #tpu.dot_dimension_numbers<[1], [0], [0], [1], [0, 0, 1, 1], [], []>} : vector<16x16xf32>, vector<16x8xf32>, vector<16x8xf32> -> vector<16x8xf32>
    %231 = vector.extract_strided_slice %211 {offsets = [0, 0], sizes = [8, 32], strides = [1, 1]} : vector<32x32xf32> to vector<8x32xf32>
    %cst_105 = arith.constant dense<0.000000e+00> : vector<16x32xf32>
    %232 = tpu.matmul %230, %231, %cst_105 {dimension_numbers = #tpu.dot_dimension_numbers<[1], [0], [0], [1], [0, 0, 1, 1], [], []>} : vector<16x8xf32>, vector<8x32xf32>, vector<16x32xf32> -> vector<16x32xf32>
    %233 = arith.addf %212, %232 : vector<16x32xf32>
    %234 = vector.extract_strided_slice %209 {offsets = [0, 8], sizes = [16, 8], strides = [1, 1]} : vector<16x96xf32> to vector<16x8xf32>
    %cst_106 = arith.constant 0.353553385 : f32
    %235 = vector.broadcast %cst_106 : f32 to vector<16x8xf32>
    %236 = arith.mulf %234, %235 : vector<16x8xf32>
    %237 = vector.extract_strided_slice %209 {offsets = [0, 40], sizes = [16, 8], strides = [1, 1]} : vector<16x96xf32> to vector<16x8xf32>
    %238 = vector.extract_strided_slice %209 {offsets = [0, 72], sizes = [16, 8], strides = [1, 1]} : vector<16x96xf32> to vector<16x8xf32>
    %cst_107 = arith.constant dense<0.000000e+00> : vector<16x16xf32>
    %239 = tpu.matmul %236, %237, %cst_107 {dimension_numbers = #tpu.dot_dimension_numbers<[1], [1], [0], [0], [0, 0, 1, 0], [], []>} : vector<16x8xf32>, vector<16x8xf32>, vector<16x16xf32> -> vector<16x16xf32>
    %240 = arith.addf %239, %10 : vector<16x16xf32>
    %cst_108 = arith.constant dense<0xFF800000> : vector<16xf32>
    %241 = vector.multi_reduction <maximumf>, %240, %cst_108 [1] : vector<16x16xf32> to vector<16xf32>
    %242 = vector.shape_cast %241 : vector<16xf32> to vector<16x1xf32>
    %243 = vector.broadcast %242 : vector<16x1xf32> to vector<16x16xf32>
    %244 = arith.subf %240, %243 : vector<16x16xf32>
    %245 = math.exp %244 : vector<16x16xf32>
    %cst_109 = arith.constant dense<0.000000e+00> : vector<16xf32>
    %246 = vector.multi_reduction <add>, %245, %cst_109 [1] : vector<16x16xf32> to vector<16xf32>
    %247 = vector.shape_cast %246 : vector<16xf32> to vector<16x1xf32>
    %248 = tpu.reciprocal %247 {approx = true} : vector<16x1xf32> -> vector<16x1xf32>
    %249 = vector.broadcast %248 : vector<16x1xf32> to vector<16x16xf32>
    %250 = arith.mulf %245, %249 : vector<16x16xf32>
    %cst_110 = arith.constant dense<0.000000e+00> : vector<16x8xf32>
    %251 = tpu.matmul %250, %238, %cst_110 {dimension_numbers = #tpu.dot_dimension_numbers<[1], [0], [0], [1], [0, 0, 1, 1], [], []>} : vector<16x16xf32>, vector<16x8xf32>, vector<16x8xf32> -> vector<16x8xf32>
    %252 = vector.extract_strided_slice %211 {offsets = [8, 0], sizes = [8, 32], strides = [1, 1]} : vector<32x32xf32> to vector<8x32xf32>
    %cst_111 = arith.constant dense<0.000000e+00> : vector<16x32xf32>
    %253 = tpu.matmul %251, %252, %cst_111 {dimension_numbers = #tpu.dot_dimension_numbers<[1], [0], [0], [1], [0, 0, 1, 1], [], []>} : vector<16x8xf32>, vector<8x32xf32>, vector<16x32xf32> -> vector<16x32xf32>
    %254 = arith.addf %233, %253 : vector<16x32xf32>
    %255 = vector.extract_strided_slice %209 {offsets = [0, 16], sizes = [16, 8], strides = [1, 1]} : vector<16x96xf32> to vector<16x8xf32>
    %cst_112 = arith.constant 0.353553385 : f32
    %256 = vector.broadcast %cst_112 : f32 to vector<16x8xf32>
    %257 = arith.mulf %255, %256 : vector<16x8xf32>
    %258 = vector.extract_strided_slice %209 {offsets = [0, 48], sizes = [16, 8], strides = [1, 1]} : vector<16x96xf32> to vector<16x8xf32>
    %259 = vector.extract_strided_slice %209 {offsets = [0, 80], sizes = [16, 8], strides = [1, 1]} : vector<16x96xf32> to vector<16x8xf32>
    %cst_113 = arith.constant dense<0.000000e+00> : vector<16x16xf32>
    %260 = tpu.matmul %257, %258, %cst_113 {dimension_numbers = #tpu.dot_dimension_numbers<[1], [1], [0], [0], [0, 0, 1, 0], [], []>} : vector<16x8xf32>, vector<16x8xf32>, vector<16x16xf32> -> vector<16x16xf32>
    %261 = arith.addf %260, %10 : vector<16x16xf32>
    %cst_114 = arith.constant dense<0xFF800000> : vector<16xf32>
    %262 = vector.multi_reduction <maximumf>, %261, %cst_114 [1] : vector<16x16xf32> to vector<16xf32>
    %263 = vector.shape_cast %262 : vector<16xf32> to vector<16x1xf32>
    %264 = vector.broadcast %263 : vector<16x1xf32> to vector<16x16xf32>
    %265 = arith.subf %261, %264 : vector<16x16xf32>
    %266 = math.exp %265 : vector<16x16xf32>
    %cst_115 = arith.constant dense<0.000000e+00> : vector<16xf32>
    %267 = vector.multi_reduction <add>, %266, %cst_115 [1] : vector<16x16xf32> to vector<16xf32>
    %268 = vector.shape_cast %267 : vector<16xf32> to vector<16x1xf32>
    %269 = tpu.reciprocal %268 {approx = true} : vector<16x1xf32> -> vector<16x1xf32>
    %270 = vector.broadcast %269 : vector<16x1xf32> to vector<16x16xf32>
    %271 = arith.mulf %266, %270 : vector<16x16xf32>
    %cst_116 = arith.constant dense<0.000000e+00> : vector<16x8xf32>
    %272 = tpu.matmul %271, %259, %cst_116 {dimension_numbers = #tpu.dot_dimension_numbers<[1], [0], [0], [1], [0, 0, 1, 1], [], []>} : vector<16x16xf32>, vector<16x8xf32>, vector<16x8xf32> -> vector<16x8xf32>
    %273 = vector.extract_strided_slice %211 {offsets = [16, 0], sizes = [8, 32], strides = [1, 1]} : vector<32x32xf32> to vector<8x32xf32>
    %cst_117 = arith.constant dense<0.000000e+00> : vector<16x32xf32>
    %274 = tpu.matmul %272, %273, %cst_117 {dimension_numbers = #tpu.dot_dimension_numbers<[1], [0], [0], [1], [0, 0, 1, 1], [], []>} : vector<16x8xf32>, vector<8x32xf32>, vector<16x32xf32> -> vector<16x32xf32>
    %275 = arith.addf %254, %274 : vector<16x32xf32>
    %276 = vector.extract_strided_slice %209 {offsets = [0, 24], sizes = [16, 8], strides = [1, 1]} : vector<16x96xf32> to vector<16x8xf32>
    %cst_118 = arith.constant 0.353553385 : f32
    %277 = vector.broadcast %cst_118 : f32 to vector<16x8xf32>
    %278 = arith.mulf %276, %277 : vector<16x8xf32>
    %279 = vector.extract_strided_slice %209 {offsets = [0, 56], sizes = [16, 8], strides = [1, 1]} : vector<16x96xf32> to vector<16x8xf32>
    %280 = vector.extract_strided_slice %209 {offsets = [0, 88], sizes = [16, 8], strides = [1, 1]} : vector<16x96xf32> to vector<16x8xf32>
    %cst_119 = arith.constant dense<0.000000e+00> : vector<16x16xf32>
    %281 = tpu.matmul %278, %279, %cst_119 {dimension_numbers = #tpu.dot_dimension_numbers<[1], [1], [0], [0], [0, 0, 1, 0], [], []>} : vector<16x8xf32>, vector<16x8xf32>, vector<16x16xf32> -> vector<16x16xf32>
    %282 = arith.addf %281, %10 : vector<16x16xf32>
    %cst_120 = arith.constant dense<0xFF800000> : vector<16xf32>
    %283 = vector.multi_reduction <maximumf>, %282, %cst_120 [1] : vector<16x16xf32> to vector<16xf32>
    %284 = vector.shape_cast %283 : vector<16xf32> to vector<16x1xf32>
    %285 = vector.broadcast %284 : vector<16x1xf32> to vector<16x16xf32>
    %286 = arith.subf %282, %285 : vector<16x16xf32>
    %287 = math.exp %286 : vector<16x16xf32>
    %cst_121 = arith.constant dense<0.000000e+00> : vector<16xf32>
    %288 = vector.multi_reduction <add>, %287, %cst_121 [1] : vector<16x16xf32> to vector<16xf32>
    %289 = vector.shape_cast %288 : vector<16xf32> to vector<16x1xf32>
    %290 = tpu.reciprocal %289 {approx = true} : vector<16x1xf32> -> vector<16x1xf32>
    %291 = vector.broadcast %290 : vector<16x1xf32> to vector<16x16xf32>
    %292 = arith.mulf %287, %291 : vector<16x16xf32>
    %cst_122 = arith.constant dense<0.000000e+00> : vector<16x8xf32>
    %293 = tpu.matmul %292, %280, %cst_122 {dimension_numbers = #tpu.dot_dimension_numbers<[1], [0], [0], [1], [0, 0, 1, 1], [], []>} : vector<16x16xf32>, vector<16x8xf32>, vector<16x8xf32> -> vector<16x8xf32>
    %294 = vector.extract_strided_slice %211 {offsets = [24, 0], sizes = [8, 32], strides = [1, 1]} : vector<32x32xf32> to vector<8x32xf32>
    %cst_123 = arith.constant dense<0.000000e+00> : vector<16x32xf32>
    %295 = tpu.matmul %293, %294, %cst_123 {dimension_numbers = #tpu.dot_dimension_numbers<[1], [0], [0], [1], [0, 0, 1, 1], [], []>} : vector<16x8xf32>, vector<8x32xf32>, vector<16x32xf32> -> vector<16x32xf32>
    %296 = arith.addf %275, %295 : vector<16x32xf32>
    %297 = arith.addf %182, %296 : vector<16x32xf32>
    %c1_124 = arith.constant 1 : index
    %c0_125 = arith.constant 0 : index
    %c0_126 = arith.constant 0 : index
    %298 = vector.load %arg9[%c1_124, %c0_125, %c0_126] : memref<2x1x32xf32, #tpu.memory_space<vmem>>, vector<1x1x32xf32>
    %299 = vector.shape_cast %298 : vector<1x1x32xf32> to vector<1x32xf32>
    %300 = vector.broadcast %299 : vector<1x32xf32> to vector<16x32xf32>
    %301 = arith.addf %297, %300 : vector<16x32xf32>
    %c1_127 = arith.constant 1 : index
    %c0_128 = arith.constant 0 : index
    %c0_129 = arith.constant 0 : index
    %302 = vector.load %arg10[%c1_127, %c0_128, %c0_129] : memref<2x1x32xf32, #tpu.memory_space<vmem>>, vector<1x1x32xf32>
    %303 = vector.shape_cast %302 : vector<1x1x32xf32> to vector<1x32xf32>
    %c1_130 = arith.constant 1 : index
    %c0_131 = arith.constant 0 : index
    %c0_132 = arith.constant 0 : index
    %304 = vector.load %arg11[%c1_130, %c0_131, %c0_132] : memref<2x1x32xf32, #tpu.memory_space<vmem>>, vector<1x1x32xf32>
    %305 = vector.shape_cast %304 : vector<1x1x32xf32> to vector<1x32xf32>
    %cst_133 = arith.constant dense<0.000000e+00> : vector<16xf32>
    %306 = vector.multi_reduction <add>, %301, %cst_133 [1] : vector<16x32xf32> to vector<16xf32>
    %307 = vector.shape_cast %306 : vector<16xf32> to vector<16x1xf32>
    %cst_134 = arith.constant 3.200000e+01 : f32
    %308 = vector.broadcast %cst_134 : f32 to vector<16x1xf32>
    %309 = arith.divf %307, %308 : vector<16x1xf32>
    %310 = vector.broadcast %309 : vector<16x1xf32> to vector<16x32xf32>
    %311 = arith.subf %301, %310 : vector<16x32xf32>
    %312 = arith.mulf %311, %311 : vector<16x32xf32>
    %cst_135 = arith.constant dense<0.000000e+00> : vector<16xf32>
    %313 = vector.multi_reduction <add>, %312, %cst_135 [1] : vector<16x32xf32> to vector<16xf32>
    %314 = vector.shape_cast %313 : vector<16xf32> to vector<16x1xf32>
    %cst_136 = arith.constant 3.200000e+01 : f32
    %315 = vector.broadcast %cst_136 : f32 to vector<16x1xf32>
    %316 = arith.divf %314, %315 : vector<16x1xf32>
    %cst_137 = arith.constant 9.99999974E-6 : f32
    %317 = vector.broadcast %cst_137 : f32 to vector<16x1xf32>
    %318 = arith.addf %316, %317 : vector<16x1xf32>
    %319 = math.rsqrt %318 : vector<16x1xf32>
    %320 = vector.broadcast %319 : vector<16x1xf32> to vector<16x32xf32>
    %321 = arith.mulf %311, %320 : vector<16x32xf32>
    %322 = vector.broadcast %303 : vector<1x32xf32> to vector<16x32xf32>
    %323 = arith.mulf %321, %322 : vector<16x32xf32>
    %324 = vector.broadcast %305 : vector<1x32xf32> to vector<16x32xf32>
    %325 = arith.addf %323, %324 : vector<16x32xf32>
    %c1_138 = arith.constant 1 : index
    %c0_139 = arith.constant 0 : index
    %c0_140 = arith.constant 0 : index
    %326 = vector.load %arg12[%c1_138, %c0_139, %c0_140] : memref<2x32x128xf32, #tpu.memory_space<vmem>>, vector<1x32x128xf32>
    %327 = vector.shape_cast %326 : vector<1x32x128xf32> to vector<32x128xf32>
    %cst_141 = arith.constant dense<0.000000e+00> : vector<16x128xf32>
    %328 = tpu.matmul %325, %327, %cst_141 {dimension_numbers = #tpu.dot_dimension_numbers<[1], [0], [0], [1], [0, 0, 1, 1], [], []>} : vector<16x32xf32>, vector<32x128xf32>, vector<16x128xf32> -> vector<16x128xf32>
    %c1_142 = arith.constant 1 : index
    %c0_143 = arith.constant 0 : index
    %c0_144 = arith.constant 0 : index
    %329 = vector.load %arg13[%c1_142, %c0_143, %c0_144] : memref<2x1x128xf32, #tpu.memory_space<vmem>>, vector<1x1x128xf32>
    %330 = vector.shape_cast %329 : vector<1x1x128xf32> to vector<1x128xf32>
    %331 = vector.broadcast %330 : vector<1x128xf32> to vector<16x128xf32>
    %332 = arith.addf %328, %331 : vector<16x128xf32>
    %cst_145 = arith.constant 5.000000e-01 : f32
    %333 = vector.broadcast %cst_145 : f32 to vector<16x128xf32>
    %334 = arith.mulf %333, %332 : vector<16x128xf32>
    %cst_146 = arith.constant 0.636619746 : f32
    %335 = math.sqrt %cst_146 : f32
    %336 = arith.mulf %332, %332 : vector<16x128xf32>
    %337 = arith.mulf %332, %336 : vector<16x128xf32>
    %cst_147 = arith.constant 4.471500e-02 : f32
    %338 = vector.broadcast %cst_147 : f32 to vector<16x128xf32>
    %339 = arith.mulf %338, %337 : vector<16x128xf32>
    %340 = arith.addf %332, %339 : vector<16x128xf32>
    %341 = vector.broadcast %335 : f32 to vector<16x128xf32>
    %342 = arith.mulf %341, %340 : vector<16x128xf32>
    %343 = math.tanh %342 : vector<16x128xf32>
    %cst_148 = arith.constant 1.000000e+00 : f32
    %344 = vector.broadcast %cst_148 : f32 to vector<16x128xf32>
    %345 = arith.addf %344, %343 : vector<16x128xf32>
    %346 = arith.mulf %334, %345 : vector<16x128xf32>
    %c1_149 = arith.constant 1 : index
    %c0_150 = arith.constant 0 : index
    %c0_151 = arith.constant 0 : index
    %347 = vector.load %arg14[%c1_149, %c0_150, %c0_151] : memref<2x128x32xf32, #tpu.memory_space<vmem>>, vector<1x128x32xf32>
    %348 = vector.shape_cast %347 : vector<1x128x32xf32> to vector<128x32xf32>
    %cst_152 = arith.constant dense<0.000000e+00> : vector<16x32xf32>
    %349 = tpu.matmul %346, %348, %cst_152 {dimension_numbers = #tpu.dot_dimension_numbers<[1], [0], [0], [1], [0, 0, 1, 1], [], []>} : vector<16x128xf32>, vector<128x32xf32>, vector<16x32xf32> -> vector<16x32xf32>
    %c1_153 = arith.constant 1 : index
    %c0_154 = arith.constant 0 : index
    %c0_155 = arith.constant 0 : index
    %350 = vector.load %arg15[%c1_153, %c0_154, %c0_155] : memref<2x1x32xf32, #tpu.memory_space<vmem>>, vector<1x1x32xf32>
    %351 = vector.shape_cast %350 : vector<1x1x32xf32> to vector<1x32xf32>
    %352 = vector.broadcast %351 : vector<1x32xf32> to vector<16x32xf32>
    %353 = arith.addf %349, %352 : vector<16x32xf32>
    %354 = arith.addf %301, %353 : vector<16x32xf32>
    %c0_156 = arith.constant 0 : index
    %c0_157 = arith.constant 0 : index
    %355 = vector.load %arg16[%c0_156, %c0_157] : memref<1x32xf32, #tpu.memory_space<vmem>>, vector<1x32xf32>
    %c0_158 = arith.constant 0 : index
    %c0_159 = arith.constant 0 : index
    %356 = vector.load %arg17[%c0_158, %c0_159] : memref<1x32xf32, #tpu.memory_space<vmem>>, vector<1x32xf32>
    %cst_160 = arith.constant dense<0.000000e+00> : vector<16xf32>
    %357 = vector.multi_reduction <add>, %354, %cst_160 [1] : vector<16x32xf32> to vector<16xf32>
    %358 = vector.shape_cast %357 : vector<16xf32> to vector<16x1xf32>
    %cst_161 = arith.constant 3.200000e+01 : f32
    %359 = vector.broadcast %cst_161 : f32 to vector<16x1xf32>
    %360 = arith.divf %358, %359 : vector<16x1xf32>
    %361 = vector.broadcast %360 : vector<16x1xf32> to vector<16x32xf32>
    %362 = arith.subf %354, %361 : vector<16x32xf32>
    %363 = arith.mulf %362, %362 : vector<16x32xf32>
    %cst_162 = arith.constant dense<0.000000e+00> : vector<16xf32>
    %364 = vector.multi_reduction <add>, %363, %cst_162 [1] : vector<16x32xf32> to vector<16xf32>
    %365 = vector.shape_cast %364 : vector<16xf32> to vector<16x1xf32>
    %cst_163 = arith.constant 3.200000e+01 : f32
    %366 = vector.broadcast %cst_163 : f32 to vector<16x1xf32>
    %367 = arith.divf %365, %366 : vector<16x1xf32>
    %cst_164 = arith.constant 9.99999974E-6 : f32
    %368 = vector.broadcast %cst_164 : f32 to vector<16x1xf32>
    %369 = arith.addf %367, %368 : vector<16x1xf32>
    %370 = math.rsqrt %369 : vector<16x1xf32>
    %371 = vector.broadcast %370 : vector<16x1xf32> to vector<16x32xf32>
    %372 = arith.mulf %362, %371 : vector<16x32xf32>
    %373 = vector.broadcast %355 : vector<1x32xf32> to vector<16x32xf32>
    %374 = arith.mulf %372, %373 : vector<16x32xf32>
    %375 = vector.broadcast %356 : vector<1x32xf32> to vector<16x32xf32>
    %376 = arith.addf %374, %375 : vector<16x32xf32>
    %c0_165 = arith.constant 0 : index
    %c0_166 = arith.constant 0 : index
    %377 = vector.load %arg18[%c0_165, %c0_166] : memref<32x128xf32, #tpu.memory_space<vmem>>, vector<32x128xf32>
    %cst_167 = arith.constant dense<0.000000e+00> : vector<16x128xf32>
    %378 = tpu.matmul %376, %377, %cst_167 {dimension_numbers = #tpu.dot_dimension_numbers<[1], [0], [0], [1], [0, 0, 1, 1], [], []>} : vector<16x32xf32>, vector<32x128xf32>, vector<16x128xf32> -> vector<16x128xf32>
    %c0_168 = arith.constant 0 : index
    %c0_169 = arith.constant 0 : index
    %379 = vector.load %arg19[%c0_168, %c0_169] : memref<16x128xf32, #tpu.memory_space<vmem>>, vector<16x128xf32>
    tpu.vector_store %arg19[%c0_168, %c0_169], %378 {strides = array<i32>} : memref<16x128xf32, #tpu.memory_space<vmem>>, vector<16x128xf32>,
    return
  }
  func.func @transform_0(%arg0: i32) -> (i32, i32) {
    %c0_i32 = arith.constant 0 : i32
    %c0_i32_0 = arith.constant 0 : i32
    %c0_i32_1 = arith.constant 0 : i32
    return %c0_i32, %c0_i32_0 : i32, i32
  }
  func.func @transform_1(%arg0: i32) -> (i32, i32) {
    %c0_i32 = arith.constant 0 : i32
    %c0_i32_0 = arith.constant 0 : i32
    %c0_i32_1 = arith.constant 0 : i32
    return %c0_i32, %c0_i32_0 : i32, i32
  }
  func.func @transform_2(%arg0: i32) -> (i32, i32) {
    %c0_i32 = arith.constant 0 : i32
    %c0_i32_0 = arith.constant 0 : i32
    %c0_i32_1 = arith.constant 0 : i32
    return %c0_i32, %c0_i32_0 : i32, i32
  }
  func.func @transform_3(%arg0: i32) -> (i32, i32) {
    %c0_i32 = arith.constant 0 : i32
    %c0_i32_0 = arith.constant 0 : i32
    %c0_i32_1 = arith.constant 0 : i32
    return %c0_i32, %c0_i32_0 : i32, i32
  }
  func.func @transform_4(%arg0: i32) -> (i32, i32, i32) {
    %c0_i32 = arith.constant 0 : i32
    %c0_i32_0 = arith.constant 0 : i32
    %c0_i32_1 = arith.constant 0 : i32
    %c0_i32_2 = arith.constant 0 : i32
    return %c0_i32, %c0_i32_0, %c0_i32_1 : i32, i32, i32
  }
  func.func @transform_5(%arg0: i32) -> (i32, i32, i32) {
    %c0_i32 = arith.constant 0 : i32
    %c0_i32_0 = arith.constant 0 : i32
    %c0_i32_1 = arith.constant 0 : i32
    %c0_i32_2 = arith.constant 0 : i32
    return %c0_i32, %c0_i32_0, %c0_i32_1 : i32, i32, i32
  }
  func.func @transform_6(%arg0: i32) -> (i32, i32, i32) {
    %c0_i32 = arith.constant 0 : i32
    %c0_i32_0 = arith.constant 0 : i32
    %c0_i32_1 = arith.constant 0 : i32
    %c0_i32_2 = arith.constant 0 : i32
    return %c0_i32, %c0_i32_0, %c0_i32_1 : i32, i32, i32
  }
  func.func @transform_7(%arg0: i32) -> (i32, i32, i32) {
    %c0_i32 = arith.constant 0 : i32
    %c0_i32_0 = arith.constant 0 : i32
    %c0_i32_1 = arith.constant 0 : i32
    %c0_i32_2 = arith.constant 0 : i32
    return %c0_i32, %c0_i32_0, %c0_i32_1 : i32, i32, i32
  }
  func.func @transform_8(%arg0: i32) -> (i32, i32, i32) {
    %c0_i32 = arith.constant 0 : i32
    %c0_i32_0 = arith.constant 0 : i32
    %c0_i32_1 = arith.constant 0 : i32
    %c0_i32_2 = arith.constant 0 : i32
    return %c0_i32, %c0_i32_0, %c0_i32_1 : i32, i32, i32
  }
  func.func @transform_9(%arg0: i32) -> (i32, i32, i32) {
    %c0_i32 = arith.constant 0 : i32
    %c0_i32_0 = arith.constant 0 : i32
    %c0_i32_1 = arith.constant 0 : i32
    %c0_i32_2 = arith.constant 0 : i32
    return %c0_i32, %c0_i32_0, %c0_i32_1 : i32, i32, i32
  }
  func.func @transform_10(%arg0: i32) -> (i32, i32, i32) {
    %c0_i32 = arith.constant 0 : i32
    %c0_i32_0 = arith.constant 0 : i32
    %c0_i32_1 = arith.constant 0 : i32
    %c0_i32_2 = arith.constant 0 : i32
    return %c0_i32, %c0_i32_0, %c0_i32_1 : i32, i32, i32
  }
  func.func @transform_11(%arg0: i32) -> (i32, i32, i32) {
    %c0_i32 = arith.constant 0 : i32
    %c0_i32_0 = arith.constant 0 : i32
    %c0_i32_1 = arith.constant 0 : i32
    %c0_i32_2 = arith.constant 0 : i32
    return %c0_i32, %c0_i32_0, %c0_i32_1 : i32, i32, i32
  }
  func.func @transform_12(%arg0: i32) -> (i32, i32, i32) {
    %c0_i32 = arith.constant 0 : i32
    %c0_i32_0 = arith.constant 0 : i32
    %c0_i32_1 = arith.constant 0 : i32
    %c0_i32_2 = arith.constant 0 : i32
    return %c0_i32, %c0_i32_0, %c0_i32_1 : i32, i32, i32
  }
  func.func @transform_13(%arg0: i32) -> (i32, i32, i32) {
    %c0_i32 = arith.constant 0 : i32
    %c0_i32_0 = arith.constant 0 : i32
    %c0_i32_1 = arith.constant 0 : i32
    %c0_i32_2 = arith.constant 0 : i32
    return %c0_i32, %c0_i32_0, %c0_i32_1 : i32, i32, i32
  }
  func.func @transform_14(%arg0: i32) -> (i32, i32, i32) {
    %c0_i32 = arith.constant 0 : i32
    %c0_i32_0 = arith.constant 0 : i32
    %c0_i32_1 = arith.constant 0 : i32
    %c0_i32_2 = arith.constant 0 : i32
    return %c0_i32, %c0_i32_0, %c0_i32_1 : i32, i32, i32
  }
  func.func @transform_15(%arg0: i32) -> (i32, i32) {
    %c0_i32 = arith.constant 0 : i32
    %c0_i32_0 = arith.constant 0 : i32
    %c0_i32_1 = arith.constant 0 : i32
    return %c0_i32, %c0_i32_0 : i32, i32
  }
  func.func @transform_16(%arg0: i32) -> (i32, i32) {
    %c0_i32 = arith.constant 0 : i32
    %c0_i32_0 = arith.constant 0 : i32
    %c0_i32_1 = arith.constant 0 : i32
    return %c0_i32, %c0_i32_0 : i32, i32
  }
  func.func @transform_17(%arg0: i32) -> (i32, i32) {
    %c0_i32 = arith.constant 0 : i32
    %c0_i32_0 = arith.constant 0 : i32
    %c0_i32_1 = arith.constant 0 : i32
    return %c0_i32, %c0_i32_0 : i32, i32
  }
  func.func @transform_18(%arg0: i32) -> (i32, i32) {
    %c0_i32 = arith.constant 0 : i32
    %c0_i32_0 = arith.constant 0 : i32
    %c0_i32_1 = arith.constant 0 : i32
    return %c0_i32, %c0_i32_0 : i32, i32
  }
}

</mosaic_0001>

<llo_original>
// kernel: _lambda_.1
$region0: #{_lambda_.1}
  #allocation0 [shape = 'u32[]', space=smem, size = 0x4, offset = 0x4, fixed_abs, tag = 'smem constant byte address 0x4 - core index']
  #allocation1 [shape = 'u32[144,128]{1,0:T(1,128)}', space=vmem, size = 0x12000, scoped, tag = 'internal scratch']
  %s0 = inlined_call_operand.vmem [shape: s32[16,1], index: 0, kind: input, shape index: {}]
  %s1 = inlined_call_operand.vmem [shape: f32[128,32], index: 1, kind: input, shape index: {}]
  %s2 = inlined_call_operand.vmem [shape: f32[16,32], index: 2, kind: input, shape index: {}]
  %s3 = inlined_call_operand.vmem [shape: f32[16,16], index: 3, kind: input, shape index: {}]
  %s4 = inlined_call_operand.vmem [shape: f32[2,1,32], index: 4, kind: input, shape index: {}]
  %s5 = inlined_call_operand.vmem [shape: f32[2,1,32], index: 5, kind: input, shape index: {}]
  %s6 = inlined_call_operand.vmem [shape: f32[2,32,96], index: 6, kind: input, shape index: {}]
  %s7 = inlined_call_operand.vmem [shape: f32[2,32,32], index: 7, kind: input, shape index: {}]
  %s8 = inlined_call_operand.vmem [shape: f32[2,1,32], index: 8, kind: input, shape index: {}]
  %s9 = inlined_call_operand.vmem [shape: f32[2,1,32], index: 9, kind: input, shape index: {}]
  %s10 = inlined_call_operand.vmem [shape: f32[2,1,32], index: 10, kind: input, shape index: {}]
  %s11 = inlined_call_operand.vmem [shape: f32[2,32,128], index: 11, kind: input, shape index: {}]
  %s12 = inlined_call_operand.vmem [shape: f32[2,1,128], index: 12, kind: input, shape index: {}]
  %s13 = inlined_call_operand.vmem [shape: f32[2,128,32], index: 13, kind: input, shape index: {}]
  %s14 = inlined_call_operand.vmem [shape: f32[2,1,32], index: 14, kind: input, shape index: {}]
  %s15 = inlined_call_operand.vmem [shape: f32[1,32], index: 15, kind: input, shape index: {}]
  %s16 = inlined_call_operand.vmem [shape: f32[1,32], index: 16, kind: input, shape index: {}]
  %s17 = inlined_call_operand.vmem [shape: f32[32,128], index: 17, kind: input, shape index: {}]
  %s18 = inlined_call_operand.hbm [shape: f32[16,128], index: 18, kind: output, shape index: {}]
  %s19 = sld [smem:[#allocation0]]
  $region82: #{_lambda_.1} parent=0
    _
  %s21 = ssub.s32 1, %s19
  %s22 = scalar_select 0, %s21, %s19
  $region1: #{_lambda_.1} parent=0
    #allocation2 [shape = 'u8[8192]{0}', space=vmem, size = 0x2000, scoped, tag = 'output window, operand 0, single buffered']
    #allocation3 [shape = 's32[1]{0}', space=sflag, size = 0x4, scoped, tag = 'scoped memory for _lambda_.1']
    %23 = vsyncpa [#allocation3], 0
    // Predicated region
    $region2: #{_lambda_.1} parent=1 // pred_check
      _
    $region3: #{_lambda_.1} parent=1 // pred_check_branch
      %25 = sbr.rel (0) target = $region5
    $region4: #{_lambda_.1} parent=1 // pred_region
      _
    $region5: #{_lambda_.1} parent=1 // pred_fallthru
      _
    // Predicated region
    $region6: #{_lambda_.1} parent=1 // pred_check
      _
    $region7: #{_lambda_.1} parent=1 // pred_check_branch
      %27 = sbr.rel (0) target = $region9
    $region8: #{_lambda_.1} parent=1 // pred_region
      _
    $region9: #{_lambda_.1} parent=1 // pred_fallthru
      _
    // Predicated region
    $region10: #{_lambda_.1} parent=1 // pred_check
      _
    $region11: #{_lambda_.1} parent=1 // pred_check_branch
      %29 = sbr.rel (0) target = $region13
    $region12: #{_lambda_.1} parent=1 // pred_region
      _
    $region13: #{_lambda_.1} parent=1 // pred_fallthru
      _
    // Predicated region
    $region14: #{_lambda_.1} parent=1 // pred_check
      _
    $region15: #{_lambda_.1} parent=1 // pred_check_branch
      %31 = sbr.rel (0) target = $region17
    $region16: #{_lambda_.1} parent=1 // pred_region
      _
    $region17: #{_lambda_.1} parent=1 // pred_fallthru
      _
    // Predicated region
    $region18: #{_lambda_.1} parent=1 // pred_check
      _
    $region19: #{_lambda_.1} parent=1 // pred_check_branch
      %33 = sbr.rel (0) target = $region21
    $region20: #{_lambda_.1} parent=1 // pred_region
      _
    $region21: #{_lambda_.1} parent=1 // pred_fallthru
      _
    // Predicated region
    $region22: #{_lambda_.1} parent=1 // pred_check
      _
    $region23: #{_lambda_.1} parent=1 // pred_check_branch
      %35 = sbr.rel (0) target = $region25
    $region24: #{_lambda_.1} parent=1 // pred_region
      _
    $region25: #{_lambda_.1} parent=1 // pred_fallthru
      _
    // Predicated region
    $region26: #{_lambda_.1} parent=1 // pred_check
      _
    $region27: #{_lambda_.1} parent=1 // pred_check_branch
      %37 = sbr.rel (0) target = $region29
    $region28: #{_lambda_.1} parent=1 // pred_region
      _
    $region29: #{_lambda_.1} parent=1 // pred_fallthru
      _
    // Predicated region
    $region30: #{_lambda_.1} parent=1 // pred_check
      _
    $region31: #{_lambda_.1} parent=1 // pred_check_branch
      %39 = sbr.rel (0) target = $region33
    $region32: #{_lambda_.1} parent=1 // pred_region
      _
    $region33: #{_lambda_.1} parent=1 // pred_fallthru
      _
    // Predicated region
    $region34: #{_lambda_.1} parent=1 // pred_check
      _
    $region35: #{_lambda_.1} parent=1 // pred_check_branch
      %41 = sbr.rel (0) target = $region37
    $region36: #{_lambda_.1} parent=1 // pred_region
      _
    $region37: #{_lambda_.1} parent=1 // pred_fallthru
      _
    // Predicated region
    $region38: #{_lambda_.1} parent=1 // pred_check
      _
    $region39: #{_lambda_.1} parent=1 // pred_check_branch
      %43 = sbr.rel (0) target = $region41
    $region40: #{_lambda_.1} parent=1 // pred_region
      _
    $region41: #{_lambda_.1} parent=1 // pred_fallthru
      _
    // Predicated region
    $region42: #{_lambda_.1} parent=1 // pred_check
      _
    $region43: #{_lambda_.1} parent=1 // pred_check_branch
      %45 = sbr.rel (0) target = $region45
    $region44: #{_lambda_.1} parent=1 // pred_region
      _
    $region45: #{_lambda_.1} parent=1 // pred_fallthru
      _
    // Predicated region
    $region46: #{_lambda_.1} parent=1 // pred_check
      _
    $region47: #{_lambda_.1} parent=1 // pred_check_branch
      %47 = sbr.rel (0) target = $region49
    $region48: #{_lambda_.1} parent=1 // pred_region
      _
    $region49: #{_lambda_.1} parent=1 // pred_fallthru
      _
    // Predicated region
    $region50: #{_lambda_.1} parent=1 // pred_check
      _
    $region51: #{_lambda_.1} parent=1 // pred_check_branch
      %49 = sbr.rel (0) target = $region53
    $region52: #{_lambda_.1} parent=1 // pred_region
      _
    $region53: #{_lambda_.1} parent=1 // pred_fallthru
      _
    // Predicated region
    $region54: #{_lambda_.1} parent=1 // pred_check
      _
    $region55: #{_lambda_.1} parent=1 // pred_check_branch
      %51 = sbr.rel (0) target = $region57
    $region56: #{_lambda_.1} parent=1 // pred_region
      _
    $region57: #{_lambda_.1} parent=1 // pred_fallthru
      _
    // Predicated region
    $region58: #{_lambda_.1} parent=1 // pred_check
      _
    $region59: #{_lambda_.1} parent=1 // pred_check_branch
      %53 = sbr.rel (0) target = $region61
    $region60: #{_lambda_.1} parent=1 // pred_region
      _
    $region61: #{_lambda_.1} parent=1 // pred_fallthru
      _
    // Predicated region
    $region62: #{_lambda_.1} parent=1 // pred_check
      _
    $region63: #{_lambda_.1} parent=1 // pred_check_branch
      %55 = sbr.rel (0) target = $region65
    $region64: #{_lambda_.1} parent=1 // pred_region
      _
    $region65: #{_lambda_.1} parent=1 // pred_fallthru
      _
    // Predicated region
    $region66: #{_lambda_.1} parent=1 // pred_check
      _
    $region67: #{_lambda_.1} parent=1 // pred_check_branch
      %57 = sbr.rel (0) target = $region69
    $region68: #{_lambda_.1} parent=1 // pred_region
      _
    $region69: #{_lambda_.1} parent=1 // pred_fallthru
      _
    // Predicated region
    $region70: #{_lambda_.1} parent=1 // pred_check
      _
    $region71: #{_lambda_.1} parent=1 // pred_check_branch
      %59 = sbr.rel (0) target = $region73
    $region72: #{_lambda_.1} parent=1 // pred_region
      _
    $region73: #{_lambda_.1} parent=1 // pred_fallthru
      _
    %v60 = vld [vmem:[%s0] sm:$0xff]
    %v61 = vld [vmem:[%s0 + $0x8] sm:$0xff]
    %v62 = vlaneseq
    %v63 = vand.u32 %v62, 127
    %64 = vset.pattern.permute.xlu0 0
    %65 = vperm.xlu0 %64, %v60
    %v66 = vpop.permute.xlu0 %65
    %67 = vset.pattern.permute.xlu0 0
    %68 = vperm.xlu0 %67, %v61
    %v69 = vpop.permute.xlu0 %68
    %vm70 = vcmp.eq.s32.totalorder %v66, %v63
    %vm71 = vcmp.eq.s32.totalorder %v69, %v63
    %v72 = vsel %vm70, 1, 0
    %v73 = vsel %vm71, 1, 0
    %v74 = vcvt.s32.f32 %v72
    %v75 = vcvt.s32.f32 %v73
    %v76 = vld [vmem:[%s1] sm:$0xff]
    %v77 = vld [vmem:[%s1 + $0x8] sm:$0xff]
    %v78 = vld [vmem:[%s1 + $0x10] sm:$0xff]
    %v79 = vld [vmem:[%s1 + $0x18] sm:$0xff]
    %v80 = vld [vmem:[%s1 + $0x20] sm:$0xff]
    %v81 = vld [vmem:[%s1 + $0x28] sm:$0xff]
    %v82 = vld [vmem:[%s1 + $0x30] sm:$0xff]
    %v83 = vld [vmem:[%s1 + $0x38] sm:$0xff]
    %v84 = vld [vmem:[%s1 + $0x40] sm:$0xff]
    %v85 = vld [vmem:[%s1 + $0x48] sm:$0xff]
    %v86 = vld [vmem:[%s1 + $0x50] sm:$0xff]
    %v87 = vld [vmem:[%s1 + $0x58] sm:$0xff]
    %v88 = vld [vmem:[%s1 + $0x60] sm:$0xff]
    %v89 = vld [vmem:[%s1 + $0x68] sm:$0xff]
    %v90 = vld [vmem:[%s1 + $0x70] sm:$0xff]
    %v91 = vld [vmem:[%s1 + $0x78] sm:$0xff]
    %v92 = vld [vmem:[%s2] sm:$0xff]
    %v93 = vld [vmem:[%s2 + $0x8] sm:$0xff]
    %94 = vmatprep.subr.mxu0 0.0
    %95 = vmatpush1.msra.mxu0 %v76
    %96 = vmatprep.subr.mxu0 0.0
    %97 = vmatpush1.msra.mxu0 %v77
    %98 = vmatprep.subr.mxu0 0.0
    %99 = vmatpush1.msra.mxu0 %v78
    %100 = vmatprep.subr.mxu0 0.0
    %101 = vmatpush1.msra.mxu0 %v79
    %102 = vmatprep.subr.mxu0 0.0
    %103 = vmatpush1.msra.mxu0 %v80
    %104 = vmatprep.subr.mxu0 0.0
    %105 = vmatpush1.msra.mxu0 %v81
    %106 = vmatprep.subr.mxu0 0.0
    %107 = vmatpush1.msra.mxu0 %v82
    %108 = vmatprep.subr.mxu0 0.0
    %109 = vmatpush1.msra.mxu0 %v83
    %110 = vmatprep.subr.mxu0 0.0
    %111 = vmatpush1.msra.mxu0 %v84
    %112 = vmatprep.subr.mxu0 0.0
    %113 = vmatpush1.msra.mxu0 %v85
    %114 = vmatprep.subr.mxu0 0.0
    %115 = vmatpush1.msra.mxu0 %v86
    %116 = vmatprep.subr.mxu0 0.0
    %117 = vmatpush1.msra.mxu0 %v87
    %118 = vmatprep.subr.mxu0 0.0
    %119 = vmatpush1.msra.mxu0 %v88
    %120 = vmatprep.subr.mxu0 0.0
    %121 = vmatpush1.msra.mxu0 %v89
    %122 = vmatprep.subr.mxu0 0.0
    %123 = vmatpush1.msra.mxu0 %v90
    %124 = vmatprep.subr.mxu0 0.0
    %125 = vmatpush1.msra.mxu0 %v91
    %126 = vmatprep.subr.mxu0 0.0
    %127 = vmatpush1.msra.mxu0 0.0
    %128 = vmatprep.subr.mxu0 0.0
    %129 = vmatpush1.msra.mxu0 0.0
    %130 = vmatprep.subr.mxu0 0.0
    %131 = vmatpush1.msra.mxu0 0.0
    %132 = vmatprep.subr.mxu0 0.0
    %133 = vmatpush1.msra.mxu0 0.0
    %134 = vmatprep.subr.mxu0 0.0
    %135 = vmatpush1.msra.mxu0 0.0
    %136 = vmatprep.subr.mxu0 0.0
    %137 = vmatpush1.msra.mxu0 0.0
    %138 = vmatprep.subr.mxu0 0.0
    %139 = vmatpush1.msra.mxu0 0.0
    %140 = vmatprep.subr.mxu0 0.0
    %141 = vmatpush1.msra.mxu0 0.0
    %142 = vmatprep.subr.mxu0 0.0
    %143 = vmatpush1.msra.mxu0 0.0
    %144 = vmatprep.subr.mxu0 0.0
    %145 = vmatpush1.msra.mxu0 0.0
    %146 = vmatprep.subr.mxu0 0.0
    %147 = vmatpush1.msra.mxu0 0.0
    %148 = vmatprep.subr.mxu0 0.0
    %149 = vmatpush1.msra.mxu0 0.0
    %150 = vmatprep.subr.mxu0 0.0
    %151 = vmatpush1.msra.mxu0 0.0
    %152 = vmatprep.subr.mxu0 0.0
    %153 = vmatpush1.msra.mxu0 0.0
    %154 = vmatprep.subr.mxu0 0.0
    %155 = vmatpush1.msra.mxu0 0.0
    %156 = vmatprep.subr.mxu0 0.0
    %157 = vmatpush1.msra.mxu0 0.0
    %158 = vmatprep.mubr.f32.mxu0 0.0
    %159 = vmatmul.mubr.f32.gmra.mrb[0].mxu0 %v74
    %v160 = vpop.f32.mrb[0].mxu0
    %v161 = vadd.f32 %v92, %v160
    %v162 = vpop.f32.mrb[0].mxu0
    %163 = vmatprep.mubr.f32.mxu0 0.0
    %164 = vmatmul.mubr.f32.gmra.mrb[0].mxu0 %v75
    %v165 = vpop.f32.mrb[0].mxu0
    %v166 = vadd.f32 %v93, %v165
    %v167 = vpop.f32.mrb[0].mxu0
    %168 = vdwg.mxu0
    %v169 = vld [vmem:[%s3] sm:$0xff]
    %v170 = vld [vmem:[%s3 + $0x8] sm:$0xff]
    %v171 = vld [vmem:[%s4] sm:$0x1]
    %v172 = vld [vmem:[%s5] sm:$0x1]
    %vm173 = vcmask 261120
    %v174 = vsel %vm173, %v161, 0.0
    %175 = vadd.xlane.f32.xlu0 %v174
    %v176 = vpop.xlane.xlu0 %175
    %v177 = vsel %vm173, %v166, 0.0
    %178 = vadd.xlane.f32.xlu0 %v177
    %v179 = vpop.xlane.xlu0 %178
    %v180 = vrcp.pop 32.0
    %v181 = vmul.f32 %v176, %v180
    %v182 = vmul.f32 %v179, %v180
    %v183 = vsub.f32 %v161, %v181
    %v184 = vsub.f32 %v166, %v182
    %v185 = vmul.f32 %v183, %v183
    %v186 = vmul.f32 %v184, %v184
    %v187 = vsel %vm173, %v185, 0.0
    %188 = vadd.xlane.f32.xlu0 %v187
    %v189 = vpop.xlane.xlu0 %188
    %v190 = vsel %vm173, %v186, 0.0
    %191 = vadd.xlane.f32.xlu0 %v190
    %v192 = vpop.xlane.xlu0 %191
    %v193 = vmul.f32 %v189, %v180
    %v194 = vmul.f32 %v192, %v180
    %v195 = vadd.f32 %v193, 1e-05
    %v196 = vadd.f32 %v194, 1e-05
    %v197 = vrsqrt.pop %v195
    %v198 = vrsqrt.pop %v196
    %v199 = vmul.f32 %v183, %v197
    %v200 = vmul.f32 %v184, %v198
    %v202 = vlaneseq
    %v203 = vshrl.u32 %v202, 7
    %v204 = vsub.s32 0, %v203
    %v205 = vrot.slane %v171, %v204
    %v207 = vmul.f32 %v199, %v205
    %v208 = vmul.f32 %v200, %v205
    %v210 = vlaneseq
    %v211 = vshrl.u32 %v210, 7
    %v212 = vsub.s32 0, %v211
    %v213 = vrot.slane %v172, %v212
    %v215 = vadd.f32 %v207, %v213
    %v216 = vadd.f32 %v208, %v213
    %v217 = vld [vmem:[%s6] sm:$0xff]
    %v218 = vld [vmem:[%s6 + $0x8] sm:$0xff]
    %v219 = vld [vmem:[%s6 + $0x10] sm:$0xff]
    %v220 = vld [vmem:[%s6 + $0x18] sm:$0xff]
    %v222 = vsel %vm173, %v215, 0
    %v225 = vsel %vm173, %v216, 0
    %227 = vmatprep.subr.mxu0 0.0
    %228 = vmatpush1.msra.mxu0 %v217
    %229 = vmatprep.subr.mxu0 0.0
    %230 = vmatpush1.msra.mxu0 %v218
    %231 = vmatprep.subr.mxu0 0.0
    %232 = vmatpush1.msra.mxu0 %v219
    %233 = vmatprep.subr.mxu0 0.0
    %234 = vmatpush1.msra.mxu0 %v220
    %235 = vmatprep.subr.mxu0 0.0
    %236 = vmatpush1.msra.mxu0 0.0
    %237 = vmatprep.subr.mxu0 0.0
    %238 = vmatpush1.msra.mxu0 0.0
    %239 = vmatprep.subr.mxu0 0.0
    %240 = vmatpush1.msra.mxu0 0.0
    %241 = vmatprep.subr.mxu0 0.0
    %242 = vmatpush1.msra.mxu0 0.0
    %243 = vmatprep.subr.mxu0 0.0
    %244 = vmatpush1.msra.mxu0 0.0
    %245 = vmatprep.subr.mxu0 0.0
    %246 = vmatpush1.msra.mxu0 0.0
    %247 = vmatprep.subr.mxu0 0.0
    %248 = vmatpush1.msra.mxu0 0.0
    %249 = vmatprep.subr.mxu0 0.0
    %250 = vmatpush1.msra.mxu0 0.0
    %251 = vmatprep.subr.mxu0 0.0
    %252 = vmatpush1.msra.mxu0 0.0
    %253 = vmatprep.subr.mxu0 0.0
    %254 = vmatpush1.msra.mxu0 0.0
    %255 = vmatprep.subr.mxu0 0.0
    %256 = vmatpush1.msra.mxu0 0.0
    %257 = vmatprep.subr.mxu0 0.0
    %258 = vmatpush1.msra.mxu0 0.0
    %259 = vmatprep.subr.mxu0 0.0
    %260 = vmatpush1.msra.mxu0 0.0
    %261 = vmatprep.subr.mxu0 0.0
    %262 = vmatpush1.msra.mxu0 0.0
    %263 = vmatprep.subr.mxu0 0.0
    %264 = vmatpush1.msra.mxu0 0.0
    %265 = vmatprep.subr.mxu0 0.0
    %266 = vmatpush1.msra.mxu0 0.0
    %267 = vmatprep.subr.mxu0 0.0
    %268 = vmatpush1.msra.mxu0 0.0
    %269 = vmatprep.subr.mxu0 0.0
    %270 = vmatpush1.msra.mxu0 0.0
    %271 = vmatprep.subr.mxu0 0.0
    %272 = vmatpush1.msra.mxu0 0.0
    %273 = vmatprep.subr.mxu0 0.0
    %274 = vmatpush1.msra.mxu0 0.0
    %275 = vmatprep.subr.mxu0 0.0
    %276 = vmatpush1.msra.mxu0 0.0
    %277 = vmatprep.subr.mxu0 0.0
    %278 = vmatpush1.msra.mxu0 0.0
    %279 = vmatprep.subr.mxu0 0.0
    %280 = vmatpush1.msra.mxu0 0.0
    %281 = vmatprep.subr.mxu0 0.0
    %282 = vmatpush1.msra.mxu0 0.0
    %283 = vmatprep.subr.mxu0 0.0
    %284 = vmatpush1.msra.mxu0 0.0
    %285 = vmatprep.subr.mxu0 0.0
    %286 = vmatpush1.msra.mxu0 0.0
    %287 = vmatprep.subr.mxu0 0.0
    %288 = vmatpush1.msra.mxu0 0.0
    %289 = vmatprep.subr.mxu0 0.0
    %290 = vmatpush1.msra.mxu0 0.0
    %291 = vmatprep.mubr.f32.mxu0 0.0
    %292 = vmatmul.mubr.f32.gmra.mrb[0].mxu0 %v222
    %v293 = vpop.f32.mrb[0].mxu0
    %v294 = vadd.f32 0.0, %v293
    %v295 = vpop.f32.mrb[0].mxu0
    %296 = vmatprep.mubr.f32.mxu0 0.0
    %297 = vmatmul.mubr.f32.gmra.mrb[0].mxu0 %v225
    %v298 = vpop.f32.mrb[0].mxu0
    %v299 = vadd.f32 0.0, %v298
    %v300 = vpop.f32.mrb[0].mxu0
    %301 = vdwg.mxu0
    %v302 = vld [vmem:[%s7] sm:$0xff]
    %v303 = vld [vmem:[%s7 + $0x8] sm:$0xff]
    %v304 = vld [vmem:[%s7 + $0x10] sm:$0xff]
    %v305 = vld [vmem:[%s7 + $0x18] sm:$0xff]
    %v306 = vmul.f32 %v294, 0.35355338
    %v307 = vmul.f32 %v299, 0.35355338
    %310 = vrot.lane.b32.xlu0 %v294, 96
    %v311 = vpop.permute.xlu0 %310
    %312 = vrot.lane.b32.xlu0 %v299, 96
    %v313 = vpop.permute.xlu0 %312
    %vm314 = vcmask 64512
    %v316 = vsel %vm314, %v306, 0
    %v319 = vsel %vm314, %v307, 0
    %v321 = vsel %vm314, %v311, 0
    %v323 = vsel %vm314, %v313, 0
    %325 = vmatprep.subr.mxu0 0.0
    %326 = vmatpush1.xpose.msra.mxu0 %v321
    %327 = vmatprep.subr.mxu0 0.0
    %328 = vmatpush1.xpose.msra.mxu0 %v323
    %329 = vmatprep.subr.mxu0 0.0
    %330 = vmatpush1.xpose.msra.mxu0 0.0
    %331 = vmatprep.subr.mxu0 0.0
    %332 = vmatpush1.xpose.msra.mxu0 0.0
    %333 = vmatprep.subr.mxu0 0.0
    %334 = vmatpush1.xpose.msra.mxu0 0.0
    %335 = vmatprep.subr.mxu0 0.0
    %336 = vmatpush1.xpose.msra.mxu0 0.0
    %337 = vmatprep.subr.mxu0 0.0
    %338 = vmatpush1.xpose.msra.mxu0 0.0
    %339 = vmatprep.subr.mxu0 0.0
    %340 = vmatpush1.xpose.msra.mxu0 0.0
    %341 = vmatprep.subr.mxu0 0.0
    %342 = vmatpush1.xpose.msra.mxu0 0.0
    %343 = vmatprep.subr.mxu0 0.0
    %344 = vmatpush1.xpose.msra.mxu0 0.0
    %345 = vmatprep.subr.mxu0 0.0
    %346 = vmatpush1.xpose.msra.mxu0 0.0
    %347 = vmatprep.subr.mxu0 0.0
    %348 = vmatpush1.xpose.msra.mxu0 0.0
    %349 = vmatprep.subr.mxu0 0.0
    %350 = vmatpush1.xpose.msra.mxu0 0.0
    %351 = vmatprep.subr.mxu0 0.0
    %352 = vmatpush1.xpose.msra.mxu0 0.0
    %353 = vmatprep.subr.mxu0 0.0
    %354 = vmatpush1.xpose.msra.mxu0 0.0
    %355 = vmatprep.subr.mxu0 0.0
    %356 = vmatpush1.xpose.msra.mxu0 0.0
    %357 = vmatprep.subr.mxu0 0.0
    %358 = vmatpush1.xpose.msra.mxu0 0.0
    %359 = vmatprep.subr.mxu0 0.0
    %360 = vmatpush1.xpose.msra.mxu0 0.0
    %361 = vmatprep.subr.mxu0 0.0
    %362 = vmatpush1.xpose.msra.mxu0 0.0
    %363 = vmatprep.subr.mxu0 0.0
    %364 = vmatpush1.xpose.msra.mxu0 0.0
    %365 = vmatprep.subr.mxu0 0.0
    %366 = vmatpush1.xpose.msra.mxu0 0.0
    %367 = vmatprep.subr.mxu0 0.0
    %368 = vmatpush1.xpose.msra.mxu0 0.0
    %369 = vmatprep.subr.mxu0 0.0
    %370 = vmatpush1.xpose.msra.mxu0 0.0
    %371 = vmatprep.subr.mxu0 0.0
    %372 = vmatpush1.xpose.msra.mxu0 0.0
    %373 = vmatprep.subr.mxu0 0.0
    %374 = vmatpush1.xpose.msra.mxu0 0.0
    %375 = vmatprep.subr.mxu0 0.0
    %376 = vmatpush1.xpose.msra.mxu0 0.0
    %377 = vmatprep.subr.mxu0 0.0
    %378 = vmatpush1.xpose.msra.mxu0 0.0
    %379 = vmatprep.subr.mxu0 0.0
    %380 = vmatpush1.xpose.msra.mxu0 0.0
    %381 = vmatprep.subr.mxu0 0.0
    %382 = vmatpush1.xpose.msra.mxu0 0.0
    %383 = vmatprep.subr.mxu0 0.0
    %384 = vmatpush1.xpose.msra.mxu0 0.0
    %385 = vmatprep.subr.mxu0 0.0
    %386 = vmatpush1.xpose.msra.mxu0 0.0
    %387 = vmatprep.subr.mxu0 0.0
    %388 = vmatpush1.xpose.msra.mxu0 0.0
    %389 = vmatprep.mubr.f32.mxu0 0.0
    %390 = vmatmul.mubr.f32.gmra.mrb[0].mxu0 %v316
    %v391 = vpop.f32.mrb[0].mxu0
    %v392 = vadd.f32 %v169, %v391
    %v393 = vpop.f32.mrb[0].mxu0
    %394 = vmatprep.mubr.f32.mxu0 0.0
    %395 = vmatmul.mubr.f32.gmra.mrb[0].mxu0 %v319
    %v396 = vpop.f32.mrb[0].mxu0
    %v397 = vadd.f32 %v170, %v396
    %v398 = vpop.f32.mrb[0].mxu0
    %399 = vdwg.mxu0
    %vm400 = vcmask 130048
    %v401 = vsel %vm400, %v392, -inf
    %402 = vmax.xlane.f32.xlu0 %v401
    %v403 = vpop.xlane.xlu0 %402
    %v404 = vsel %vm400, %v397, -inf
    %405 = vmax.xlane.f32.xlu0 %v404
    %v406 = vpop.xlane.xlu0 %405
    %v407 = vsub.f32 %v392, %v403
    %v408 = vsub.f32 %v397, %v406
    %v409 = vmul.f32 %v407, 1.442695
    %v410 = vpow.pop %v409
    %v411 = vmul.f32 %v408, 1.442695
    %v412 = vpow.pop %v411
    %v413 = vsel %vm400, %v410, 0.0
    %414 = vadd.xlane.f32.xlu0 %v413
    %v415 = vpop.xlane.xlu0 %414
    %v416 = vsel %vm400, %v412, 0.0
    %417 = vadd.xlane.f32.xlu0 %v416
    %v418 = vpop.xlane.xlu0 %417
    %v419 = vrcp.pop %v415
    %v420 = vrcp.pop %v418
    %v421 = vmul.f32 %v410, %v419
    %v422 = vmul.f32 %v412, %v420
    %423 = vrot.lane.b32.xlu0 %v294, 64
    %v424 = vpop.permute.xlu0 %423
    %425 = vrot.lane.b32.xlu0 %v299, 64
    %v426 = vpop.permute.xlu0 %425
    %v430 = vsel %vm400, %v421, 0
    %v433 = vsel %vm400, %v422, 0
    %435 = vmatprep.subr.mxu0 0.0
    %436 = vmatpush1.msra.mxu0 %v424
    %437 = vmatprep.subr.mxu0 0.0
    %438 = vmatpush1.msra.mxu0 %v426
    %439 = vmatprep.subr.mxu0 0.0
    %440 = vmatpush1.msra.mxu0 0.0
    %441 = vmatprep.subr.mxu0 0.0
    %442 = vmatpush1.msra.mxu0 0.0
    %443 = vmatprep.subr.mxu0 0.0
    %444 = vmatpush1.msra.mxu0 0.0
    %445 = vmatprep.subr.mxu0 0.0
    %446 = vmatpush1.msra.mxu0 0.0
    %447 = vmatprep.subr.mxu0 0.0
    %448 = vmatpush1.msra.mxu0 0.0
    %449 = vmatprep.subr.mxu0 0.0
    %450 = vmatpush1.msra.mxu0 0.0
    %451 = vmatprep.subr.mxu0 0.0
    %452 = vmatpush1.msra.mxu0 0.0
    %453 = vmatprep.subr.mxu0 0.0
    %454 = vmatpush1.msra.mxu0 0.0
    %455 = vmatprep.subr.mxu0 0.0
    %456 = vmatpush1.msra.mxu0 0.0
    %457 = vmatprep.subr.mxu0 0.0
    %458 = vmatpush1.msra.mxu0 0.0
    %459 = vmatprep.subr.mxu0 0.0
    %460 = vmatpush1.msra.mxu0 0.0
    %461 = vmatprep.subr.mxu0 0.0
    %462 = vmatpush1.msra.mxu0 0.0
    %463 = vmatprep.subr.mxu0 0.0
    %464 = vmatpush1.msra.mxu0 0.0
    %465 = vmatprep.subr.mxu0 0.0
    %466 = vmatpush1.msra.mxu0 0.0
    %467 = vmatprep.subr.mxu0 0.0
    %468 = vmatpush1.msra.mxu0 0.0
    %469 = vmatprep.subr.mxu0 0.0
    %470 = vmatpush1.msra.mxu0 0.0
    %471 = vmatprep.subr.mxu0 0.0
    %472 = vmatpush1.msra.mxu0 0.0
    %473 = vmatprep.subr.mxu0 0.0
    %474 = vmatpush1.msra.mxu0 0.0
    %475 = vmatprep.subr.mxu0 0.0
    %476 = vmatpush1.msra.mxu0 0.0
    %477 = vmatprep.subr.mxu0 0.0
    %478 = vmatpush1.msra.mxu0 0.0
    %479 = vmatprep.subr.mxu0 0.0
    %480 = vmatpush1.msra.mxu0 0.0
    %481 = vmatprep.subr.mxu0 0.0
    %482 = vmatpush1.msra.mxu0 0.0
    %483 = vmatprep.subr.mxu0 0.0
    %484 = vmatpush1.msra.mxu0 0.0
    %485 = vmatprep.subr.mxu0 0.0
    %486 = vmatpush1.msra.mxu0 0.0
    %487 = vmatprep.subr.mxu0 0.0
    %488 = vmatpush1.msra.mxu0 0.0
    %489 = vmatprep.subr.mxu0 0.0
    %490 = vmatpush1.msra.mxu0 0.0
    %491 = vmatprep.subr.mxu0 0.0
    %492 = vmatpush1.msra.mxu0 0.0
    %493 = vmatprep.subr.mxu0 0.0
    %494 = vmatpush1.msra.mxu0 0.0
    %495 = vmatprep.subr.mxu0 0.0
    %496 = vmatpush1.msra.mxu0 0.0
    %497 = vmatprep.subr.mxu0 0.0
    %498 = vmatpush1.msra.mxu0 0.0
    %499 = vmatprep.mubr.f32.mxu0 0.0
    %500 = vmatmul.mubr.f32.gmra.mrb[0].mxu0 %v430
    %v501 = vpop.f32.mrb[0].mxu0
    %v502 = vadd.f32 0.0, %v501
    %v503 = vpop.f32.mrb[0].mxu0
    %504 = vmatprep.mubr.f32.mxu0 0.0
    %505 = vmatmul.mubr.f32.gmra.mrb[0].mxu0 %v433
    %v506 = vpop.f32.mrb[0].mxu0
    %v507 = vadd.f32 0.0, %v506
    %v508 = vpop.f32.mrb[0].mxu0
    %509 = vdwg.mxu0
    %510 = vrot.lane.b32.xlu0 %v306, 120
    %v511 = vpop.permute.xlu0 %510
    %512 = vrot.lane.b32.xlu0 %v307, 120
    %v513 = vpop.permute.xlu0 %512
    %514 = vrot.lane.b32.xlu0 %v294, 88
    %v515 = vpop.permute.xlu0 %514
    %516 = vrot.lane.b32.xlu0 %v299, 88
    %v517 = vpop.permute.xlu0 %516
    %v518 = vsel %vm314, %v511, 0
    %v520 = vsel %vm314, %v513, 0
    %v522 = vsel %vm314, %v515, 0
    %v524 = vsel %vm314, %v517, 0
    %526 = vmatprep.subr.mxu0 0.0
    %527 = vmatpush1.xpose.msra.mxu0 %v522
    %528 = vmatprep.subr.mxu0 0.0
    %529 = vmatpush1.xpose.msra.mxu0 %v524
    %530 = vmatprep.subr.mxu0 0.0
    %531 = vmatpush1.xpose.msra.mxu0 0.0
    %532 = vmatprep.subr.mxu0 0.0
    %533 = vmatpush1.xpose.msra.mxu0 0.0
    %534 = vmatprep.subr.mxu0 0.0
    %535 = vmatpush1.xpose.msra.mxu0 0.0
    %536 = vmatprep.subr.mxu0 0.0
    %537 = vmatpush1.xpose.msra.mxu0 0.0
    %538 = vmatprep.subr.mxu0 0.0
    %539 = vmatpush1.xpose.msra.mxu0 0.0
    %540 = vmatprep.subr.mxu0 0.0
    %541 = vmatpush1.xpose.msra.mxu0 0.0
    %542 = vmatprep.subr.mxu0 0.0
    %543 = vmatpush1.xpose.msra.mxu0 0.0
    %544 = vmatprep.subr.mxu0 0.0
    %545 = vmatpush1.xpose.msra.mxu0 0.0
    %546 = vmatprep.subr.mxu0 0.0
    %547 = vmatpush1.xpose.msra.mxu0 0.0
    %548 = vmatprep.subr.mxu0 0.0
    %549 = vmatpush1.xpose.msra.mxu0 0.0
    %550 = vmatprep.subr.mxu0 0.0
    %551 = vmatpush1.xpose.msra.mxu0 0.0
    %552 = vmatprep.subr.mxu0 0.0
    %553 = vmatpush1.xpose.msra.mxu0 0.0
    %554 = vmatprep.subr.mxu0 0.0
    %555 = vmatpush1.xpose.msra.mxu0 0.0
    %556 = vmatprep.subr.mxu0 0.0
    %557 = vmatpush1.xpose.msra.mxu0 0.0
    %558 = vmatprep.subr.mxu0 0.0
    %559 = vmatpush1.xpose.msra.mxu0 0.0
    %560 = vmatprep.subr.mxu0 0.0
    %561 = vmatpush1.xpose.msra.mxu0 0.0
    %562 = vmatprep.subr.mxu0 0.0
    %563 = vmatpush1.xpose.msra.mxu0 0.0
    %564 = vmatprep.subr.mxu0 0.0
    %565 = vmatpush1.xpose.msra.mxu0 0.0
    %566 = vmatprep.subr.mxu0 0.0
    %567 = vmatpush1.xpose.msra.mxu0 0.0
    %568 = vmatprep.subr.mxu0 0.0
    %569 = vmatpush1.xpose.msra.mxu0 0.0
    %570 = vmatprep.subr.mxu0 0.0
    %571 = vmatpush1.xpose.msra.mxu0 0.0
    %572 = vmatprep.subr.mxu0 0.0
    %573 = vmatpush1.xpose.msra.mxu0 0.0
    %574 = vmatprep.subr.mxu0 0.0
    %575 = vmatpush1.xpose.msra.mxu0 0.0
    %576 = vmatprep.subr.mxu0 0.0
    %577 = vmatpush1.xpose.msra.mxu0 0.0
    %578 = vmatprep.subr.mxu0 0.0
    %579 = vmatpush1.xpose.msra.mxu0 0.0
    %580 = vmatprep.subr.mxu0 0.0
    %581 = vmatpush1.xpose.msra.mxu0 0.0
    %582 = vmatprep.subr.mxu0 0.0
    %583 = vmatpush1.xpose.msra.mxu0 0.0
    %584 = vmatprep.subr.mxu0 0.0
    %585 = vmatpush1.xpose.msra.mxu0 0.0
    %586 = vmatprep.subr.mxu0 0.0
    %587 = vmatpush1.xpose.msra.mxu0 0.0
    %588 = vmatprep.subr.mxu0 0.0
    %589 = vmatpush1.xpose.msra.mxu0 0.0
    %590 = vmatprep.mubr.f32.mxu0 0.0
    %591 = vmatmul.mubr.f32.gmra.mrb[0].mxu0 %v518
    %v592 = vpop.f32.mrb[0].mxu0
    %v593 = vadd.f32 %v169, %v592
    %v594 = vpop.f32.mrb[0].mxu0
    %595 = vmatprep.mubr.f32.mxu0 0.0
    %596 = vmatmul.mubr.f32.gmra.mrb[0].mxu0 %v520
    %v597 = vpop.f32.mrb[0].mxu0
    %v598 = vadd.f32 %v170, %v597
    %v599 = vpop.f32.mrb[0].mxu0
    %600 = vdwg.mxu0
    %v601 = vsel %vm400, %v593, -inf
    %602 = vmax.xlane.f32.xlu0 %v601
    %v603 = vpop.xlane.xlu0 %602
    %v604 = vsel %vm400, %v598, -inf
    %605 = vmax.xlane.f32.xlu0 %v604
    %v606 = vpop.xlane.xlu0 %605
    %v607 = vsub.f32 %v593, %v603
    %v608 = vsub.f32 %v598, %v606
    %v609 = vmul.f32 %v607, 1.442695
    %v610 = vpow.pop %v609
    %v611 = vmul.f32 %v608, 1.442695
    %v612 = vpow.pop %v611
    %v613 = vsel %vm400, %v610, 0.0
    %614 = vadd.xlane.f32.xlu0 %v613
    %v615 = vpop.xlane.xlu0 %614
    %v616 = vsel %vm400, %v612, 0.0
    %617 = vadd.xlane.f32.xlu0 %v616
    %v618 = vpop.xlane.xlu0 %617
    %v619 = vrcp.pop %v615
    %v620 = vrcp.pop %v618
    %v621 = vmul.f32 %v610, %v619
    %v622 = vmul.f32 %v612, %v620
    %623 = vrot.lane.b32.xlu0 %v294, 56
    %v624 = vpop.permute.xlu0 %623
    %625 = vrot.lane.b32.xlu0 %v299, 56
    %v626 = vpop.permute.xlu0 %625
    %v630 = vsel %vm400, %v621, 0
    %v633 = vsel %vm400, %v622, 0
    %635 = vmatprep.subr.mxu0 0.0
    %636 = vmatpush1.msra.mxu0 %v624
    %637 = vmatprep.subr.mxu0 0.0
    %638 = vmatpush1.msra.mxu0 %v626
    %639 = vmatprep.subr.mxu0 0.0
    %640 = vmatpush1.msra.mxu0 0.0
    %641 = vmatprep.subr.mxu0 0.0
    %642 = vmatpush1.msra.mxu0 0.0
    %643 = vmatprep.subr.mxu0 0.0
    %644 = vmatpush1.msra.mxu0 0.0
    %645 = vmatprep.subr.mxu0 0.0
    %646 = vmatpush1.msra.mxu0 0.0
    %647 = vmatprep.subr.mxu0 0.0
    %648 = vmatpush1.msra.mxu0 0.0
    %649 = vmatprep.subr.mxu0 0.0
    %650 = vmatpush1.msra.mxu0 0.0
    %651 = vmatprep.subr.mxu0 0.0
    %652 = vmatpush1.msra.mxu0 0.0
    %653 = vmatprep.subr.mxu0 0.0
    %654 = vmatpush1.msra.mxu0 0.0
    %655 = vmatprep.subr.mxu0 0.0
    %656 = vmatpush1.msra.mxu0 0.0
    %657 = vmatprep.subr.mxu0 0.0
    %658 = vmatpush1.msra.mxu0 0.0
    %659 = vmatprep.subr.mxu0 0.0
    %660 = vmatpush1.msra.mxu0 0.0
    %661 = vmatprep.subr.mxu0 0.0
    %662 = vmatpush1.msra.mxu0 0.0
    %663 = vmatprep.subr.mxu0 0.0
    %664 = vmatpush1.msra.mxu0 0.0
    %665 = vmatprep.subr.mxu0 0.0
    %666 = vmatpush1.msra.mxu0 0.0
    %667 = vmatprep.subr.mxu0 0.0
    %668 = vmatpush1.msra.mxu0 0.0
    %669 = vmatprep.subr.mxu0 0.0
    %670 = vmatpush1.msra.mxu0 0.0
    %671 = vmatprep.subr.mxu0 0.0
    %672 = vmatpush1.msra.mxu0 0.0
    %673 = vmatprep.subr.mxu0 0.0
    %674 = vmatpush1.msra.mxu0 0.0
    %675 = vmatprep.subr.mxu0 0.0
    %676 = vmatpush1.msra.mxu0 0.0
    %677 = vmatprep.subr.mxu0 0.0
    %678 = vmatpush1.msra.mxu0 0.0
    %679 = vmatprep.subr.mxu0 0.0
    %680 = vmatpush1.msra.mxu0 0.0
    %681 = vmatprep.subr.mxu0 0.0
    %682 = vmatpush1.msra.mxu0 0.0
    %683 = vmatprep.subr.mxu0 0.0
    %684 = vmatpush1.msra.mxu0 0.0
    %685 = vmatprep.subr.mxu0 0.0
    %686 = vmatpush1.msra.mxu0 0.0
    %687 = vmatprep.subr.mxu0 0.0
    %688 = vmatpush1.msra.mxu0 0.0
    %689 = vmatprep.subr.mxu0 0.0
    %690 = vmatpush1.msra.mxu0 0.0
    %691 = vmatprep.subr.mxu0 0.0
    %692 = vmatpush1.msra.mxu0 0.0
    %693 = vmatprep.subr.mxu0 0.0
    %694 = vmatpush1.msra.mxu0 0.0
    %695 = vmatprep.subr.mxu0 0.0
    %696 = vmatpush1.msra.mxu0 0.0
    %697 = vmatprep.subr.mxu0 0.0
    %698 = vmatpush1.msra.mxu0 0.0
    %699 = vmatprep.mubr.f32.mxu0 0.0
    %700 = vmatmul.mubr.f32.gmra.mrb[0].mxu0 %v630
    %v701 = vpop.f32.mrb[0].mxu0
    %v702 = vadd.f32 0.0, %v701
    %v703 = vpop.f32.mrb[0].mxu0
    %704 = vmatprep.mubr.f32.mxu0 0.0
    %705 = vmatmul.mubr.f32.gmra.mrb[0].mxu0 %v633
    %v706 = vpop.f32.mrb[0].mxu0
    %v707 = vadd.f32 0.0, %v706
    %v708 = vpop.f32.mrb[0].mxu0
    %709 = vdwg.mxu0
    %v711 = vsel %vm314, %v702, 0
    %v714 = vsel %vm314, %v707, 0
    %716 = vmatprep.subr.mxu0 0.0
    %717 = vmatpush1.msra.mxu0 %v303
    %718 = vmatprep.subr.mxu0 0.0
    %719 = vmatpush1.msra.mxu0 0.0
    %720 = vmatprep.subr.mxu0 0.0
    %721 = vmatpush1.msra.mxu0 0.0
    %722 = vmatprep.subr.mxu0 0.0
    %723 = vmatpush1.msra.mxu0 0.0
    %724 = vmatprep.subr.mxu0 0.0
    %725 = vmatpush1.msra.mxu0 0.0
    %726 = vmatprep.subr.mxu0 0.0
    %727 = vmatpush1.msra.mxu0 0.0
    %728 = vmatprep.subr.mxu0 0.0
    %729 = vmatpush1.msra.mxu0 0.0
    %730 = vmatprep.subr.mxu0 0.0
    %731 = vmatpush1.msra.mxu0 0.0
    %732 = vmatprep.subr.mxu0 0.0
    %733 = vmatpush1.msra.mxu0 0.0
    %734 = vmatprep.subr.mxu0 0.0
    %735 = vmatpush1.msra.mxu0 0.0
    %736 = vmatprep.subr.mxu0 0.0
    %737 = vmatpush1.msra.mxu0 0.0
    %738 = vmatprep.subr.mxu0 0.0
    %739 = vmatpush1.msra.mxu0 0.0
    %740 = vmatprep.subr.mxu0 0.0
    %741 = vmatpush1.msra.mxu0 0.0
    %742 = vmatprep.subr.mxu0 0.0
    %743 = vmatpush1.msra.mxu0 0.0
    %744 = vmatprep.subr.mxu0 0.0
    %745 = vmatpush1.msra.mxu0 0.0
    %746 = vmatprep.subr.mxu0 0.0
    %747 = vmatpush1.msra.mxu0 0.0
    %748 = vmatprep.subr.mxu0 0.0
    %749 = vmatpush1.msra.mxu0 0.0
    %750 = vmatprep.subr.mxu0 0.0
    %751 = vmatpush1.msra.mxu0 0.0
    %752 = vmatprep.subr.mxu0 0.0
    %753 = vmatpush1.msra.mxu0 0.0
    %754 = vmatprep.subr.mxu0 0.0
    %755 = vmatpush1.msra.mxu0 0.0
    %756 = vmatprep.subr.mxu0 0.0
    %757 = vmatpush1.msra.mxu0 0.0
    %758 = vmatprep.subr.mxu0 0.0
    %759 = vmatpush1.msra.mxu0 0.0
    %760 = vmatprep.subr.mxu0 0.0
    %761 = vmatpush1.msra.mxu0 0.0
    %762 = vmatprep.subr.mxu0 0.0
    %763 = vmatpush1.msra.mxu0 0.0
    %764 = vmatprep.subr.mxu0 0.0
    %765 = vmatpush1.msra.mxu0 0.0
    %766 = vmatprep.subr.mxu0 0.0
    %767 = vmatpush1.msra.mxu0 0.0
    %768 = vmatprep.subr.mxu0 0.0
    %769 = vmatpush1.msra.mxu0 0.0
    %770 = vmatprep.subr.mxu0 0.0
    %771 = vmatpush1.msra.mxu0 0.0
    %772 = vmatprep.subr.mxu0 0.0
    %773 = vmatpush1.msra.mxu0 0.0
    %774 = vmatprep.subr.mxu0 0.0
    %775 = vmatpush1.msra.mxu0 0.0
    %776 = vmatprep.subr.mxu0 0.0
    %777 = vmatpush1.msra.mxu0 0.0
    %778 = vmatprep.subr.mxu0 0.0
    %779 = vmatpush1.msra.mxu0 0.0
    %780 = vmatprep.mubr.f32.mxu0 0.0
    %781 = vmatmul.mubr.f32.gmra.mrb[0].mxu0 %v711
    %v782 = vpop.f32.mrb[0].mxu0
    %v783 = vadd.f32 0.0, %v782
    %v784 = vpop.f32.mrb[0].mxu0
    %785 = vmatprep.mubr.f32.mxu0 0.0
    %786 = vmatmul.mubr.f32.gmra.mrb[0].mxu0 %v714
    %v787 = vpop.f32.mrb[0].mxu0
    %v788 = vadd.f32 0.0, %v787
    %v789 = vpop.f32.mrb[0].mxu0
    %790 = vdwg.mxu0
    %v792 = vsel %vm314, %v502, 0
    %v795 = vsel %vm314, %v507, 0
    %797 = vmatprep.subr.mxu0 0.0
    %798 = vmatpush1.msra.mxu0 %v302
    %799 = vmatprep.subr.mxu0 0.0
    %800 = vmatpush1.msra.mxu0 0.0
    %801 = vmatprep.subr.mxu0 0.0
    %802 = vmatpush1.msra.mxu0 0.0
    %803 = vmatprep.subr.mxu0 0.0
    %804 = vmatpush1.msra.mxu0 0.0
    %805 = vmatprep.subr.mxu0 0.0
    %806 = vmatpush1.msra.mxu0 0.0
    %807 = vmatprep.subr.mxu0 0.0
    %808 = vmatpush1.msra.mxu0 0.0
    %809 = vmatprep.subr.mxu0 0.0
    %810 = vmatpush1.msra.mxu0 0.0
    %811 = vmatprep.subr.mxu0 0.0
    %812 = vmatpush1.msra.mxu0 0.0
    %813 = vmatprep.subr.mxu0 0.0
    %814 = vmatpush1.msra.mxu0 0.0
    %815 = vmatprep.subr.mxu0 0.0
    %816 = vmatpush1.msra.mxu0 0.0
    %817 = vmatprep.subr.mxu0 0.0
    %818 = vmatpush1.msra.mxu0 0.0
    %819 = vmatprep.subr.mxu0 0.0
    %820 = vmatpush1.msra.mxu0 0.0
    %821 = vmatprep.subr.mxu0 0.0
    %822 = vmatpush1.msra.mxu0 0.0
    %823 = vmatprep.subr.mxu0 0.0
    %824 = vmatpush1.msra.mxu0 0.0
    %825 = vmatprep.subr.mxu0 0.0
    %826 = vmatpush1.msra.mxu0 0.0
    %827 = vmatprep.subr.mxu0 0.0
    %828 = vmatpush1.msra.mxu0 0.0
    %829 = vmatprep.subr.mxu0 0.0
    %830 = vmatpush1.msra.mxu0 0.0
    %831 = vmatprep.subr.mxu0 0.0
    %832 = vmatpush1.msra.mxu0 0.0
    %833 = vmatprep.subr.mxu0 0.0
    %834 = vmatpush1.msra.mxu0 0.0
    %835 = vmatprep.subr.mxu0 0.0
    %836 = vmatpush1.msra.mxu0 0.0
    %837 = vmatprep.subr.mxu0 0.0
    %838 = vmatpush1.msra.mxu0 0.0
    %839 = vmatprep.subr.mxu0 0.0
    %840 = vmatpush1.msra.mxu0 0.0
    %841 = vmatprep.subr.mxu0 0.0
    %842 = vmatpush1.msra.mxu0 0.0
    %843 = vmatprep.subr.mxu0 0.0
    %844 = vmatpush1.msra.mxu0 0.0
    %845 = vmatprep.subr.mxu0 0.0
    %846 = vmatpush1.msra.mxu0 0.0
    %847 = vmatprep.subr.mxu0 0.0
    %848 = vmatpush1.msra.mxu0 0.0
    %849 = vmatprep.subr.mxu0 0.0
    %850 = vmatpush1.msra.mxu0 0.0
    %851 = vmatprep.subr.mxu0 0.0
    %852 = vmatpush1.msra.mxu0 0.0
    %853 = vmatprep.subr.mxu0 0.0
    %854 = vmatpush1.msra.mxu0 0.0
    %855 = vmatprep.subr.mxu0 0.0
    %856 = vmatpush1.msra.mxu0 0.0
    %857 = vmatprep.subr.mxu0 0.0
    %858 = vmatpush1.msra.mxu0 0.0
    %859 = vmatprep.subr.mxu0 0.0
    %860 = vmatpush1.msra.mxu0 0.0
    %861 = vmatprep.mubr.f32.mxu0 0.0
    %862 = vmatmul.mubr.f32.gmra.mrb[0].mxu0 %v792
    %v863 = vpop.f32.mrb[0].mxu0
    %v864 = vadd.f32 %v783, %v863
    %v865 = vpop.f32.mrb[0].mxu0
    %866 = vmatprep.mubr.f32.mxu0 0.0
    %867 = vmatmul.mubr.f32.gmra.mrb[0].mxu0 %v795
    %v868 = vpop.f32.mrb[0].mxu0
    %v869 = vadd.f32 %v788, %v868
    %v870 = vpop.f32.mrb[0].mxu0
    %871 = vdwg.mxu0
    %872 = vrot.lane.b32.xlu0 %v306, 112
    %v873 = vpop.permute.xlu0 %872
    %874 = vrot.lane.b32.xlu0 %v307, 112
    %v875 = vpop.permute.xlu0 %874
    %876 = vrot.lane.b32.xlu0 %v294, 80
    %v877 = vpop.permute.xlu0 %876
    %878 = vrot.lane.b32.xlu0 %v299, 80
    %v879 = vpop.permute.xlu0 %878
    %v880 = vsel %vm314, %v873, 0
    %v882 = vsel %vm314, %v875, 0
    %v884 = vsel %vm314, %v877, 0
    %v886 = vsel %vm314, %v879, 0
    %888 = vmatprep.subr.mxu0 0.0
    %889 = vmatpush1.xpose.msra.mxu0 %v884
    %890 = vmatprep.subr.mxu0 0.0
    %891 = vmatpush1.xpose.msra.mxu0 %v886
    %892 = vmatprep.subr.mxu0 0.0
    %893 = vmatpush1.xpose.msra.mxu0 0.0
    %894 = vmatprep.subr.mxu0 0.0
    %895 = vmatpush1.xpose.msra.mxu0 0.0
    %896 = vmatprep.subr.mxu0 0.0
    %897 = vmatpush1.xpose.msra.mxu0 0.0
    %898 = vmatprep.subr.mxu0 0.0
    %899 = vmatpush1.xpose.msra.mxu0 0.0
    %900 = vmatprep.subr.mxu0 0.0
    %901 = vmatpush1.xpose.msra.mxu0 0.0
    %902 = vmatprep.subr.mxu0 0.0
    %903 = vmatpush1.xpose.msra.mxu0 0.0
    %904 = vmatprep.subr.mxu0 0.0
    %905 = vmatpush1.xpose.msra.mxu0 0.0
    %906 = vmatprep.subr.mxu0 0.0
    %907 = vmatpush1.xpose.msra.mxu0 0.0
    %908 = vmatprep.subr.mxu0 0.0
    %909 = vmatpush1.xpose.msra.mxu0 0.0
    %910 = vmatprep.subr.mxu0 0.0
    %911 = vmatpush1.xpose.msra.mxu0 0.0
    %912 = vmatprep.subr.mxu0 0.0
    %913 = vmatpush1.xpose.msra.mxu0 0.0
    %914 = vmatprep.subr.mxu0 0.0
    %915 = vmatpush1.xpose.msra.mxu0 0.0
    %916 = vmatprep.subr.mxu0 0.0
    %917 = vmatpush1.xpose.msra.mxu0 0.0
    %918 = vmatprep.subr.mxu0 0.0
    %919 = vmatpush1.xpose.msra.mxu0 0.0
    %920 = vmatprep.subr.mxu0 0.0
    %921 = vmatpush1.xpose.msra.mxu0 0.0
    %922 = vmatprep.subr.mxu0 0.0
    %923 = vmatpush1.xpose.msra.mxu0 0.0
    %924 = vmatprep.subr.mxu0 0.0
    %925 = vmatpush1.xpose.msra.mxu0 0.0
    %926 = vmatprep.subr.mxu0 0.0
    %927 = vmatpush1.xpose.msra.mxu0 0.0
    %928 = vmatprep.subr.mxu0 0.0
    %929 = vmatpush1.xpose.msra.mxu0 0.0
    %930 = vmatprep.subr.mxu0 0.0
    %931 = vmatpush1.xpose.msra.mxu0 0.0
    %932 = vmatprep.subr.mxu0 0.0
    %933 = vmatpush1.xpose.msra.mxu0 0.0
    %934 = vmatprep.subr.mxu0 0.0
    %935 = vmatpush1.xpose.msra.mxu0 0.0
    %936 = vmatprep.subr.mxu0 0.0
    %937 = vmatpush1.xpose.msra.mxu0 0.0
    %938 = vmatprep.subr.mxu0 0.0
    %939 = vmatpush1.xpose.msra.mxu0 0.0
    %940 = vmatprep.subr.mxu0 0.0
    %941 = vmatpush1.xpose.msra.mxu0 0.0
    %942 = vmatprep.subr.mxu0 0.0
    %943 = vmatpush1.xpose.msra.mxu0 0.0
    %944 = vmatprep.subr.mxu0 0.0
    %945 = vmatpush1.xpose.msra.mxu0 0.0
    %946 = vmatprep.subr.mxu0 0.0
    %947 = vmatpush1.xpose.msra.mxu0 0.0
    %948 = vmatprep.subr.mxu0 0.0
    %949 = vmatpush1.xpose.msra.mxu0 0.0
    %950 = vmatprep.subr.mxu0 0.0
    %951 = vmatpush1.xpose.msra.mxu0 0.0
    %952 = vmatprep.mubr.f32.mxu0 0.0
    %953 = vmatmul.mubr.f32.gmra.mrb[0].mxu0 %v880
    %v954 = vpop.f32.mrb[0].mxu0
    %v955 = vadd.f32 %v169, %v954
    %v956 = vpop.f32.mrb[0].mxu0
    %957 = vmatprep.mubr.f32.mxu0 0.0
    %958 = vmatmul.mubr.f32.gmra.mrb[0].mxu0 %v882
    %v959 = vpop.f32.mrb[0].mxu0
    %v960 = vadd.f32 %v170, %v959
    %v961 = vpop.f32.mrb[0].mxu0
    %962 = vdwg.mxu0
    %v963 = vsel %vm400, %v955, -inf
    %964 = vmax.xlane.f32.xlu0 %v963
    %v965 = vpop.xlane.xlu0 %964
    %v966 = vsel %vm400, %v960, -inf
    %967 = vmax.xlane.f32.xlu0 %v966
    %v968 = vpop.xlane.xlu0 %967
    %v969 = vsub.f32 %v955, %v965
    %v970 = vsub.f32 %v960, %v968
    %v971 = vmul.f32 %v969, 1.442695
    %v972 = vpow.pop %v971
    %v973 = vmul.f32 %v970, 1.442695
    %v974 = vpow.pop %v973
    %v975 = vsel %vm400, %v972, 0.0
    %976 = vadd.xlane.f32.xlu0 %v975
    %v977 = vpop.xlane.xlu0 %976
    %v978 = vsel %vm400, %v974, 0.0
    %979 = vadd.xlane.f32.xlu0 %v978
    %v980 = vpop.xlane.xlu0 %979
    %v981 = vrcp.pop %v977
    %v982 = vrcp.pop %v980
    %v983 = vmul.f32 %v972, %v981
    %v984 = vmul.f32 %v974, %v982
    %985 = vrot.lane.b32.xlu0 %v294, 48
    %v986 = vpop.permute.xlu0 %985
    %987 = vrot.lane.b32.xlu0 %v299, 48
    %v988 = vpop.permute.xlu0 %987
    %v992 = vsel %vm400, %v983, 0
    %v995 = vsel %vm400, %v984, 0
    %997 = vmatprep.subr.mxu0 0.0
    %998 = vmatpush1.msra.mxu0 %v986
    %999 = vmatprep.subr.mxu0 0.0
    %1000 = vmatpush1.msra.mxu0 %v988
    %1001 = vmatprep.subr.mxu0 0.0
    %1002 = vmatpush1.msra.mxu0 0.0
    %1003 = vmatprep.subr.mxu0 0.0
    %1004 = vmatpush1.msra.mxu0 0.0
    %1005 = vmatprep.subr.mxu0 0.0
    %1006 = vmatpush1.msra.mxu0 0.0
    %1007 = vmatprep.subr.mxu0 0.0
    %1008 = vmatpush1.msra.mxu0 0.0
    %1009 = vmatprep.subr.mxu0 0.0
    %1010 = vmatpush1.msra.mxu0 0.0
    %1011 = vmatprep.subr.mxu0 0.0
    %1012 = vmatpush1.msra.mxu0 0.0
    %1013 = vmatprep.subr.mxu0 0.0
    %1014 = vmatpush1.msra.mxu0 0.0
    %1015 = vmatprep.subr.mxu0 0.0
    %1016 = vmatpush1.msra.mxu0 0.0
    %1017 = vmatprep.subr.mxu0 0.0
    %1018 = vmatpush1.msra.mxu0 0.0
    %1019 = vmatprep.subr.mxu0 0.0
    %1020 = vmatpush1.msra.mxu0 0.0
    %1021 = vmatprep.subr.mxu0 0.0
    %1022 = vmatpush1.msra.mxu0 0.0
    %1023 = vmatprep.subr.mxu0 0.0
    %1024 = vmatpush1.msra.mxu0 0.0
    %1025 = vmatprep.subr.mxu0 0.0
    %1026 = vmatpush1.msra.mxu0 0.0
    %1027 = vmatprep.subr.mxu0 0.0
    %1028 = vmatpush1.msra.mxu0 0.0
    %1029 = vmatprep.subr.mxu0 0.0
    %1030 = vmatpush1.msra.mxu0 0.0
    %1031 = vmatprep.subr.mxu0 0.0
    %1032 = vmatpush1.msra.mxu0 0.0
    %1033 = vmatprep.subr.mxu0 0.0
    %1034 = vmatpush1.msra.mxu0 0.0
    %1035 = vmatprep.subr.mxu0 0.0
    %1036 = vmatpush1.msra.mxu0 0.0
    %1037 = vmatprep.subr.mxu0 0.0
    %1038 = vmatpush1.msra.mxu0 0.0
    %1039 = vmatprep.subr.mxu0 0.0
    %1040 = vmatpush1.msra.mxu0 0.0
    %1041 = vmatprep.subr.mxu0 0.0
    %1042 = vmatpush1.msra.mxu0 0.0
    %1043 = vmatprep.subr.mxu0 0.0
    %1044 = vmatpush1.msra.mxu0 0.0
    %1045 = vmatprep.subr.mxu0 0.0
    %1046 = vmatpush1.msra.mxu0 0.0
    %1047 = vmatprep.subr.mxu0 0.0
    %1048 = vmatpush1.msra.mxu0 0.0
    %1049 = vmatprep.subr.mxu0 0.0
    %1050 = vmatpush1.msra.mxu0 0.0
    %1051 = vmatprep.subr.mxu0 0.0
    %1052 = vmatpush1.msra.mxu0 0.0
    %1053 = vmatprep.subr.mxu0 0.0
    %1054 = vmatpush1.msra.mxu0 0.0
    %1055 = vmatprep.subr.mxu0 0.0
    %1056 = vmatpush1.msra.mxu0 0.0
    %1057 = vmatprep.subr.mxu0 0.0
    %1058 = vmatpush1.msra.mxu0 0.0
    %1059 = vmatprep.subr.mxu0 0.0
    %1060 = vmatpush1.msra.mxu0 0.0
    %1061 = vmatprep.mubr.f32.mxu0 0.0
    %1062 = vmatmul.mubr.f32.gmra.mrb[0].mxu0 %v992
    %v1063 = vpop.f32.mrb[0].mxu0
    %v1064 = vadd.f32 0.0, %v1063
    %v1065 = vpop.f32.mrb[0].mxu0
    %1066 = vmatprep.mubr.f32.mxu0 0.0
    %1067 = vmatmul.mubr.f32.gmra.mrb[0].mxu0 %v995
    %v1068 = vpop.f32.mrb[0].mxu0
    %v1069 = vadd.f32 0.0, %v1068
    %v1070 = vpop.f32.mrb[0].mxu0
    %1071 = vdwg.mxu0
    %v1073 = vsel %vm314, %v1064, 0
    %v1076 = vsel %vm314, %v1069, 0
    %1078 = vmatprep.subr.mxu0 0.0
    %1079 = vmatpush1.msra.mxu0 %v304
    %1080 = vmatprep.subr.mxu0 0.0
    %1081 = vmatpush1.msra.mxu0 0.0
    %1082 = vmatprep.subr.mxu0 0.0
    %1083 = vmatpush1.msra.mxu0 0.0
    %1084 = vmatprep.subr.mxu0 0.0
    %1085 = vmatpush1.msra.mxu0 0.0
    %1086 = vmatprep.subr.mxu0 0.0
    %1087 = vmatpush1.msra.mxu0 0.0
    %1088 = vmatprep.subr.mxu0 0.0
    %1089 = vmatpush1.msra.mxu0 0.0
    %1090 = vmatprep.subr.mxu0 0.0
    %1091 = vmatpush1.msra.mxu0 0.0
    %1092 = vmatprep.subr.mxu0 0.0
    %1093 = vmatpush1.msra.mxu0 0.0
    %1094 = vmatprep.subr.mxu0 0.0
    %1095 = vmatpush1.msra.mxu0 0.0
    %1096 = vmatprep.subr.mxu0 0.0
    %1097 = vmatpush1.msra.mxu0 0.0
    %1098 = vmatprep.subr.mxu0 0.0
    %1099 = vmatpush1.msra.mxu0 0.0
    %1100 = vmatprep.subr.mxu0 0.0
    %1101 = vmatpush1.msra.mxu0 0.0
    %1102 = vmatprep.subr.mxu0 0.0
    %1103 = vmatpush1.msra.mxu0 0.0
    %1104 = vmatprep.subr.mxu0 0.0
    %1105 = vmatpush1.msra.mxu0 0.0
    %1106 = vmatprep.subr.mxu0 0.0
    %1107 = vmatpush1.msra.mxu0 0.0
    %1108 = vmatprep.subr.mxu0 0.0
    %1109 = vmatpush1.msra.mxu0 0.0
    %1110 = vmatprep.subr.mxu0 0.0
    %1111 = vmatpush1.msra.mxu0 0.0
    %1112 = vmatprep.subr.mxu0 0.0
    %1113 = vmatpush1.msra.mxu0 0.0
    %1114 = vmatprep.subr.mxu0 0.0
    %1115 = vmatpush1.msra.mxu0 0.0
    %1116 = vmatprep.subr.mxu0 0.0
    %1117 = vmatpush1.msra.mxu0 0.0
    %1118 = vmatprep.subr.mxu0 0.0
    %1119 = vmatpush1.msra.mxu0 0.0
    %1120 = vmatprep.subr.mxu0 0.0
    %1121 = vmatpush1.msra.mxu0 0.0
    %1122 = vmatprep.subr.mxu0 0.0
    %1123 = vmatpush1.msra.mxu0 0.0
    %1124 = vmatprep.subr.mxu0 0.0
    %1125 = vmatpush1.msra.mxu0 0.0
    %1126 = vmatprep.subr.mxu0 0.0
    %1127 = vmatpush1.msra.mxu0 0.0
    %1128 = vmatprep.subr.mxu0 0.0
    %1129 = vmatpush1.msra.mxu0 0.0
    %1130 = vmatprep.subr.mxu0 0.0
    %1131 = vmatpush1.msra.mxu0 0.0
    %1132 = vmatprep.subr.mxu0 0.0
    %1133 = vmatpush1.msra.mxu0 0.0
    %1134 = vmatprep.subr.mxu0 0.0
    %1135 = vmatpush1.msra.mxu0 0.0
    %1136 = vmatprep.subr.mxu0 0.0
    %1137 = vmatpush1.msra.mxu0 0.0
    %1138 = vmatprep.subr.mxu0 0.0
    %1139 = vmatpush1.msra.mxu0 0.0
    %1140 = vmatprep.subr.mxu0 0.0
    %1141 = vmatpush1.msra.mxu0 0.0
    %1142 = vmatprep.mubr.f32.mxu0 0.0
    %1143 = vmatmul.mubr.f32.gmra.mrb[0].mxu0 %v1073
    %v1144 = vpop.f32.mrb[0].mxu0
    %v1145 = vadd.f32 0.0, %v1144
    %v1146 = vpop.f32.mrb[0].mxu0
    %1147 = vmatprep.mubr.f32.mxu0 0.0
    %1148 = vmatmul.mubr.f32.gmra.mrb[0].mxu0 %v1076
    %v1149 = vpop.f32.mrb[0].mxu0
    %v1150 = vadd.f32 0.0, %v1149
    %v1151 = vpop.f32.mrb[0].mxu0
    %1152 = vdwg.mxu0
    %v1153 = vadd.f32 %v864, %v1145
    %v1154 = vadd.f32 %v869, %v1150
    %1155 = vrot.lane.b32.xlu0 %v306, 104
    %v1156 = vpop.permute.xlu0 %1155
    %1157 = vrot.lane.b32.xlu0 %v307, 104
    %v1158 = vpop.permute.xlu0 %1157
    %1159 = vrot.lane.b32.xlu0 %v294, 72
    %v1160 = vpop.permute.xlu0 %1159
    %1161 = vrot.lane.b32.xlu0 %v299, 72
    %v1162 = vpop.permute.xlu0 %1161
    %v1163 = vsel %vm314, %v1156, 0
    %v1165 = vsel %vm314, %v1158, 0
    %v1167 = vsel %vm314, %v1160, 0
    %v1169 = vsel %vm314, %v1162, 0
    %1171 = vmatprep.subr.mxu0 0.0
    %1172 = vmatpush1.xpose.msra.mxu0 %v1167
    %1173 = vmatprep.subr.mxu0 0.0
    %1174 = vmatpush1.xpose.msra.mxu0 %v1169
    %1175 = vmatprep.subr.mxu0 0.0
    %1176 = vmatpush1.xpose.msra.mxu0 0.0
    %1177 = vmatprep.subr.mxu0 0.0
    %1178 = vmatpush1.xpose.msra.mxu0 0.0
    %1179 = vmatprep.subr.mxu0 0.0
    %1180 = vmatpush1.xpose.msra.mxu0 0.0
    %1181 = vmatprep.subr.mxu0 0.0
    %1182 = vmatpush1.xpose.msra.mxu0 0.0
    %1183 = vmatprep.subr.mxu0 0.0
    %1184 = vmatpush1.xpose.msra.mxu0 0.0
    %1185 = vmatprep.subr.mxu0 0.0
    %1186 = vmatpush1.xpose.msra.mxu0 0.0
    %1187 = vmatprep.subr.mxu0 0.0
    %1188 = vmatpush1.xpose.msra.mxu0 0.0
    %1189 = vmatprep.subr.mxu0 0.0
    %1190 = vmatpush1.xpose.msra.mxu0 0.0
    %1191 = vmatprep.subr.mxu0 0.0
    %1192 = vmatpush1.xpose.msra.mxu0 0.0
    %1193 = vmatprep.subr.mxu0 0.0
    %1194 = vmatpush1.xpose.msra.mxu0 0.0
    %1195 = vmatprep.subr.mxu0 0.0
    %1196 = vmatpush1.xpose.msra.mxu0 0.0
    %1197 = vmatprep.subr.mxu0 0.0
    %1198 = vmatpush1.xpose.msra.mxu0 0.0
    %1199 = vmatprep.subr.mxu0 0.0
    %1200 = vmatpush1.xpose.msra.mxu0 0.0
    %1201 = vmatprep.subr.mxu0 0.0
    %1202 = vmatpush1.xpose.msra.mxu0 0.0
    %1203 = vmatprep.subr.mxu0 0.0
    %1204 = vmatpush1.xpose.msra.mxu0 0.0
    %1205 = vmatprep.subr.mxu0 0.0
    %1206 = vmatpush1.xpose.msra.mxu0 0.0
    %1207 = vmatprep.subr.mxu0 0.0
    %1208 = vmatpush1.xpose.msra.mxu0 0.0
    %1209 = vmatprep.subr.mxu0 0.0
    %1210 = vmatpush1.xpose.msra.mxu0 0.0
    %1211 = vmatprep.subr.mxu0 0.0
    %1212 = vmatpush1.xpose.msra.mxu0 0.0
    %1213 = vmatprep.subr.mxu0 0.0
    %1214 = vmatpush1.xpose.msra.mxu0 0.0
    %1215 = vmatprep.subr.mxu0 0.0
    %1216 = vmatpush1.xpose.msra.mxu0 0.0
    %1217 = vmatprep.subr.mxu0 0.0
    %1218 = vmatpush1.xpose.msra.mxu0 0.0
    %1219 = vmatprep.subr.mxu0 0.0
    %1220 = vmatpush1.xpose.msra.mxu0 0.0
    %1221 = vmatprep.subr.mxu0 0.0
    %1222 = vmatpush1.xpose.msra.mxu0 0.0
    %1223 = vmatprep.subr.mxu0 0.0
    %1224 = vmatpush1.xpose.msra.mxu0 0.0
    %1225 = vmatprep.subr.mxu0 0.0
    %1226 = vmatpush1.xpose.msra.mxu0 0.0
    %1227 = vmatprep.subr.mxu0 0.0
    %1228 = vmatpush1.xpose.msra.mxu0 0.0
    %1229 = vmatprep.subr.mxu0 0.0
    %1230 = vmatpush1.xpose.msra.mxu0 0.0
    %1231 = vmatprep.subr.mxu0 0.0
    %1232 = vmatpush1.xpose.msra.mxu0 0.0
    %1233 = vmatprep.subr.mxu0 0.0
    %1234 = vmatpush1.xpose.msra.mxu0 0.0
    %1235 = vmatprep.mubr.f32.mxu0 0.0
    %1236 = vmatmul.mubr.f32.gmra.mrb[0].mxu0 %v1163
    %v1237 = vpop.f32.mrb[0].mxu0
    %v1238 = vadd.f32 %v169, %v1237
    %v1239 = vpop.f32.mrb[0].mxu0
    %1240 = vmatprep.mubr.f32.mxu0 0.0
    %1241 = vmatmul.mubr.f32.gmra.mrb[0].mxu0 %v1165
    %v1242 = vpop.f32.mrb[0].mxu0
    %v1243 = vadd.f32 %v170, %v1242
    %v1244 = vpop.f32.mrb[0].mxu0
    %1245 = vdwg.mxu0
    %v1246 = vsel %vm400, %v1238, -inf
    %1247 = vmax.xlane.f32.xlu0 %v1246
    %v1248 = vpop.xlane.xlu0 %1247
    %v1249 = vsel %vm400, %v1243, -inf
    %1250 = vmax.xlane.f32.xlu0 %v1249
    %v1251 = vpop.xlane.xlu0 %1250
    %v1252 = vsub.f32 %v1238, %v1248
    %v1253 = vsub.f32 %v1243, %v1251
    %v1254 = vmul.f32 %v1252, 1.442695
    %v1255 = vpow.pop %v1254
    %v1256 = vmul.f32 %v1253, 1.442695
    %v1257 = vpow.pop %v1256
    %v1258 = vsel %vm400, %v1255, 0.0
    %1259 = vadd.xlane.f32.xlu0 %v1258
    %v1260 = vpop.xlane.xlu0 %1259
    %v1261 = vsel %vm400, %v1257, 0.0
    %1262 = vadd.xlane.f32.xlu0 %v1261
    %v1263 = vpop.xlane.xlu0 %1262
    %v1264 = vrcp.pop %v1260
    %v1265 = vrcp.pop %v1263
    %v1266 = vmul.f32 %v1255, %v1264
    %v1267 = vmul.f32 %v1257, %v1265
    %1268 = vrot.lane.b32.xlu0 %v294, 40
    %v1269 = vpop.permute.xlu0 %1268
    %1270 = vrot.lane.b32.xlu0 %v299, 40
    %v1271 = vpop.permute.xlu0 %1270
    %v1275 = vsel %vm400, %v1266, 0
    %v1278 = vsel %vm400, %v1267, 0
    %1280 = vmatprep.subr.mxu0 0.0
    %1281 = vmatpush1.msra.mxu0 %v1269
    %1282 = vmatprep.subr.mxu0 0.0
    %1283 = vmatpush1.msra.mxu0 %v1271
    %1284 = vmatprep.subr.mxu0 0.0
    %1285 = vmatpush1.msra.mxu0 0.0
    %1286 = vmatprep.subr.mxu0 0.0
    %1287 = vmatpush1.msra.mxu0 0.0
    %1288 = vmatprep.subr.mxu0 0.0
    %1289 = vmatpush1.msra.mxu0 0.0
    %1290 = vmatprep.subr.mxu0 0.0
    %1291 = vmatpush1.msra.mxu0 0.0
    %1292 = vmatprep.subr.mxu0 0.0
    %1293 = vmatpush1.msra.mxu0 0.0
    %1294 = vmatprep.subr.mxu0 0.0
    %1295 = vmatpush1.msra.mxu0 0.0
    %1296 = vmatprep.subr.mxu0 0.0
    %1297 = vmatpush1.msra.mxu0 0.0
    %1298 = vmatprep.subr.mxu0 0.0
    %1299 = vmatpush1.msra.mxu0 0.0
    %1300 = vmatprep.subr.mxu0 0.0
    %1301 = vmatpush1.msra.mxu0 0.0
    %1302 = vmatprep.subr.mxu0 0.0
    %1303 = vmatpush1.msra.mxu0 0.0
    %1304 = vmatprep.subr.mxu0 0.0
    %1305 = vmatpush1.msra.mxu0 0.0
    %1306 = vmatprep.subr.mxu0 0.0
    %1307 = vmatpush1.msra.mxu0 0.0
    %1308 = vmatprep.subr.mxu0 0.0
    %1309 = vmatpush1.msra.mxu0 0.0
    %1310 = vmatprep.subr.mxu0 0.0
    %1311 = vmatpush1.msra.mxu0 0.0
    %1312 = vmatprep.subr.mxu0 0.0
    %1313 = vmatpush1.msra.mxu0 0.0
    %1314 = vmatprep.subr.mxu0 0.0
    %1315 = vmatpush1.msra.mxu0 0.0
    %1316 = vmatprep.subr.mxu0 0.0
    %1317 = vmatpush1.msra.mxu0 0.0
    %1318 = vmatprep.subr.mxu0 0.0
    %1319 = vmatpush1.msra.mxu0 0.0
    %1320 = vmatprep.subr.mxu0 0.0
    %1321 = vmatpush1.msra.mxu0 0.0
    %1322 = vmatprep.subr.mxu0 0.0
    %1323 = vmatpush1.msra.mxu0 0.0
    %1324 = vmatprep.subr.mxu0 0.0
    %1325 = vmatpush1.msra.mxu0 0.0
    %1326 = vmatprep.subr.mxu0 0.0
    %1327 = vmatpush1.msra.mxu0 0.0
    %1328 = vmatprep.subr.mxu0 0.0
    %1329 = vmatpush1.msra.mxu0 0.0
    %1330 = vmatprep.subr.mxu0 0.0
    %1331 = vmatpush1.msra.mxu0 0.0
    %1332 = vmatprep.subr.mxu0 0.0
    %1333 = vmatpush1.msra.mxu0 0.0
    %1334 = vmatprep.subr.mxu0 0.0
    %1335 = vmatpush1.msra.mxu0 0.0
    %1336 = vmatprep.subr.mxu0 0.0
    %1337 = vmatpush1.msra.mxu0 0.0
    %1338 = vmatprep.subr.mxu0 0.0
    %1339 = vmatpush1.msra.mxu0 0.0
    %1340 = vmatprep.subr.mxu0 0.0
    %1341 = vmatpush1.msra.mxu0 0.0
    %1342 = vmatprep.subr.mxu0 0.0
    %1343 = vmatpush1.msra.mxu0 0.0
    %1344 = vmatprep.mubr.f32.mxu0 0.0
    %1345 = vmatmul.mubr.f32.gmra.mrb[0].mxu0 %v1275
    %v1346 = vpop.f32.mrb[0].mxu0
    %v1347 = vadd.f32 0.0, %v1346
    %v1348 = vpop.f32.mrb[0].mxu0
    %1349 = vmatprep.mubr.f32.mxu0 0.0
    %1350 = vmatmul.mubr.f32.gmra.mrb[0].mxu0 %v1278
    %v1351 = vpop.f32.mrb[0].mxu0
    %v1352 = vadd.f32 0.0, %v1351
    %v1353 = vpop.f32.mrb[0].mxu0
    %1354 = vdwg.mxu0
    %v1356 = vsel %vm314, %v1347, 0
    %v1359 = vsel %vm314, %v1352, 0
    %1361 = vmatprep.subr.mxu0 0.0
    %1362 = vmatpush1.msra.mxu0 %v305
    %1363 = vmatprep.subr.mxu0 0.0
    %1364 = vmatpush1.msra.mxu0 0.0
    %1365 = vmatprep.subr.mxu0 0.0
    %1366 = vmatpush1.msra.mxu0 0.0
    %1367 = vmatprep.subr.mxu0 0.0
    %1368 = vmatpush1.msra.mxu0 0.0
    %1369 = vmatprep.subr.mxu0 0.0
    %1370 = vmatpush1.msra.mxu0 0.0
    %1371 = vmatprep.subr.mxu0 0.0
    %1372 = vmatpush1.msra.mxu0 0.0
    %1373 = vmatprep.subr.mxu0 0.0
    %1374 = vmatpush1.msra.mxu0 0.0
    %1375 = vmatprep.subr.mxu0 0.0
    %1376 = vmatpush1.msra.mxu0 0.0
    %1377 = vmatprep.subr.mxu0 0.0
    %1378 = vmatpush1.msra.mxu0 0.0
    %1379 = vmatprep.subr.mxu0 0.0
    %1380 = vmatpush1.msra.mxu0 0.0
    %1381 = vmatprep.subr.mxu0 0.0
    %1382 = vmatpush1.msra.mxu0 0.0
    %1383 = vmatprep.subr.mxu0 0.0
    %1384 = vmatpush1.msra.mxu0 0.0
    %1385 = vmatprep.subr.mxu0 0.0
    %1386 = vmatpush1.msra.mxu0 0.0
    %1387 = vmatprep.subr.mxu0 0.0
    %1388 = vmatpush1.msra.mxu0 0.0
    %1389 = vmatprep.subr.mxu0 0.0
    %1390 = vmatpush1.msra.mxu0 0.0
    %1391 = vmatprep.subr.mxu0 0.0
    %1392 = vmatpush1.msra.mxu0 0.0
    %1393 = vmatprep.subr.mxu0 0.0
    %1394 = vmatpush1.msra.mxu0 0.0
    %1395 = vmatprep.subr.mxu0 0.0
    %1396 = vmatpush1.msra.mxu0 0.0
    %1397 = vmatprep.subr.mxu0 0.0
    %1398 = vmatpush1.msra.mxu0 0.0
    %1399 = vmatprep.subr.mxu0 0.0
    %1400 = vmatpush1.msra.mxu0 0.0
    %1401 = vmatprep.subr.mxu0 0.0
    %1402 = vmatpush1.msra.mxu0 0.0
    %1403 = vmatprep.subr.mxu0 0.0
    %1404 = vmatpush1.msra.mxu0 0.0
    %1405 = vmatprep.subr.mxu0 0.0
    %1406 = vmatpush1.msra.mxu0 0.0
    %1407 = vmatprep.subr.mxu0 0.0
    %1408 = vmatpush1.msra.mxu0 0.0
    %1409 = vmatprep.subr.mxu0 0.0
    %1410 = vmatpush1.msra.mxu0 0.0
    %1411 = vmatprep.subr.mxu0 0.0
    %1412 = vmatpush1.msra.mxu0 0.0
    %1413 = vmatprep.subr.mxu0 0.0
    %1414 = vmatpush1.msra.mxu0 0.0
    %1415 = vmatprep.subr.mxu0 0.0
    %1416 = vmatpush1.msra.mxu0 0.0
    %1417 = vmatprep.subr.mxu0 0.0
    %1418 = vmatpush1.msra.mxu0 0.0
    %1419 = vmatprep.subr.mxu0 0.0
    %1420 = vmatpush1.msra.mxu0 0.0
    %1421 = vmatprep.subr.mxu0 0.0
    %1422 = vmatpush1.msra.mxu0 0.0
    %1423 = vmatprep.subr.mxu0 0.0
    %1424 = vmatpush1.msra.mxu0 0.0
    %1425 = vmatprep.mubr.f32.mxu0 0.0
    %1426 = vmatmul.mubr.f32.gmra.mrb[0].mxu0 %v1356
    %v1427 = vpop.f32.mrb[0].mxu0
    %v1428 = vadd.f32 0.0, %v1427
    %v1429 = vpop.f32.mrb[0].mxu0
    %1430 = vmatprep.mubr.f32.mxu0 0.0
    %1431 = vmatmul.mubr.f32.gmra.mrb[0].mxu0 %v1359
    %v1432 = vpop.f32.mrb[0].mxu0
    %v1433 = vadd.f32 0.0, %v1432
    %v1434 = vpop.f32.mrb[0].mxu0
    %1435 = vdwg.mxu0
    %v1436 = vadd.f32 %v1153, %v1428
    %v1437 = vadd.f32 %v1154, %v1433
    %v1438 = vadd.f32 %v161, %v1436
    %v1439 = vadd.f32 %v166, %v1437
    %v1440 = vld [vmem:[%s8] sm:$0x1]
    %v1442 = vlaneseq
    %v1443 = vshrl.u32 %v1442, 7
    %v1444 = vsub.s32 0, %v1443
    %v1445 = vrot.slane %v1440, %v1444
    %v1447 = vadd.f32 %v1438, %v1445
    %v1448 = vadd.f32 %v1439, %v1445
    %v1449 = vld [vmem:[%s9] sm:$0x1]
    %v1450 = vld [vmem:[%s10] sm:$0x1]
    %v1451 = vsel %vm173, %v1447, 0.0
    %1452 = vadd.xlane.f32.xlu0 %v1451
    %v1453 = vpop.xlane.xlu0 %1452
    %v1454 = vsel %vm173, %v1448, 0.0
    %1455 = vadd.xlane.f32.xlu0 %v1454
    %v1456 = vpop.xlane.xlu0 %1455
    %v1457 = vmul.f32 %v1453, %v180
    %v1458 = vmul.f32 %v1456, %v180
    %v1459 = vsub.f32 %v1447, %v1457
    %v1460 = vsub.f32 %v1448, %v1458
    %v1461 = vmul.f32 %v1459, %v1459
    %v1462 = vmul.f32 %v1460, %v1460
    %v1463 = vsel %vm173, %v1461, 0.0
    %1464 = vadd.xlane.f32.xlu0 %v1463
    %v1465 = vpop.xlane.xlu0 %1464
    %v1466 = vsel %vm173, %v1462, 0.0
    %1467 = vadd.xlane.f32.xlu0 %v1466
    %v1468 = vpop.xlane.xlu0 %1467
    %v1469 = vmul.f32 %v1465, %v180
    %v1470 = vmul.f32 %v1468, %v180
    %v1471 = vadd.f32 %v1469, 1e-05
    %v1472 = vadd.f32 %v1470, 1e-05
    %v1473 = vrsqrt.pop %v1471
    %v1474 = vrsqrt.pop %v1472
    %v1475 = vmul.f32 %v1459, %v1473
    %v1476 = vmul.f32 %v1460, %v1474
    %v1478 = vlaneseq
    %v1479 = vshrl.u32 %v1478, 7
    %v1480 = vsub.s32 0, %v1479
    %v1481 = vrot.slane %v1449, %v1480
    %v1483 = vmul.f32 %v1475, %v1481
    %v1484 = vmul.f32 %v1476, %v1481
    %v1486 = vlaneseq
    %v1487 = vshrl.u32 %v1486, 7
    %v1488 = vsub.s32 0, %v1487
    %v1489 = vrot.slane %v1450, %v1488
    %v1491 = vadd.f32 %v1483, %v1489
    %v1492 = vadd.f32 %v1484, %v1489
    %v1493 = vld [vmem:[%s11] sm:$0xff]
    %v1494 = vld [vmem:[%s11 + $0x8] sm:$0xff]
    %v1495 = vld [vmem:[%s11 + $0x10] sm:$0xff]
    %v1496 = vld [vmem:[%s11 + $0x18] sm:$0xff]
    %v1497 = vld [vmem:[%s12] sm:$0x1]
    %v1499 = vlaneseq
    %v1500 = vshrl.u32 %v1499, 7
    %v1501 = vsub.s32 0, %v1500
    %v1502 = vrot.slane %v1497, %v1501
    %v1505 = vsel %vm173, %v1491, 0
    %v1508 = vsel %vm173, %v1492, 0
    %1510 = vmatprep.subr.mxu0 0.0
    %1511 = vmatpush1.msra.mxu0 %v1493
    %1512 = vmatprep.subr.mxu0 0.0
    %1513 = vmatpush1.msra.mxu0 %v1494
    %1514 = vmatprep.subr.mxu0 0.0
    %1515 = vmatpush1.msra.mxu0 %v1495
    %1516 = vmatprep.subr.mxu0 0.0
    %1517 = vmatpush1.msra.mxu0 %v1496
    %1518 = vmatprep.subr.mxu0 0.0
    %1519 = vmatpush1.msra.mxu0 0.0
    %1520 = vmatprep.subr.mxu0 0.0
    %1521 = vmatpush1.msra.mxu0 0.0
    %1522 = vmatprep.subr.mxu0 0.0
    %1523 = vmatpush1.msra.mxu0 0.0
    %1524 = vmatprep.subr.mxu0 0.0
    %1525 = vmatpush1.msra.mxu0 0.0
    %1526 = vmatprep.subr.mxu0 0.0
    %1527 = vmatpush1.msra.mxu0 0.0
    %1528 = vmatprep.subr.mxu0 0.0
    %1529 = vmatpush1.msra.mxu0 0.0
    %1530 = vmatprep.subr.mxu0 0.0
    %1531 = vmatpush1.msra.mxu0 0.0
    %1532 = vmatprep.subr.mxu0 0.0
    %1533 = vmatpush1.msra.mxu0 0.0
    %1534 = vmatprep.subr.mxu0 0.0
    %1535 = vmatpush1.msra.mxu0 0.0
    %1536 = vmatprep.subr.mxu0 0.0
    %1537 = vmatpush1.msra.mxu0 0.0
    %1538 = vmatprep.subr.mxu0 0.0
    %1539 = vmatpush1.msra.mxu0 0.0
    %1540 = vmatprep.subr.mxu0 0.0
    %1541 = vmatpush1.msra.mxu0 0.0
    %1542 = vmatprep.subr.mxu0 0.0
    %1543 = vmatpush1.msra.mxu0 0.0
    %1544 = vmatprep.subr.mxu0 0.0
    %1545 = vmatpush1.msra.mxu0 0.0
    %1546 = vmatprep.subr.mxu0 0.0
    %1547 = vmatpush1.msra.mxu0 0.0
    %1548 = vmatprep.subr.mxu0 0.0
    %1549 = vmatpush1.msra.mxu0 0.0
    %1550 = vmatprep.subr.mxu0 0.0
    %1551 = vmatpush1.msra.mxu0 0.0
    %1552 = vmatprep.subr.mxu0 0.0
    %1553 = vmatpush1.msra.mxu0 0.0
    %1554 = vmatprep.subr.mxu0 0.0
    %1555 = vmatpush1.msra.mxu0 0.0
    %1556 = vmatprep.subr.mxu0 0.0
    %1557 = vmatpush1.msra.mxu0 0.0
    %1558 = vmatprep.subr.mxu0 0.0
    %1559 = vmatpush1.msra.mxu0 0.0
    %1560 = vmatprep.subr.mxu0 0.0
    %1561 = vmatpush1.msra.mxu0 0.0
    %1562 = vmatprep.subr.mxu0 0.0
    %1563 = vmatpush1.msra.mxu0 0.0
    %1564 = vmatprep.subr.mxu0 0.0
    %1565 = vmatpush1.msra.mxu0 0.0
    %1566 = vmatprep.subr.mxu0 0.0
    %1567 = vmatpush1.msra.mxu0 0.0
    %1568 = vmatprep.subr.mxu0 0.0
    %1569 = vmatpush1.msra.mxu0 0.0
    %1570 = vmatprep.subr.mxu0 0.0
    %1571 = vmatpush1.msra.mxu0 0.0
    %1572 = vmatprep.subr.mxu0 0.0
    %1573 = vmatpush1.msra.mxu0 0.0
    %1574 = vmatprep.mubr.f32.mxu0 0.0
    %1575 = vmatmul.mubr.f32.gmra.mrb[0].mxu0 %v1505
    %v1576 = vpop.f32.mrb[0].mxu0
    %v1577 = vadd.f32 %v1502, %v1576
    %v1578 = vpop.f32.mrb[0].mxu0
    %1579 = vmatprep.mubr.f32.mxu0 0.0
    %1580 = vmatmul.mubr.f32.gmra.mrb[0].mxu0 %v1508
    %v1581 = vpop.f32.mrb[0].mxu0
    %v1582 = vadd.f32 %v1502, %v1581
    %v1583 = vpop.f32.mrb[0].mxu0
    %1584 = vdwg.mxu0
    %v1585 = vmul.f32 %v1577, 0.5
    %v1586 = vmul.f32 %v1582, 0.5
    %v1587 = vmul.f32 %v1577, %v1577
    %v1588 = vmul.f32 %v1582, %v1582
    %v1589 = vmul.f32 %v1577, %v1587
    %v1590 = vmul.f32 %v1582, %v1588
    %v1591 = vmul.f32 %v1589, 0.044715
    %v1592 = vmul.f32 %v1590, 0.044715
    %v1593 = vadd.f32 %v1577, %v1591
    %v1594 = vadd.f32 %v1582, %v1592
    %v1595 = vmul.f32 %v1593, 0.7978845
    %v1596 = vmul.f32 %v1594, 0.7978845
    %v1597 = vtanh.pop %v1595
    %v1598 = vtanh.pop %v1596
    %v1599 = vadd.f32 %v1597, 1.0
    %v1600 = vadd.f32 %v1598, 1.0
    %v1601 = vmul.f32 %v1585, %v1599
    %v1602 = vmul.f32 %v1586, %v1600
    %v1603 = vld [vmem:[%s13] sm:$0xff]
    %v1604 = vld [vmem:[%s13 + $0x8] sm:$0xff]
    %v1605 = vld [vmem:[%s13 + $0x10] sm:$0xff]
    %v1606 = vld [vmem:[%s13 + $0x18] sm:$0xff]
    %v1607 = vld [vmem:[%s13 + $0x20] sm:$0xff]
    %v1608 = vld [vmem:[%s13 + $0x28] sm:$0xff]
    %v1609 = vld [vmem:[%s13 + $0x30] sm:$0xff]
    %v1610 = vld [vmem:[%s13 + $0x38] sm:$0xff]
    %v1611 = vld [vmem:[%s13 + $0x40] sm:$0xff]
    %v1612 = vld [vmem:[%s13 + $0x48] sm:$0xff]
    %v1613 = vld [vmem:[%s13 + $0x50] sm:$0xff]
    %v1614 = vld [vmem:[%s13 + $0x58] sm:$0xff]
    %v1615 = vld [vmem:[%s13 + $0x60] sm:$0xff]
    %v1616 = vld [vmem:[%s13 + $0x68] sm:$0xff]
    %v1617 = vld [vmem:[%s13 + $0x70] sm:$0xff]
    %v1618 = vld [vmem:[%s13 + $0x78] sm:$0xff]
    %v1619 = vld [vmem:[%s14] sm:$0x1]
    %v1621 = vlaneseq
    %v1622 = vshrl.u32 %v1621, 7
    %v1623 = vsub.s32 0, %v1622
    %v1624 = vrot.slane %v1619, %v1623
    %1626 = vmatprep.subr.mxu0 0.0
    %1627 = vmatpush1.msra.mxu0 %v1603
    %1628 = vmatprep.subr.mxu0 0.0
    %1629 = vmatpush1.msra.mxu0 %v1604
    %1630 = vmatprep.subr.mxu0 0.0
    %1631 = vmatpush1.msra.mxu0 %v1605
    %1632 = vmatprep.subr.mxu0 0.0
    %1633 = vmatpush1.msra.mxu0 %v1606
    %1634 = vmatprep.subr.mxu0 0.0
    %1635 = vmatpush1.msra.mxu0 %v1607
    %1636 = vmatprep.subr.mxu0 0.0
    %1637 = vmatpush1.msra.mxu0 %v1608
    %1638 = vmatprep.subr.mxu0 0.0
    %1639 = vmatpush1.msra.mxu0 %v1609
    %1640 = vmatprep.subr.mxu0 0.0
    %1641 = vmatpush1.msra.mxu0 %v1610
    %1642 = vmatprep.subr.mxu0 0.0
    %1643 = vmatpush1.msra.mxu0 %v1611
    %1644 = vmatprep.subr.mxu0 0.0
    %1645 = vmatpush1.msra.mxu0 %v1612
    %1646 = vmatprep.subr.mxu0 0.0
    %1647 = vmatpush1.msra.mxu0 %v1613
    %1648 = vmatprep.subr.mxu0 0.0
    %1649 = vmatpush1.msra.mxu0 %v1614
    %1650 = vmatprep.subr.mxu0 0.0
    %1651 = vmatpush1.msra.mxu0 %v1615
    %1652 = vmatprep.subr.mxu0 0.0
    %1653 = vmatpush1.msra.mxu0 %v1616
    %1654 = vmatprep.subr.mxu0 0.0
    %1655 = vmatpush1.msra.mxu0 %v1617
    %1656 = vmatprep.subr.mxu0 0.0
    %1657 = vmatpush1.msra.mxu0 %v1618
    %1658 = vmatprep.subr.mxu0 0.0
    %1659 = vmatpush1.msra.mxu0 0.0
    %1660 = vmatprep.subr.mxu0 0.0
    %1661 = vmatpush1.msra.mxu0 0.0
    %1662 = vmatprep.subr.mxu0 0.0
    %1663 = vmatpush1.msra.mxu0 0.0
    %1664 = vmatprep.subr.mxu0 0.0
    %1665 = vmatpush1.msra.mxu0 0.0
    %1666 = vmatprep.subr.mxu0 0.0
    %1667 = vmatpush1.msra.mxu0 0.0
    %1668 = vmatprep.subr.mxu0 0.0
    %1669 = vmatpush1.msra.mxu0 0.0
    %1670 = vmatprep.subr.mxu0 0.0
    %1671 = vmatpush1.msra.mxu0 0.0
    %1672 = vmatprep.subr.mxu0 0.0
    %1673 = vmatpush1.msra.mxu0 0.0
    %1674 = vmatprep.subr.mxu0 0.0
    %1675 = vmatpush1.msra.mxu0 0.0
    %1676 = vmatprep.subr.mxu0 0.0
    %1677 = vmatpush1.msra.mxu0 0.0
    %1678 = vmatprep.subr.mxu0 0.0
    %1679 = vmatpush1.msra.mxu0 0.0
    %1680 = vmatprep.subr.mxu0 0.0
    %1681 = vmatpush1.msra.mxu0 0.0
    %1682 = vmatprep.subr.mxu0 0.0
    %1683 = vmatpush1.msra.mxu0 0.0
    %1684 = vmatprep.subr.mxu0 0.0
    %1685 = vmatpush1.msra.mxu0 0.0
    %1686 = vmatprep.subr.mxu0 0.0
    %1687 = vmatpush1.msra.mxu0 0.0
    %1688 = vmatprep.subr.mxu0 0.0
    %1689 = vmatpush1.msra.mxu0 0.0
    %1690 = vmatprep.mubr.f32.mxu0 0.0
    %1691 = vmatmul.mubr.f32.gmra.mrb[0].mxu0 %v1601
    %v1692 = vpop.f32.mrb[0].mxu0
    %v1693 = vadd.f32 %v1624, %v1692
    %v1694 = vpop.f32.mrb[0].mxu0
    %1695 = vmatprep.mubr.f32.mxu0 0.0
    %1696 = vmatmul.mubr.f32.gmra.mrb[0].mxu0 %v1602
    %v1697 = vpop.f32.mrb[0].mxu0
    %v1698 = vadd.f32 %v1624, %v1697
    %v1699 = vpop.f32.mrb[0].mxu0
    %1700 = vdwg.mxu0
    %v1701 = vadd.f32 %v1447, %v1693
    %v1702 = vadd.f32 %v1448, %v1698
    %s1703 = scalar_lea.vmem %s4, 1
    %v1704 = vld [vmem:[%s1703] sm:$0x1]
    %s1705 = scalar_lea.vmem %s5, 1
    %v1706 = vld [vmem:[%s1705] sm:$0x1]
    %v1707 = vsel %vm173, %v1701, 0.0
    %1708 = vadd.xlane.f32.xlu0 %v1707
    %v1709 = vpop.xlane.xlu0 %1708
    %v1710 = vsel %vm173, %v1702, 0.0
    %1711 = vadd.xlane.f32.xlu0 %v1710
    %v1712 = vpop.xlane.xlu0 %1711
    %v1713 = vmul.f32 %v1709, %v180
    %v1714 = vmul.f32 %v1712, %v180
    %v1715 = vsub.f32 %v1701, %v1713
    %v1716 = vsub.f32 %v1702, %v1714
    %v1717 = vmul.f32 %v1715, %v1715
    %v1718 = vmul.f32 %v1716, %v1716
    %v1719 = vsel %vm173, %v1717, 0.0
    %1720 = vadd.xlane.f32.xlu0 %v1719
    %v1721 = vpop.xlane.xlu0 %1720
    %v1722 = vsel %vm173, %v1718, 0.0
    %1723 = vadd.xlane.f32.xlu0 %v1722
    %v1724 = vpop.xlane.xlu0 %1723
    %v1725 = vmul.f32 %v1721, %v180
    %v1726 = vmul.f32 %v1724, %v180
    %v1727 = vadd.f32 %v1725, 1e-05
    %v1728 = vadd.f32 %v1726, 1e-05
    %v1729 = vrsqrt.pop %v1727
    %v1730 = vrsqrt.pop %v1728
    %v1731 = vmul.f32 %v1715, %v1729
    %v1732 = vmul.f32 %v1716, %v1730
    %v1734 = vlaneseq
    %v1735 = vshrl.u32 %v1734, 7
    %v1736 = vsub.s32 0, %v1735
    %v1737 = vrot.slane %v1704, %v1736
    %v1739 = vmul.f32 %v1731, %v1737
    %v1740 = vmul.f32 %v1732, %v1737
    %v1742 = vlaneseq
    %v1743 = vshrl.u32 %v1742, 7
    %v1744 = vsub.s32 0, %v1743
    %v1745 = vrot.slane %v1706, %v1744
    %v1747 = vadd.f32 %v1739, %v1745
    %v1748 = vadd.f32 %v1740, %v1745
    %s1749 = scalar_lea.vmem %s6, 32
    %v1750 = vld [vmem:[%s1749] sm:$0xff]
    %v1751 = vld [vmem:[%s1749 + $0x8] sm:$0xff]
    %v1752 = vld [vmem:[%s1749 + $0x10] sm:$0xff]
    %v1753 = vld [vmem:[%s1749 + $0x18] sm:$0xff]
    %v1755 = vsel %vm173, %v1747, 0
    %v1758 = vsel %vm173, %v1748, 0
    %1760 = vmatprep.subr.mxu0 0.0
    %1761 = vmatpush1.msra.mxu0 %v1750
    %1762 = vmatprep.subr.mxu0 0.0
    %1763 = vmatpush1.msra.mxu0 %v1751
    %1764 = vmatprep.subr.mxu0 0.0
    %1765 = vmatpush1.msra.mxu0 %v1752
    %1766 = vmatprep.subr.mxu0 0.0
    %1767 = vmatpush1.msra.mxu0 %v1753
    %1768 = vmatprep.subr.mxu0 0.0
    %1769 = vmatpush1.msra.mxu0 0.0
    %1770 = vmatprep.subr.mxu0 0.0
    %1771 = vmatpush1.msra.mxu0 0.0
    %1772 = vmatprep.subr.mxu0 0.0
    %1773 = vmatpush1.msra.mxu0 0.0
    %1774 = vmatprep.subr.mxu0 0.0
    %1775 = vmatpush1.msra.mxu0 0.0
    %1776 = vmatprep.subr.mxu0 0.0
    %1777 = vmatpush1.msra.mxu0 0.0
    %1778 = vmatprep.subr.mxu0 0.0
    %1779 = vmatpush1.msra.mxu0 0.0
    %1780 = vmatprep.subr.mxu0 0.0
    %1781 = vmatpush1.msra.mxu0 0.0
    %1782 = vmatprep.subr.mxu0 0.0
    %1783 = vmatpush1.msra.mxu0 0.0
    %1784 = vmatprep.subr.mxu0 0.0
    %1785 = vmatpush1.msra.mxu0 0.0
    %1786 = vmatprep.subr.mxu0 0.0
    %1787 = vmatpush1.msra.mxu0 0.0
    %1788 = vmatprep.subr.mxu0 0.0
    %1789 = vmatpush1.msra.mxu0 0.0
    %1790 = vmatprep.subr.mxu0 0.0
    %1791 = vmatpush1.msra.mxu0 0.0
    %1792 = vmatprep.subr.mxu0 0.0
    %1793 = vmatpush1.msra.mxu0 0.0
    %1794 = vmatprep.subr.mxu0 0.0
    %1795 = vmatpush1.msra.mxu0 0.0
    %1796 = vmatprep.subr.mxu0 0.0
    %1797 = vmatpush1.msra.mxu0 0.0
    %1798 = vmatprep.subr.mxu0 0.0
    %1799 = vmatpush1.msra.mxu0 0.0
    %1800 = vmatprep.subr.mxu0 0.0
    %1801 = vmatpush1.msra.mxu0 0.0
    %1802 = vmatprep.subr.mxu0 0.0
    %1803 = vmatpush1.msra.mxu0 0.0
    %1804 = vmatprep.subr.mxu0 0.0
    %1805 = vmatpush1.msra.mxu0 0.0
    %1806 = vmatprep.subr.mxu0 0.0
    %1807 = vmatpush1.msra.mxu0 0.0
    %1808 = vmatprep.subr.mxu0 0.0
    %1809 = vmatpush1.msra.mxu0 0.0
    %1810 = vmatprep.subr.mxu0 0.0
    %1811 = vmatpush1.msra.mxu0 0.0
    %1812 = vmatprep.subr.mxu0 0.0
    %1813 = vmatpush1.msra.mxu0 0.0
    %1814 = vmatprep.subr.mxu0 0.0
    %1815 = vmatpush1.msra.mxu0 0.0
    %1816 = vmatprep.subr.mxu0 0.0
    %1817 = vmatpush1.msra.mxu0 0.0
    %1818 = vmatprep.subr.mxu0 0.0
    %1819 = vmatpush1.msra.mxu0 0.0
    %1820 = vmatprep.subr.mxu0 0.0
    %1821 = vmatpush1.msra.mxu0 0.0
    %1822 = vmatprep.subr.mxu0 0.0
    %1823 = vmatpush1.msra.mxu0 0.0
    %1824 = vmatprep.mubr.f32.mxu0 0.0
    %1825 = vmatmul.mubr.f32.gmra.mrb[0].mxu0 %v1755
    %v1826 = vpop.f32.mrb[0].mxu0
    %v1827 = vadd.f32 0.0, %v1826
    %v1828 = vpop.f32.mrb[0].mxu0
    %1829 = vmatprep.mubr.f32.mxu0 0.0
    %1830 = vmatmul.mubr.f32.gmra.mrb[0].mxu0 %v1758
    %v1831 = vpop.f32.mrb[0].mxu0
    %v1832 = vadd.f32 0.0, %v1831
    %v1833 = vpop.f32.mrb[0].mxu0
    %1834 = vdwg.mxu0
    %s1835 = scalar_lea.vmem %s7, 32
    %v1836 = vld [vmem:[%s1835] sm:$0xff]
    %v1837 = vld [vmem:[%s1835 + $0x8] sm:$0xff]
    %v1838 = vld [vmem:[%s1835 + $0x10] sm:$0xff]
    %v1839 = vld [vmem:[%s1835 + $0x18] sm:$0xff]
    %v1840 = vmul.f32 %v1827, 0.35355338
    %v1841 = vmul.f32 %v1832, 0.35355338
    %1844 = vrot.lane.b32.xlu0 %v1827, 96
    %v1845 = vpop.permute.xlu0 %1844
    %1846 = vrot.lane.b32.xlu0 %v1832, 96
    %v1847 = vpop.permute.xlu0 %1846
    %v1849 = vsel %vm314, %v1840, 0
    %v1852 = vsel %vm314, %v1841, 0
    %v1854 = vsel %vm314, %v1845, 0
    %v1856 = vsel %vm314, %v1847, 0
    %1858 = vmatprep.subr.mxu0 0.0
    %1859 = vmatpush1.xpose.msra.mxu0 %v1854
    %1860 = vmatprep.subr.mxu0 0.0
    %1861 = vmatpush1.xpose.msra.mxu0 %v1856
    %1862 = vmatprep.subr.mxu0 0.0
    %1863 = vmatpush1.xpose.msra.mxu0 0.0
    %1864 = vmatprep.subr.mxu0 0.0
    %1865 = vmatpush1.xpose.msra.mxu0 0.0
    %1866 = vmatprep.subr.mxu0 0.0
    %1867 = vmatpush1.xpose.msra.mxu0 0.0
    %1868 = vmatprep.subr.mxu0 0.0
    %1869 = vmatpush1.xpose.msra.mxu0 0.0
    %1870 = vmatprep.subr.mxu0 0.0
    %1871 = vmatpush1.xpose.msra.mxu0 0.0
    %1872 = vmatprep.subr.mxu0 0.0
    %1873 = vmatpush1.xpose.msra.mxu0 0.0
    %1874 = vmatprep.subr.mxu0 0.0
    %1875 = vmatpush1.xpose.msra.mxu0 0.0
    %1876 = vmatprep.subr.mxu0 0.0
    %1877 = vmatpush1.xpose.msra.mxu0 0.0
    %1878 = vmatprep.subr.mxu0 0.0
    %1879 = vmatpush1.xpose.msra.mxu0 0.0
    %1880 = vmatprep.subr.mxu0 0.0
    %1881 = vmatpush1.xpose.msra.mxu0 0.0
    %1882 = vmatprep.subr.mxu0 0.0
    %1883 = vmatpush1.xpose.msra.mxu0 0.0
    %1884 = vmatprep.subr.mxu0 0.0
    %1885 = vmatpush1.xpose.msra.mxu0 0.0
    %1886 = vmatprep.subr.mxu0 0.0
    %1887 = vmatpush1.xpose.msra.mxu0 0.0
    %1888 = vmatprep.subr.mxu0 0.0
    %1889 = vmatpush1.xpose.msra.mxu0 0.0
    %1890 = vmatprep.subr.mxu0 0.0
    %1891 = vmatpush1.xpose.msra.mxu0 0.0
    %1892 = vmatprep.subr.mxu0 0.0
    %1893 = vmatpush1.xpose.msra.mxu0 0.0
    %1894 = vmatprep.subr.mxu0 0.0
    %1895 = vmatpush1.xpose.msra.mxu0 0.0
    %1896 = vmatprep.subr.mxu0 0.0
    %1897 = vmatpush1.xpose.msra.mxu0 0.0
    %1898 = vmatprep.subr.mxu0 0.0
    %1899 = vmatpush1.xpose.msra.mxu0 0.0
    %1900 = vmatprep.subr.mxu0 0.0
    %1901 = vmatpush1.xpose.msra.mxu0 0.0
    %1902 = vmatprep.subr.mxu0 0.0
    %1903 = vmatpush1.xpose.msra.mxu0 0.0
    %1904 = vmatprep.subr.mxu0 0.0
    %1905 = vmatpush1.xpose.msra.mxu0 0.0
    %1906 = vmatprep.subr.mxu0 0.0
    %1907 = vmatpush1.xpose.msra.mxu0 0.0
    %1908 = vmatprep.subr.mxu0 0.0
    %1909 = vmatpush1.xpose.msra.mxu0 0.0
    %1910 = vmatprep.subr.mxu0 0.0
    %1911 = vmatpush1.xpose.msra.mxu0 0.0
    %1912 = vmatprep.subr.mxu0 0.0
    %1913 = vmatpush1.xpose.msra.mxu0 0.0
    %1914 = vmatprep.subr.mxu0 0.0
    %1915 = vmatpush1.xpose.msra.mxu0 0.0
    %1916 = vmatprep.subr.mxu0 0.0
    %1917 = vmatpush1.xpose.msra.mxu0 0.0
    %1918 = vmatprep.subr.mxu0 0.0
    %1919 = vmatpush1.xpose.msra.mxu0 0.0
    %1920 = vmatprep.subr.mxu0 0.0
    %1921 = vmatpush1.xpose.msra.mxu0 0.0
    %1922 = vmatprep.mubr.f32.mxu0 0.0
    %1923 = vmatmul.mubr.f32.gmra.mrb[0].mxu0 %v1849
    %v1924 = vpop.f32.mrb[0].mxu0
    %v1925 = vadd.f32 %v169, %v1924
    %v1926 = vpop.f32.mrb[0].mxu0
    %1927 = vmatprep.mubr.f32.mxu0 0.0
    %1928 = vmatmul.mubr.f32.gmra.mrb[0].mxu0 %v1852
    %v1929 = vpop.f32.mrb[0].mxu0
    %v1930 = vadd.f32 %v170, %v1929
    %v1931 = vpop.f32.mrb[0].mxu0
    %1932 = vdwg.mxu0
    %v1933 = vsel %vm400, %v1925, -inf
    %1934 = vmax.xlane.f32.xlu0 %v1933
    %v1935 = vpop.xlane.xlu0 %1934
    %v1936 = vsel %vm400, %v1930, -inf
    %1937 = vmax.xlane.f32.xlu0 %v1936
    %v1938 = vpop.xlane.xlu0 %1937
    %v1939 = vsub.f32 %v1925, %v1935
    %v1940 = vsub.f32 %v1930, %v1938
    %v1941 = vmul.f32 %v1939, 1.442695
    %v1942 = vpow.pop %v1941
    %v1943 = vmul.f32 %v1940, 1.442695
    %v1944 = vpow.pop %v1943
    %v1945 = vsel %vm400, %v1942, 0.0
    %1946 = vadd.xlane.f32.xlu0 %v1945
    %v1947 = vpop.xlane.xlu0 %1946
    %v1948 = vsel %vm400, %v1944, 0.0
    %1949 = vadd.xlane.f32.xlu0 %v1948
    %v1950 = vpop.xlane.xlu0 %1949
    %v1951 = vrcp.pop %v1947
    %v1952 = vrcp.pop %v1950
    %v1953 = vmul.f32 %v1942, %v1951
    %v1954 = vmul.f32 %v1944, %v1952
    %1955 = vrot.lane.b32.xlu0 %v1827, 64
    %v1956 = vpop.permute.xlu0 %1955
    %1957 = vrot.lane.b32.xlu0 %v1832, 64
    %v1958 = vpop.permute.xlu0 %1957
    %v1962 = vsel %vm400, %v1953, 0
    %v1965 = vsel %vm400, %v1954, 0
    %1967 = vmatprep.subr.mxu0 0.0
    %1968 = vmatpush1.msra.mxu0 %v1956
    %1969 = vmatprep.subr.mxu0 0.0
    %1970 = vmatpush1.msra.mxu0 %v1958
    %1971 = vmatprep.subr.mxu0 0.0
    %1972 = vmatpush1.msra.mxu0 0.0
    %1973 = vmatprep.subr.mxu0 0.0
    %1974 = vmatpush1.msra.mxu0 0.0
    %1975 = vmatprep.subr.mxu0 0.0
    %1976 = vmatpush1.msra.mxu0 0.0
    %1977 = vmatprep.subr.mxu0 0.0
    %1978 = vmatpush1.msra.mxu0 0.0
    %1979 = vmatprep.subr.mxu0 0.0
    %1980 = vmatpush1.msra.mxu0 0.0
    %1981 = vmatprep.subr.mxu0 0.0
    %1982 = vmatpush1.msra.mxu0 0.0
    %1983 = vmatprep.subr.mxu0 0.0
    %1984 = vmatpush1.msra.mxu0 0.0
    %1985 = vmatprep.subr.mxu0 0.0
    %1986 = vmatpush1.msra.mxu0 0.0
    %1987 = vmatprep.subr.mxu0 0.0
    %1988 = vmatpush1.msra.mxu0 0.0
    %1989 = vmatprep.subr.mxu0 0.0
    %1990 = vmatpush1.msra.mxu0 0.0
    %1991 = vmatprep.subr.mxu0 0.0
    %1992 = vmatpush1.msra.mxu0 0.0
    %1993 = vmatprep.subr.mxu0 0.0
    %1994 = vmatpush1.msra.mxu0 0.0
    %1995 = vmatprep.subr.mxu0 0.0
    %1996 = vmatpush1.msra.mxu0 0.0
    %1997 = vmatprep.subr.mxu0 0.0
    %1998 = vmatpush1.msra.mxu0 0.0
    %1999 = vmatprep.subr.mxu0 0.0
    %2000 = vmatpush1.msra.mxu0 0.0
    %2001 = vmatprep.subr.mxu0 0.0
    %2002 = vmatpush1.msra.mxu0 0.0
    %2003 = vmatprep.subr.mxu0 0.0
    %2004 = vmatpush1.msra.mxu0 0.0
    %2005 = vmatprep.subr.mxu0 0.0
    %2006 = vmatpush1.msra.mxu0 0.0
    %2007 = vmatprep.subr.mxu0 0.0
    %2008 = vmatpush1.msra.mxu0 0.0
    %2009 = vmatprep.subr.mxu0 0.0
    %2010 = vmatpush1.msra.mxu0 0.0
    %2011 = vmatprep.subr.mxu0 0.0
    %2012 = vmatpush1.msra.mxu0 0.0
    %2013 = vmatprep.subr.mxu0 0.0
    %2014 = vmatpush1.msra.mxu0 0.0
    %2015 = vmatprep.subr.mxu0 0.0
    %2016 = vmatpush1.msra.mxu0 0.0
    %2017 = vmatprep.subr.mxu0 0.0
    %2018 = vmatpush1.msra.mxu0 0.0
    %2019 = vmatprep.subr.mxu0 0.0
    %2020 = vmatpush1.msra.mxu0 0.0
    %2021 = vmatprep.subr.mxu0 0.0
    %2022 = vmatpush1.msra.mxu0 0.0
    %2023 = vmatprep.subr.mxu0 0.0
    %2024 = vmatpush1.msra.mxu0 0.0
    %2025 = vmatprep.subr.mxu0 0.0
    %2026 = vmatpush1.msra.mxu0 0.0
    %2027 = vmatprep.subr.mxu0 0.0
    %2028 = vmatpush1.msra.mxu0 0.0
    %2029 = vmatprep.subr.mxu0 0.0
    %2030 = vmatpush1.msra.mxu0 0.0
    %2031 = vmatprep.mubr.f32.mxu0 0.0
    %2032 = vmatmul.mubr.f32.gmra.mrb[0].mxu0 %v1962
    %v2033 = vpop.f32.mrb[0].mxu0
    %v2034 = vadd.f32 0.0, %v2033
    %v2035 = vpop.f32.mrb[0].mxu0
    %2036 = vmatprep.mubr.f32.mxu0 0.0
    %2037 = vmatmul.mubr.f32.gmra.mrb[0].mxu0 %v1965
    %v2038 = vpop.f32.mrb[0].mxu0
    %v2039 = vadd.f32 0.0, %v2038
    %v2040 = vpop.f32.mrb[0].mxu0
    %2041 = vdwg.mxu0
    %2042 = vrot.lane.b32.xlu0 %v1840, 120
    %v2043 = vpop.permute.xlu0 %2042
    %2044 = vrot.lane.b32.xlu0 %v1841, 120
    %v2045 = vpop.permute.xlu0 %2044
    %2046 = vrot.lane.b32.xlu0 %v1827, 88
    %v2047 = vpop.permute.xlu0 %2046
    %2048 = vrot.lane.b32.xlu0 %v1832, 88
    %v2049 = vpop.permute.xlu0 %2048
    %v2050 = vsel %vm314, %v2043, 0
    %v2052 = vsel %vm314, %v2045, 0
    %v2054 = vsel %vm314, %v2047, 0
    %v2056 = vsel %vm314, %v2049, 0
    %2058 = vmatprep.subr.mxu0 0.0
    %2059 = vmatpush1.xpose.msra.mxu0 %v2054
    %2060 = vmatprep.subr.mxu0 0.0
    %2061 = vmatpush1.xpose.msra.mxu0 %v2056
    %2062 = vmatprep.subr.mxu0 0.0
    %2063 = vmatpush1.xpose.msra.mxu0 0.0
    %2064 = vmatprep.subr.mxu0 0.0
    %2065 = vmatpush1.xpose.msra.mxu0 0.0
    %2066 = vmatprep.subr.mxu0 0.0
    %2067 = vmatpush1.xpose.msra.mxu0 0.0
    %2068 = vmatprep.subr.mxu0 0.0
    %2069 = vmatpush1.xpose.msra.mxu0 0.0
    %2070 = vmatprep.subr.mxu0 0.0
    %2071 = vmatpush1.xpose.msra.mxu0 0.0
    %2072 = vmatprep.subr.mxu0 0.0
    %2073 = vmatpush1.xpose.msra.mxu0 0.0
    %2074 = vmatprep.subr.mxu0 0.0
    %2075 = vmatpush1.xpose.msra.mxu0 0.0
    %2076 = vmatprep.subr.mxu0 0.0
    %2077 = vmatpush1.xpose.msra.mxu0 0.0
    %2078 = vmatprep.subr.mxu0 0.0
    %2079 = vmatpush1.xpose.msra.mxu0 0.0
    %2080 = vmatprep.subr.mxu0 0.0
    %2081 = vmatpush1.xpose.msra.mxu0 0.0
    %2082 = vmatprep.subr.mxu0 0.0
    %2083 = vmatpush1.xpose.msra.mxu0 0.0
    %2084 = vmatprep.subr.mxu0 0.0
    %2085 = vmatpush1.xpose.msra.mxu0 0.0
    %2086 = vmatprep.subr.mxu0 0.0
    %2087 = vmatpush1.xpose.msra.mxu0 0.0
    %2088 = vmatprep.subr.mxu0 0.0
    %2089 = vmatpush1.xpose.msra.mxu0 0.0
    %2090 = vmatprep.subr.mxu0 0.0
    %2091 = vmatpush1.xpose.msra.mxu0 0.0
    %2092 = vmatprep.subr.mxu0 0.0
    %2093 = vmatpush1.xpose.msra.mxu0 0.0
    %2094 = vmatprep.subr.mxu0 0.0
    %2095 = vmatpush1.xpose.msra.mxu0 0.0
    %2096 = vmatprep.subr.mxu0 0.0
    %2097 = vmatpush1.xpose.msra.mxu0 0.0
    %2098 = vmatprep.subr.mxu0 0.0
    %2099 = vmatpush1.xpose.msra.mxu0 0.0
    %2100 = vmatprep.subr.mxu0 0.0
    %2101 = vmatpush1.xpose.msra.mxu0 0.0
    %2102 = vmatprep.subr.mxu0 0.0
    %2103 = vmatpush1.xpose.msra.mxu0 0.0
    %2104 = vmatprep.subr.mxu0 0.0
    %2105 = vmatpush1.xpose.msra.mxu0 0.0
    %2106 = vmatprep.subr.mxu0 0.0
    %2107 = vmatpush1.xpose.msra.mxu0 0.0
    %2108 = vmatprep.subr.mxu0 0.0
    %2109 = vmatpush1.xpose.msra.mxu0 0.0
    %2110 = vmatprep.subr.mxu0 0.0
    %2111 = vmatpush1.xpose.msra.mxu0 0.0
    %2112 = vmatprep.subr.mxu0 0.0
    %2113 = vmatpush1.xpose.msra.mxu0 0.0
    %2114 = vmatprep.subr.mxu0 0.0
    %2115 = vmatpush1.xpose.msra.mxu0 0.0
    %2116 = vmatprep.subr.mxu0 0.0
    %2117 = vmatpush1.xpose.msra.mxu0 0.0
    %2118 = vmatprep.subr.mxu0 0.0
    %2119 = vmatpush1.xpose.msra.mxu0 0.0
    %2120 = vmatprep.subr.mxu0 0.0
    %2121 = vmatpush1.xpose.msra.mxu0 0.0
    %2122 = vmatprep.mubr.f32.mxu0 0.0
    %2123 = vmatmul.mubr.f32.gmra.mrb[0].mxu0 %v2050
    %v2124 = vpop.f32.mrb[0].mxu0
    %v2125 = vadd.f32 %v169, %v2124
    %v2126 = vpop.f32.mrb[0].mxu0
    %2127 = vmatprep.mubr.f32.mxu0 0.0
    %2128 = vmatmul.mubr.f32.gmra.mrb[0].mxu0 %v2052
    %v2129 = vpop.f32.mrb[0].mxu0
    %v2130 = vadd.f32 %v170, %v2129
    %v2131 = vpop.f32.mrb[0].mxu0
    %2132 = vdwg.mxu0
    %v2133 = vsel %vm400, %v2125, -inf
    %2134 = vmax.xlane.f32.xlu0 %v2133
    %v2135 = vpop.xlane.xlu0 %2134
    %v2136 = vsel %vm400, %v2130, -inf
    %2137 = vmax.xlane.f32.xlu0 %v2136
    %v2138 = vpop.xlane.xlu0 %2137
    %v2139 = vsub.f32 %v2125, %v2135
    %v2140 = vsub.f32 %v2130, %v2138
    %v2141 = vmul.f32 %v2139, 1.442695
    %v2142 = vpow.pop %v2141
    %v2143 = vmul.f32 %v2140, 1.442695
    %v2144 = vpow.pop %v2143
    %v2145 = vsel %vm400, %v2142, 0.0
    %2146 = vadd.xlane.f32.xlu0 %v2145
    %v2147 = vpop.xlane.xlu0 %2146
    %v2148 = vsel %vm400, %v2144, 0.0
    %2149 = vadd.xlane.f32.xlu0 %v2148
    %v2150 = vpop.xlane.xlu0 %2149
    %v2151 = vrcp.pop %v2147
    %v2152 = vrcp.pop %v2150
    %v2153 = vmul.f32 %v2142, %v2151
    %v2154 = vmul.f32 %v2144, %v2152
    %2155 = vrot.lane.b32.xlu0 %v1827, 56
    %v2156 = vpop.permute.xlu0 %2155
    %2157 = vrot.lane.b32.xlu0 %v1832, 56
    %v2158 = vpop.permute.xlu0 %2157
    %v2162 = vsel %vm400, %v2153, 0
    %v2165 = vsel %vm400, %v2154, 0
    %2167 = vmatprep.subr.mxu0 0.0
    %2168 = vmatpush1.msra.mxu0 %v2156
    %2169 = vmatprep.subr.mxu0 0.0
    %2170 = vmatpush1.msra.mxu0 %v2158
    %2171 = vmatprep.subr.mxu0 0.0
    %2172 = vmatpush1.msra.mxu0 0.0
    %2173 = vmatprep.subr.mxu0 0.0
    %2174 = vmatpush1.msra.mxu0 0.0
    %2175 = vmatprep.subr.mxu0 0.0
    %2176 = vmatpush1.msra.mxu0 0.0
    %2177 = vmatprep.subr.mxu0 0.0
    %2178 = vmatpush1.msra.mxu0 0.0
    %2179 = vmatprep.subr.mxu0 0.0
    %2180 = vmatpush1.msra.mxu0 0.0
    %2181 = vmatprep.subr.mxu0 0.0
    %2182 = vmatpush1.msra.mxu0 0.0
    %2183 = vmatprep.subr.mxu0 0.0
    %2184 = vmatpush1.msra.mxu0 0.0
    %2185 = vmatprep.subr.mxu0 0.0
    %2186 = vmatpush1.msra.mxu0 0.0
    %2187 = vmatprep.subr.mxu0 0.0
    %2188 = vmatpush1.msra.mxu0 0.0
    %2189 = vmatprep.subr.mxu0 0.0
    %2190 = vmatpush1.msra.mxu0 0.0
    %2191 = vmatprep.subr.mxu0 0.0
    %2192 = vmatpush1.msra.mxu0 0.0
    %2193 = vmatprep.subr.mxu0 0.0
    %2194 = vmatpush1.msra.mxu0 0.0
    %2195 = vmatprep.subr.mxu0 0.0
    %2196 = vmatpush1.msra.mxu0 0.0
    %2197 = vmatprep.subr.mxu0 0.0
    %2198 = vmatpush1.msra.mxu0 0.0
    %2199 = vmatprep.subr.mxu0 0.0
    %2200 = vmatpush1.msra.mxu0 0.0
    %2201 = vmatprep.subr.mxu0 0.0
    %2202 = vmatpush1.msra.mxu0 0.0
    %2203 = vmatprep.subr.mxu0 0.0
    %2204 = vmatpush1.msra.mxu0 0.0
    %2205 = vmatprep.subr.mxu0 0.0
    %2206 = vmatpush1.msra.mxu0 0.0
    %2207 = vmatprep.subr.mxu0 0.0
    %2208 = vmatpush1.msra.mxu0 0.0
    %2209 = vmatprep.subr.mxu0 0.0
    %2210 = vmatpush1.msra.mxu0 0.0
    %2211 = vmatprep.subr.mxu0 0.0
    %2212 = vmatpush1.msra.mxu0 0.0
    %2213 = vmatprep.subr.mxu0 0.0
    %2214 = vmatpush1.msra.mxu0 0.0
    %2215 = vmatprep.subr.mxu0 0.0
    %2216 = vmatpush1.msra.mxu0 0.0
    %2217 = vmatprep.subr.mxu0 0.0
    %2218 = vmatpush1.msra.mxu0 0.0
    %2219 = vmatprep.subr.mxu0 0.0
    %2220 = vmatpush1.msra.mxu0 0.0
    %2221 = vmatprep.subr.mxu0 0.0
    %2222 = vmatpush1.msra.mxu0 0.0
    %2223 = vmatprep.subr.mxu0 0.0
    %2224 = vmatpush1.msra.mxu0 0.0
    %2225 = vmatprep.subr.mxu0 0.0
    %2226 = vmatpush1.msra.mxu0 0.0
    %2227 = vmatprep.subr.mxu0 0.0
    %2228 = vmatpush1.msra.mxu0 0.0
    %2229 = vmatprep.subr.mxu0 0.0
    %2230 = vmatpush1.msra.mxu0 0.0
    %2231 = vmatprep.mubr.f32.mxu0 0.0
    %2232 = vmatmul.mubr.f32.gmra.mrb[0].mxu0 %v2162
    %v2233 = vpop.f32.mrb[0].mxu0
    %v2234 = vadd.f32 0.0, %v2233
    %v2235 = vpop.f32.mrb[0].mxu0
    %2236 = vmatprep.mubr.f32.mxu0 0.0
    %2237 = vmatmul.mubr.f32.gmra.mrb[0].mxu0 %v2165
    %v2238 = vpop.f32.mrb[0].mxu0
    %v2239 = vadd.f32 0.0, %v2238
    %v2240 = vpop.f32.mrb[0].mxu0
    %2241 = vdwg.mxu0
    %v2243 = vsel %vm314, %v2234, 0
    %v2246 = vsel %vm314, %v2239, 0
    %2248 = vmatprep.subr.mxu0 0.0
    %2249 = vmatpush1.msra.mxu0 %v1837
    %2250 = vmatprep.subr.mxu0 0.0
    %2251 = vmatpush1.msra.mxu0 0.0
    %2252 = vmatprep.subr.mxu0 0.0
    %2253 = vmatpush1.msra.mxu0 0.0
    %2254 = vmatprep.subr.mxu0 0.0
    %2255 = vmatpush1.msra.mxu0 0.0
    %2256 = vmatprep.subr.mxu0 0.0
    %2257 = vmatpush1.msra.mxu0 0.0
    %2258 = vmatprep.subr.mxu0 0.0
    %2259 = vmatpush1.msra.mxu0 0.0
    %2260 = vmatprep.subr.mxu0 0.0
    %2261 = vmatpush1.msra.mxu0 0.0
    %2262 = vmatprep.subr.mxu0 0.0
    %2263 = vmatpush1.msra.mxu0 0.0
    %2264 = vmatprep.subr.mxu0 0.0
    %2265 = vmatpush1.msra.mxu0 0.0
    %2266 = vmatprep.subr.mxu0 0.0
    %2267 = vmatpush1.msra.mxu0 0.0
    %2268 = vmatprep.subr.mxu0 0.0
    %2269 = vmatpush1.msra.mxu0 0.0
    %2270 = vmatprep.subr.mxu0 0.0
    %2271 = vmatpush1.msra.mxu0 0.0
    %2272 = vmatprep.subr.mxu0 0.0
    %2273 = vmatpush1.msra.mxu0 0.0
    %2274 = vmatprep.subr.mxu0 0.0
    %2275 = vmatpush1.msra.mxu0 0.0
    %2276 = vmatprep.subr.mxu0 0.0
    %2277 = vmatpush1.msra.mxu0 0.0
    %2278 = vmatprep.subr.mxu0 0.0
    %2279 = vmatpush1.msra.mxu0 0.0
    %2280 = vmatprep.subr.mxu0 0.0
    %2281 = vmatpush1.msra.mxu0 0.0
    %2282 = vmatprep.subr.mxu0 0.0
    %2283 = vmatpush1.msra.mxu0 0.0
    %2284 = vmatprep.subr.mxu0 0.0
    %2285 = vmatpush1.msra.mxu0 0.0
    %2286 = vmatprep.subr.mxu0 0.0
    %2287 = vmatpush1.msra.mxu0 0.0
    %2288 = vmatprep.subr.mxu0 0.0
    %2289 = vmatpush1.msra.mxu0 0.0
    %2290 = vmatprep.subr.mxu0 0.0
    %2291 = vmatpush1.msra.mxu0 0.0
    %2292 = vmatprep.subr.mxu0 0.0
    %2293 = vmatpush1.msra.mxu0 0.0
    %2294 = vmatprep.subr.mxu0 0.0
    %2295 = vmatpush1.msra.mxu0 0.0
    %2296 = vmatprep.subr.mxu0 0.0
    %2297 = vmatpush1.msra.mxu0 0.0
    %2298 = vmatprep.subr.mxu0 0.0
    %2299 = vmatpush1.msra.mxu0 0.0
    %2300 = vmatprep.subr.mxu0 0.0
    %2301 = vmatpush1.msra.mxu0 0.0
    %2302 = vmatprep.subr.mxu0 0.0
    %2303 = vmatpush1.msra.mxu0 0.0
    %2304 = vmatprep.subr.mxu0 0.0
    %2305 = vmatpush1.msra.mxu0 0.0
    %2306 = vmatprep.subr.mxu0 0.0
    %2307 = vmatpush1.msra.mxu0 0.0
    %2308 = vmatprep.subr.mxu0 0.0
    %2309 = vmatpush1.msra.mxu0 0.0
    %2310 = vmatprep.subr.mxu0 0.0
    %2311 = vmatpush1.msra.mxu0 0.0
    %2312 = vmatprep.mubr.f32.mxu0 0.0
    %2313 = vmatmul.mubr.f32.gmra.mrb[0].mxu0 %v2243
    %v2314 = vpop.f32.mrb[0].mxu0
    %v2315 = vadd.f32 0.0, %v2314
    %v2316 = vpop.f32.mrb[0].mxu0
    %2317 = vmatprep.mubr.f32.mxu0 0.0
    %2318 = vmatmul.mubr.f32.gmra.mrb[0].mxu0 %v2246
    %v2319 = vpop.f32.mrb[0].mxu0
    %v2320 = vadd.f32 0.0, %v2319
    %v2321 = vpop.f32.mrb[0].mxu0
    %2322 = vdwg.mxu0
    %v2324 = vsel %vm314, %v2034, 0
    %v2327 = vsel %vm314, %v2039, 0
    %2329 = vmatprep.subr.mxu0 0.0
    %2330 = vmatpush1.msra.mxu0 %v1836
    %2331 = vmatprep.subr.mxu0 0.0
    %2332 = vmatpush1.msra.mxu0 0.0
    %2333 = vmatprep.subr.mxu0 0.0
    %2334 = vmatpush1.msra.mxu0 0.0
    %2335 = vmatprep.subr.mxu0 0.0
    %2336 = vmatpush1.msra.mxu0 0.0
    %2337 = vmatprep.subr.mxu0 0.0
    %2338 = vmatpush1.msra.mxu0 0.0
    %2339 = vmatprep.subr.mxu0 0.0
    %2340 = vmatpush1.msra.mxu0 0.0
    %2341 = vmatprep.subr.mxu0 0.0
    %2342 = vmatpush1.msra.mxu0 0.0
    %2343 = vmatprep.subr.mxu0 0.0
    %2344 = vmatpush1.msra.mxu0 0.0
    %2345 = vmatprep.subr.mxu0 0.0
    %2346 = vmatpush1.msra.mxu0 0.0
    %2347 = vmatprep.subr.mxu0 0.0
    %2348 = vmatpush1.msra.mxu0 0.0
    %2349 = vmatprep.subr.mxu0 0.0
    %2350 = vmatpush1.msra.mxu0 0.0
    %2351 = vmatprep.subr.mxu0 0.0
    %2352 = vmatpush1.msra.mxu0 0.0
    %2353 = vmatprep.subr.mxu0 0.0
    %2354 = vmatpush1.msra.mxu0 0.0
    %2355 = vmatprep.subr.mxu0 0.0
    %2356 = vmatpush1.msra.mxu0 0.0
    %2357 = vmatprep.subr.mxu0 0.0
    %2358 = vmatpush1.msra.mxu0 0.0
    %2359 = vmatprep.subr.mxu0 0.0
    %2360 = vmatpush1.msra.mxu0 0.0
    %2361 = vmatprep.subr.mxu0 0.0
    %2362 = vmatpush1.msra.mxu0 0.0
    %2363 = vmatprep.subr.mxu0 0.0
    %2364 = vmatpush1.msra.mxu0 0.0
    %2365 = vmatprep.subr.mxu0 0.0
    %2366 = vmatpush1.msra.mxu0 0.0
    %2367 = vmatprep.subr.mxu0 0.0
    %2368 = vmatpush1.msra.mxu0 0.0
    %2369 = vmatprep.subr.mxu0 0.0
    %2370 = vmatpush1.msra.mxu0 0.0
    %2371 = vmatprep.subr.mxu0 0.0
    %2372 = vmatpush1.msra.mxu0 0.0
    %2373 = vmatprep.subr.mxu0 0.0
    %2374 = vmatpush1.msra.mxu0 0.0
    %2375 = vmatprep.subr.mxu0 0.0
    %2376 = vmatpush1.msra.mxu0 0.0
    %2377 = vmatprep.subr.mxu0 0.0
    %2378 = vmatpush1.msra.mxu0 0.0
    %2379 = vmatprep.subr.mxu0 0.0
    %2380 = vmatpush1.msra.mxu0 0.0
    %2381 = vmatprep.subr.mxu0 0.0
    %2382 = vmatpush1.msra.mxu0 0.0
    %2383 = vmatprep.subr.mxu0 0.0
    %2384 = vmatpush1.msra.mxu0 0.0
    %2385 = vmatprep.subr.mxu0 0.0
    %2386 = vmatpush1.msra.mxu0 0.0
    %2387 = vmatprep.subr.mxu0 0.0
    %2388 = vmatpush1.msra.mxu0 0.0
    %2389 = vmatprep.subr.mxu0 0.0
    %2390 = vmatpush1.msra.mxu0 0.0
    %2391 = vmatprep.subr.mxu0 0.0
    %2392 = vmatpush1.msra.mxu0 0.0
    %2393 = vmatprep.mubr.f32.mxu0 0.0
    %2394 = vmatmul.mubr.f32.gmra.mrb[0].mxu0 %v2324
    %v2395 = vpop.f32.mrb[0].mxu0
    %v2396 = vadd.f32 %v2315, %v2395
    %v2397 = vpop.f32.mrb[0].mxu0
    %2398 = vmatprep.mubr.f32.mxu0 0.0
    %2399 = vmatmul.mubr.f32.gmra.mrb[0].mxu0 %v2327
    %v2400 = vpop.f32.mrb[0].mxu0
    %v2401 = vadd.f32 %v2320, %v2400
    %v2402 = vpop.f32.mrb[0].mxu0
    %2403 = vdwg.mxu0
    %2404 = vrot.lane.b32.xlu0 %v1840, 112
    %v2405 = vpop.permute.xlu0 %2404
    %2406 = vrot.lane.b32.xlu0 %v1841, 112
    %v2407 = vpop.permute.xlu0 %2406
    %2408 = vrot.lane.b32.xlu0 %v1827, 80
    %v2409 = vpop.permute.xlu0 %2408
    %2410 = vrot.lane.b32.xlu0 %v1832, 80
    %v2411 = vpop.permute.xlu0 %2410
    %v2412 = vsel %vm314, %v2405, 0
    %v2414 = vsel %vm314, %v2407, 0
    %v2416 = vsel %vm314, %v2409, 0
    %v2418 = vsel %vm314, %v2411, 0
    %2420 = vmatprep.subr.mxu0 0.0
    %2421 = vmatpush1.xpose.msra.mxu0 %v2416
    %2422 = vmatprep.subr.mxu0 0.0
    %2423 = vmatpush1.xpose.msra.mxu0 %v2418
    %2424 = vmatprep.subr.mxu0 0.0
    %2425 = vmatpush1.xpose.msra.mxu0 0.0
    %2426 = vmatprep.subr.mxu0 0.0
    %2427 = vmatpush1.xpose.msra.mxu0 0.0
    %2428 = vmatprep.subr.mxu0 0.0
    %2429 = vmatpush1.xpose.msra.mxu0 0.0
    %2430 = vmatprep.subr.mxu0 0.0
    %2431 = vmatpush1.xpose.msra.mxu0 0.0
    %2432 = vmatprep.subr.mxu0 0.0
    %2433 = vmatpush1.xpose.msra.mxu0 0.0
    %2434 = vmatprep.subr.mxu0 0.0
    %2435 = vmatpush1.xpose.msra.mxu0 0.0
    %2436 = vmatprep.subr.mxu0 0.0
    %2437 = vmatpush1.xpose.msra.mxu0 0.0
    %2438 = vmatprep.subr.mxu0 0.0
    %2439 = vmatpush1.xpose.msra.mxu0 0.0
    %2440 = vmatprep.subr.mxu0 0.0
    %2441 = vmatpush1.xpose.msra.mxu0 0.0
    %2442 = vmatprep.subr.mxu0 0.0
    %2443 = vmatpush1.xpose.msra.mxu0 0.0
    %2444 = vmatprep.subr.mxu0 0.0
    %2445 = vmatpush1.xpose.msra.mxu0 0.0
    %2446 = vmatprep.subr.mxu0 0.0
    %2447 = vmatpush1.xpose.msra.mxu0 0.0
    %2448 = vmatprep.subr.mxu0 0.0
    %2449 = vmatpush1.xpose.msra.mxu0 0.0
    %2450 = vmatprep.subr.mxu0 0.0
    %2451 = vmatpush1.xpose.msra.mxu0 0.0
    %2452 = vmatprep.subr.mxu0 0.0
    %2453 = vmatpush1.xpose.msra.mxu0 0.0
    %2454 = vmatprep.subr.mxu0 0.0
    %2455 = vmatpush1.xpose.msra.mxu0 0.0
    %2456 = vmatprep.subr.mxu0 0.0
    %2457 = vmatpush1.xpose.msra.mxu0 0.0
    %2458 = vmatprep.subr.mxu0 0.0
    %2459 = vmatpush1.xpose.msra.mxu0 0.0
    %2460 = vmatprep.subr.mxu0 0.0
    %2461 = vmatpush1.xpose.msra.mxu0 0.0
    %2462 = vmatprep.subr.mxu0 0.0
    %2463 = vmatpush1.xpose.msra.mxu0 0.0
    %2464 = vmatprep.subr.mxu0 0.0
    %2465 = vmatpush1.xpose.msra.mxu0 0.0
    %2466 = vmatprep.subr.mxu0 0.0
    %2467 = vmatpush1.xpose.msra.mxu0 0.0
    %2468 = vmatprep.subr.mxu0 0.0
    %2469 = vmatpush1.xpose.msra.mxu0 0.0
    %2470 = vmatprep.subr.mxu0 0.0
    %2471 = vmatpush1.xpose.msra.mxu0 0.0
    %2472 = vmatprep.subr.mxu0 0.0
    %2473 = vmatpush1.xpose.msra.mxu0 0.0
    %2474 = vmatprep.subr.mxu0 0.0
    %2475 = vmatpush1.xpose.msra.mxu0 0.0
    %2476 = vmatprep.subr.mxu0 0.0
    %2477 = vmatpush1.xpose.msra.mxu0 0.0
    %2478 = vmatprep.subr.mxu0 0.0
    %2479 = vmatpush1.xpose.msra.mxu0 0.0
    %2480 = vmatprep.subr.mxu0 0.0
    %2481 = vmatpush1.xpose.msra.mxu0 0.0
    %2482 = vmatprep.subr.mxu0 0.0
    %2483 = vmatpush1.xpose.msra.mxu0 0.0
    %2484 = vmatprep.mubr.f32.mxu0 0.0
    %2485 = vmatmul.mubr.f32.gmra.mrb[0].mxu0 %v2412
    %v2486 = vpop.f32.mrb[0].mxu0
    %v2487 = vadd.f32 %v169, %v2486
    %v2488 = vpop.f32.mrb[0].mxu0
    %2489 = vmatprep.mubr.f32.mxu0 0.0
    %2490 = vmatmul.mubr.f32.gmra.mrb[0].mxu0 %v2414
    %v2491 = vpop.f32.mrb[0].mxu0
    %v2492 = vadd.f32 %v170, %v2491
    %v2493 = vpop.f32.mrb[0].mxu0
    %2494 = vdwg.mxu0
    %v2495 = vsel %vm400, %v2487, -inf
    %2496 = vmax.xlane.f32.xlu0 %v2495
    %v2497 = vpop.xlane.xlu0 %2496
    %v2498 = vsel %vm400, %v2492, -inf
    %2499 = vmax.xlane.f32.xlu0 %v2498
    %v2500 = vpop.xlane.xlu0 %2499
    %v2501 = vsub.f32 %v2487, %v2497
    %v2502 = vsub.f32 %v2492, %v2500
    %v2503 = vmul.f32 %v2501, 1.442695
    %v2504 = vpow.pop %v2503
    %v2505 = vmul.f32 %v2502, 1.442695
    %v2506 = vpow.pop %v2505
    %v2507 = vsel %vm400, %v2504, 0.0
    %2508 = vadd.xlane.f32.xlu0 %v2507
    %v2509 = vpop.xlane.xlu0 %2508
    %v2510 = vsel %vm400, %v2506, 0.0
    %2511 = vadd.xlane.f32.xlu0 %v2510
    %v2512 = vpop.xlane.xlu0 %2511
    %v2513 = vrcp.pop %v2509
    %v2514 = vrcp.pop %v2512
    %v2515 = vmul.f32 %v2504, %v2513
    %v2516 = vmul.f32 %v2506, %v2514
    %2517 = vrot.lane.b32.xlu0 %v1827, 48
    %v2518 = vpop.permute.xlu0 %2517
    %2519 = vrot.lane.b32.xlu0 %v1832, 48
    %v2520 = vpop.permute.xlu0 %2519
    %v2524 = vsel %vm400, %v2515, 0
    %v2527 = vsel %vm400, %v2516, 0
    %2529 = vmatprep.subr.mxu0 0.0
    %2530 = vmatpush1.msra.mxu0 %v2518
    %2531 = vmatprep.subr.mxu0 0.0
    %2532 = vmatpush1.msra.mxu0 %v2520
    %2533 = vmatprep.subr.mxu0 0.0
    %2534 = vmatpush1.msra.mxu0 0.0
    %2535 = vmatprep.subr.mxu0 0.0
    %2536 = vmatpush1.msra.mxu0 0.0
    %2537 = vmatprep.subr.mxu0 0.0
    %2538 = vmatpush1.msra.mxu0 0.0
    %2539 = vmatprep.subr.mxu0 0.0
    %2540 = vmatpush1.msra.mxu0 0.0
    %2541 = vmatprep.subr.mxu0 0.0
    %2542 = vmatpush1.msra.mxu0 0.0
    %2543 = vmatprep.subr.mxu0 0.0
    %2544 = vmatpush1.msra.mxu0 0.0
    %2545 = vmatprep.subr.mxu0 0.0
    %2546 = vmatpush1.msra.mxu0 0.0
    %2547 = vmatprep.subr.mxu0 0.0
    %2548 = vmatpush1.msra.mxu0 0.0
    %2549 = vmatprep.subr.mxu0 0.0
    %2550 = vmatpush1.msra.mxu0 0.0
    %2551 = vmatprep.subr.mxu0 0.0
    %2552 = vmatpush1.msra.mxu0 0.0
    %2553 = vmatprep.subr.mxu0 0.0
    %2554 = vmatpush1.msra.mxu0 0.0
    %2555 = vmatprep.subr.mxu0 0.0
    %2556 = vmatpush1.msra.mxu0 0.0
    %2557 = vmatprep.subr.mxu0 0.0
    %2558 = vmatpush1.msra.mxu0 0.0
    %2559 = vmatprep.subr.mxu0 0.0
    %2560 = vmatpush1.msra.mxu0 0.0
    %2561 = vmatprep.subr.mxu0 0.0
    %2562 = vmatpush1.msra.mxu0 0.0
    %2563 = vmatprep.subr.mxu0 0.0
    %2564 = vmatpush1.msra.mxu0 0.0
    %2565 = vmatprep.subr.mxu0 0.0
    %2566 = vmatpush1.msra.mxu0 0.0
    %2567 = vmatprep.subr.mxu0 0.0
    %2568 = vmatpush1.msra.mxu0 0.0
    %2569 = vmatprep.subr.mxu0 0.0
    %2570 = vmatpush1.msra.mxu0 0.0
    %2571 = vmatprep.subr.mxu0 0.0
    %2572 = vmatpush1.msra.mxu0 0.0
    %2573 = vmatprep.subr.mxu0 0.0
    %2574 = vmatpush1.msra.mxu0 0.0
    %2575 = vmatprep.subr.mxu0 0.0
    %2576 = vmatpush1.msra.mxu0 0.0
    %2577 = vmatprep.subr.mxu0 0.0
    %2578 = vmatpush1.msra.mxu0 0.0
    %2579 = vmatprep.subr.mxu0 0.0
    %2580 = vmatpush1.msra.mxu0 0.0
    %2581 = vmatprep.subr.mxu0 0.0
    %2582 = vmatpush1.msra.mxu0 0.0
    %2583 = vmatprep.subr.mxu0 0.0
    %2584 = vmatpush1.msra.mxu0 0.0
    %2585 = vmatprep.subr.mxu0 0.0
    %2586 = vmatpush1.msra.mxu0 0.0
    %2587 = vmatprep.subr.mxu0 0.0
    %2588 = vmatpush1.msra.mxu0 0.0
    %2589 = vmatprep.subr.mxu0 0.0
    %2590 = vmatpush1.msra.mxu0 0.0
    %2591 = vmatprep.subr.mxu0 0.0
    %2592 = vmatpush1.msra.mxu0 0.0
    %2593 = vmatprep.mubr.f32.mxu0 0.0
    %2594 = vmatmul.mubr.f32.gmra.mrb[0].mxu0 %v2524
    %v2595 = vpop.f32.mrb[0].mxu0
    %v2596 = vadd.f32 0.0, %v2595
    %v2597 = vpop.f32.mrb[0].mxu0
    %2598 = vmatprep.mubr.f32.mxu0 0.0
    %2599 = vmatmul.mubr.f32.gmra.mrb[0].mxu0 %v2527
    %v2600 = vpop.f32.mrb[0].mxu0
    %v2601 = vadd.f32 0.0, %v2600
    %v2602 = vpop.f32.mrb[0].mxu0
    %2603 = vdwg.mxu0
    %v2605 = vsel %vm314, %v2596, 0
    %v2608 = vsel %vm314, %v2601, 0
    %2610 = vmatprep.subr.mxu0 0.0
    %2611 = vmatpush1.msra.mxu0 %v1838
    %2612 = vmatprep.subr.mxu0 0.0
    %2613 = vmatpush1.msra.mxu0 0.0
    %2614 = vmatprep.subr.mxu0 0.0
    %2615 = vmatpush1.msra.mxu0 0.0
    %2616 = vmatprep.subr.mxu0 0.0
    %2617 = vmatpush1.msra.mxu0 0.0
    %2618 = vmatprep.subr.mxu0 0.0
    %2619 = vmatpush1.msra.mxu0 0.0
    %2620 = vmatprep.subr.mxu0 0.0
    %2621 = vmatpush1.msra.mxu0 0.0
    %2622 = vmatprep.subr.mxu0 0.0
    %2623 = vmatpush1.msra.mxu0 0.0
    %2624 = vmatprep.subr.mxu0 0.0
    %2625 = vmatpush1.msra.mxu0 0.0
    %2626 = vmatprep.subr.mxu0 0.0
    %2627 = vmatpush1.msra.mxu0 0.0
    %2628 = vmatprep.subr.mxu0 0.0
    %2629 = vmatpush1.msra.mxu0 0.0
    %2630 = vmatprep.subr.mxu0 0.0
    %2631 = vmatpush1.msra.mxu0 0.0
    %2632 = vmatprep.subr.mxu0 0.0
    %2633 = vmatpush1.msra.mxu0 0.0
    %2634 = vmatprep.subr.mxu0 0.0
    %2635 = vmatpush1.msra.mxu0 0.0
    %2636 = vmatprep.subr.mxu0 0.0
    %2637 = vmatpush1.msra.mxu0 0.0
    %2638 = vmatprep.subr.mxu0 0.0
    %2639 = vmatpush1.msra.mxu0 0.0
    %2640 = vmatprep.subr.mxu0 0.0
    %2641 = vmatpush1.msra.mxu0 0.0
    %2642 = vmatprep.subr.mxu0 0.0
    %2643 = vmatpush1.msra.mxu0 0.0
    %2644 = vmatprep.subr.mxu0 0.0
    %2645 = vmatpush1.msra.mxu0 0.0
    %2646 = vmatprep.subr.mxu0 0.0
    %2647 = vmatpush1.msra.mxu0 0.0
    %2648 = vmatprep.subr.mxu0 0.0
    %2649 = vmatpush1.msra.mxu0 0.0
    %2650 = vmatprep.subr.mxu0 0.0
    %2651 = vmatpush1.msra.mxu0 0.0
    %2652 = vmatprep.subr.mxu0 0.0
    %2653 = vmatpush1.msra.mxu0 0.0
    %2654 = vmatprep.subr.mxu0 0.0
    %2655 = vmatpush1.msra.mxu0 0.0
    %2656 = vmatprep.subr.mxu0 0.0
    %2657 = vmatpush1.msra.mxu0 0.0
    %2658 = vmatprep.subr.mxu0 0.0
    %2659 = vmatpush1.msra.mxu0 0.0
    %2660 = vmatprep.subr.mxu0 0.0
    %2661 = vmatpush1.msra.mxu0 0.0
    %2662 = vmatprep.subr.mxu0 0.0
    %2663 = vmatpush1.msra.mxu0 0.0
    %2664 = vmatprep.subr.mxu0 0.0
    %2665 = vmatpush1.msra.mxu0 0.0
    %2666 = vmatprep.subr.mxu0 0.0
    %2667 = vmatpush1.msra.mxu0 0.0
    %2668 = vmatprep.subr.mxu0 0.0
    %2669 = vmatpush1.msra.mxu0 0.0
    %2670 = vmatprep.subr.mxu0 0.0
    %2671 = vmatpush1.msra.mxu0 0.0
    %2672 = vmatprep.subr.mxu0 0.0
    %2673 = vmatpush1.msra.mxu0 0.0
    %2674 = vmatprep.mubr.f32.mxu0 0.0
    %2675 = vmatmul.mubr.f32.gmra.mrb[0].mxu0 %v2605
    %v2676 = vpop.f32.mrb[0].mxu0
    %v2677 = vadd.f32 0.0, %v2676
    %v2678 = vpop.f32.mrb[0].mxu0
    %2679 = vmatprep.mubr.f32.mxu0 0.0
    %2680 = vmatmul.mubr.f32.gmra.mrb[0].mxu0 %v2608
    %v2681 = vpop.f32.mrb[0].mxu0
    %v2682 = vadd.f32 0.0, %v2681
    %v2683 = vpop.f32.mrb[0].mxu0
    %2684 = vdwg.mxu0
    %v2685 = vadd.f32 %v2396, %v2677
    %v2686 = vadd.f32 %v2401, %v2682
    %2687 = vrot.lane.b32.xlu0 %v1840, 104
    %v2688 = vpop.permute.xlu0 %2687
    %2689 = vrot.lane.b32.xlu0 %v1841, 104
    %v2690 = vpop.permute.xlu0 %2689
    %2691 = vrot.lane.b32.xlu0 %v1827, 72
    %v2692 = vpop.permute.xlu0 %2691
    %2693 = vrot.lane.b32.xlu0 %v1832, 72
    %v2694 = vpop.permute.xlu0 %2693
    %v2695 = vsel %vm314, %v2688, 0
    %v2697 = vsel %vm314, %v2690, 0
    %v2699 = vsel %vm314, %v2692, 0
    %v2701 = vsel %vm314, %v2694, 0
    %2703 = vmatprep.subr.mxu0 0.0
    %2704 = vmatpush1.xpose.msra.mxu0 %v2699
    %2705 = vmatprep.subr.mxu0 0.0
    %2706 = vmatpush1.xpose.msra.mxu0 %v2701
    %2707 = vmatprep.subr.mxu0 0.0
    %2708 = vmatpush1.xpose.msra.mxu0 0.0
    %2709 = vmatprep.subr.mxu0 0.0
    %2710 = vmatpush1.xpose.msra.mxu0 0.0
    %2711 = vmatprep.subr.mxu0 0.0
    %2712 = vmatpush1.xpose.msra.mxu0 0.0
    %2713 = vmatprep.subr.mxu0 0.0
    %2714 = vmatpush1.xpose.msra.mxu0 0.0
    %2715 = vmatprep.subr.mxu0 0.0
    %2716 = vmatpush1.xpose.msra.mxu0 0.0
    %2717 = vmatprep.subr.mxu0 0.0
    %2718 = vmatpush1.xpose.msra.mxu0 0.0
    %2719 = vmatprep.subr.mxu0 0.0
    %2720 = vmatpush1.xpose.msra.mxu0 0.0
    %2721 = vmatprep.subr.mxu0 0.0
    %2722 = vmatpush1.xpose.msra.mxu0 0.0
    %2723 = vmatprep.subr.mxu0 0.0
    %2724 = vmatpush1.xpose.msra.mxu0 0.0
    %2725 = vmatprep.subr.mxu0 0.0
    %2726 = vmatpush1.xpose.msra.mxu0 0.0
    %2727 = vmatprep.subr.mxu0 0.0
    %2728 = vmatpush1.xpose.msra.mxu0 0.0
    %2729 = vmatprep.subr.mxu0 0.0
    %2730 = vmatpush1.xpose.msra.mxu0 0.0
    %2731 = vmatprep.subr.mxu0 0.0
    %2732 = vmatpush1.xpose.msra.mxu0 0.0
    %2733 = vmatprep.subr.mxu0 0.0
    %2734 = vmatpush1.xpose.msra.mxu0 0.0
    %2735 = vmatprep.subr.mxu0 0.0
    %2736 = vmatpush1.xpose.msra.mxu0 0.0
    %2737 = vmatprep.subr.mxu0 0.0
    %2738 = vmatpush1.xpose.msra.mxu0 0.0
    %2739 = vmatprep.subr.mxu0 0.0
    %2740 = vmatpush1.xpose.msra.mxu0 0.0
    %2741 = vmatprep.subr.mxu0 0.0
    %2742 = vmatpush1.xpose.msra.mxu0 0.0
    %2743 = vmatprep.subr.mxu0 0.0
    %2744 = vmatpush1.xpose.msra.mxu0 0.0
    %2745 = vmatprep.subr.mxu0 0.0
    %2746 = vmatpush1.xpose.msra.mxu0 0.0
    %2747 = vmatprep.subr.mxu0 0.0
    %2748 = vmatpush1.xpose.msra.mxu0 0.0
    %2749 = vmatprep.subr.mxu0 0.0
    %2750 = vmatpush1.xpose.msra.mxu0 0.0
    %2751 = vmatprep.subr.mxu0 0.0
    %2752 = vmatpush1.xpose.msra.mxu0 0.0
    %2753 = vmatprep.subr.mxu0 0.0
    %2754 = vmatpush1.xpose.msra.mxu0 0.0
    %2755 = vmatprep.subr.mxu0 0.0
    %2756 = vmatpush1.xpose.msra.mxu0 0.0
    %2757 = vmatprep.subr.mxu0 0.0
    %2758 = vmatpush1.xpose.msra.mxu0 0.0
    %2759 = vmatprep.subr.mxu0 0.0
    %2760 = vmatpush1.xpose.msra.mxu0 0.0
    %2761 = vmatprep.subr.mxu0 0.0
    %2762 = vmatpush1.xpose.msra.mxu0 0.0
    %2763 = vmatprep.subr.mxu0 0.0
    %2764 = vmatpush1.xpose.msra.mxu0 0.0
    %2765 = vmatprep.subr.mxu0 0.0
    %2766 = vmatpush1.xpose.msra.mxu0 0.0
    %2767 = vmatprep.mubr.f32.mxu0 0.0
    %2768 = vmatmul.mubr.f32.gmra.mrb[0].mxu0 %v2695
    %v2769 = vpop.f32.mrb[0].mxu0
    %v2770 = vadd.f32 %v169, %v2769
    %v2771 = vpop.f32.mrb[0].mxu0
    %2772 = vmatprep.mubr.f32.mxu0 0.0
    %2773 = vmatmul.mubr.f32.gmra.mrb[0].mxu0 %v2697
    %v2774 = vpop.f32.mrb[0].mxu0
    %v2775 = vadd.f32 %v170, %v2774
    %v2776 = vpop.f32.mrb[0].mxu0
    %2777 = vdwg.mxu0
    %v2778 = vsel %vm400, %v2770, -inf
    %2779 = vmax.xlane.f32.xlu0 %v2778
    %v2780 = vpop.xlane.xlu0 %2779
    %v2781 = vsel %vm400, %v2775, -inf
    %2782 = vmax.xlane.f32.xlu0 %v2781
    %v2783 = vpop.xlane.xlu0 %2782
    %v2784 = vsub.f32 %v2770, %v2780
    %v2785 = vsub.f32 %v2775, %v2783
    %v2786 = vmul.f32 %v2784, 1.442695
    %v2787 = vpow.pop %v2786
    %v2788 = vmul.f32 %v2785, 1.442695
    %v2789 = vpow.pop %v2788
    %v2790 = vsel %vm400, %v2787, 0.0
    %2791 = vadd.xlane.f32.xlu0 %v2790
    %v2792 = vpop.xlane.xlu0 %2791
    %v2793 = vsel %vm400, %v2789, 0.0
    %2794 = vadd.xlane.f32.xlu0 %v2793
    %v2795 = vpop.xlane.xlu0 %2794
    %v2796 = vrcp.pop %v2792
    %v2797 = vrcp.pop %v2795
    %v2798 = vmul.f32 %v2787, %v2796
    %v2799 = vmul.f32 %v2789, %v2797
    %2800 = vrot.lane.b32.xlu0 %v1827, 40
    %v2801 = vpop.permute.xlu0 %2800
    %2802 = vrot.lane.b32.xlu0 %v1832, 40
    %v2803 = vpop.permute.xlu0 %2802
    %v2807 = vsel %vm400, %v2798, 0
    %v2810 = vsel %vm400, %v2799, 0
    %2812 = vmatprep.subr.mxu0 0.0
    %2813 = vmatpush1.msra.mxu0 %v2801
    %2814 = vmatprep.subr.mxu0 0.0
    %2815 = vmatpush1.msra.mxu0 %v2803
    %2816 = vmatprep.subr.mxu0 0.0
    %2817 = vmatpush1.msra.mxu0 0.0
    %2818 = vmatprep.subr.mxu0 0.0
    %2819 = vmatpush1.msra.mxu0 0.0
    %2820 = vmatprep.subr.mxu0 0.0
    %2821 = vmatpush1.msra.mxu0 0.0
    %2822 = vmatprep.subr.mxu0 0.0
    %2823 = vmatpush1.msra.mxu0 0.0
    %2824 = vmatprep.subr.mxu0 0.0
    %2825 = vmatpush1.msra.mxu0 0.0
    %2826 = vmatprep.subr.mxu0 0.0
    %2827 = vmatpush1.msra.mxu0 0.0
    %2828 = vmatprep.subr.mxu0 0.0
    %2829 = vmatpush1.msra.mxu0 0.0
    %2830 = vmatprep.subr.mxu0 0.0
    %2831 = vmatpush1.msra.mxu0 0.0
    %2832 = vmatprep.subr.mxu0 0.0
    %2833 = vmatpush1.msra.mxu0 0.0
    %2834 = vmatprep.subr.mxu0 0.0
    %2835 = vmatpush1.msra.mxu0 0.0
    %2836 = vmatprep.subr.mxu0 0.0
    %2837 = vmatpush1.msra.mxu0 0.0
    %2838 = vmatprep.subr.mxu0 0.0
    %2839 = vmatpush1.msra.mxu0 0.0
    %2840 = vmatprep.subr.mxu0 0.0
    %2841 = vmatpush1.msra.mxu0 0.0
    %2842 = vmatprep.subr.mxu0 0.0
    %2843 = vmatpush1.msra.mxu0 0.0
    %2844 = vmatprep.subr.mxu0 0.0
    %2845 = vmatpush1.msra.mxu0 0.0
    %2846 = vmatprep.subr.mxu0 0.0
    %2847 = vmatpush1.msra.mxu0 0.0
    %2848 = vmatprep.subr.mxu0 0.0
    %2849 = vmatpush1.msra.mxu0 0.0
    %2850 = vmatprep.subr.mxu0 0.0
    %2851 = vmatpush1.msra.mxu0 0.0
    %2852 = vmatprep.subr.mxu0 0.0
    %2853 = vmatpush1.msra.mxu0 0.0
    %2854 = vmatprep.subr.mxu0 0.0
    %2855 = vmatpush1.msra.mxu0 0.0
    %2856 = vmatprep.subr.mxu0 0.0
    %2857 = vmatpush1.msra.mxu0 0.0
    %2858 = vmatprep.subr.mxu0 0.0
    %2859 = vmatpush1.msra.mxu0 0.0
    %2860 = vmatprep.subr.mxu0 0.0
    %2861 = vmatpush1.msra.mxu0 0.0
    %2862 = vmatprep.subr.mxu0 0.0
    %2863 = vmatpush1.msra.mxu0 0.0
    %2864 = vmatprep.subr.mxu0 0.0
    %2865 = vmatpush1.msra.mxu0 0.0
    %2866 = vmatprep.subr.mxu0 0.0
    %2867 = vmatpush1.msra.mxu0 0.0
    %2868 = vmatprep.subr.mxu0 0.0
    %2869 = vmatpush1.msra.mxu0 0.0
    %2870 = vmatprep.subr.mxu0 0.0
    %2871 = vmatpush1.msra.mxu0 0.0
    %2872 = vmatprep.subr.mxu0 0.0
    %2873 = vmatpush1.msra.mxu0 0.0
    %2874 = vmatprep.subr.mxu0 0.0
    %2875 = vmatpush1.msra.mxu0 0.0
    %2876 = vmatprep.mubr.f32.mxu0 0.0
    %2877 = vmatmul.mubr.f32.gmra.mrb[0].mxu0 %v2807
    %v2878 = vpop.f32.mrb[0].mxu0
    %v2879 = vadd.f32 0.0, %v2878
    %v2880 = vpop.f32.mrb[0].mxu0
    %2881 = vmatprep.mubr.f32.mxu0 0.0
    %2882 = vmatmul.mubr.f32.gmra.mrb[0].mxu0 %v2810
    %v2883 = vpop.f32.mrb[0].mxu0
    %v2884 = vadd.f32 0.0, %v2883
    %v2885 = vpop.f32.mrb[0].mxu0
    %2886 = vdwg.mxu0
    %v2888 = vsel %vm314, %v2879, 0
    %v2891 = vsel %vm314, %v2884, 0
    %2893 = vmatprep.subr.mxu0 0.0
    %2894 = vmatpush1.msra.mxu0 %v1839
    %2895 = vmatprep.subr.mxu0 0.0
    %2896 = vmatpush1.msra.mxu0 0.0
    %2897 = vmatprep.subr.mxu0 0.0
    %2898 = vmatpush1.msra.mxu0 0.0
    %2899 = vmatprep.subr.mxu0 0.0
    %2900 = vmatpush1.msra.mxu0 0.0
    %2901 = vmatprep.subr.mxu0 0.0
    %2902 = vmatpush1.msra.mxu0 0.0
    %2903 = vmatprep.subr.mxu0 0.0
    %2904 = vmatpush1.msra.mxu0 0.0
    %2905 = vmatprep.subr.mxu0 0.0
    %2906 = vmatpush1.msra.mxu0 0.0
    %2907 = vmatprep.subr.mxu0 0.0
    %2908 = vmatpush1.msra.mxu0 0.0
    %2909 = vmatprep.subr.mxu0 0.0
    %2910 = vmatpush1.msra.mxu0 0.0
    %2911 = vmatprep.subr.mxu0 0.0
    %2912 = vmatpush1.msra.mxu0 0.0
    %2913 = vmatprep.subr.mxu0 0.0
    %2914 = vmatpush1.msra.mxu0 0.0
    %2915 = vmatprep.subr.mxu0 0.0
    %2916 = vmatpush1.msra.mxu0 0.0
    %2917 = vmatprep.subr.mxu0 0.0
    %2918 = vmatpush1.msra.mxu0 0.0
    %2919 = vmatprep.subr.mxu0 0.0
    %2920 = vmatpush1.msra.mxu0 0.0
    %2921 = vmatprep.subr.mxu0 0.0
    %2922 = vmatpush1.msra.mxu0 0.0
    %2923 = vmatprep.subr.mxu0 0.0
    %2924 = vmatpush1.msra.mxu0 0.0
    %2925 = vmatprep.subr.mxu0 0.0
    %2926 = vmatpush1.msra.mxu0 0.0
    %2927 = vmatprep.subr.mxu0 0.0
    %2928 = vmatpush1.msra.mxu0 0.0
    %2929 = vmatprep.subr.mxu0 0.0
    %2930 = vmatpush1.msra.mxu0 0.0
    %2931 = vmatprep.subr.mxu0 0.0
    %2932 = vmatpush1.msra.mxu0 0.0
    %2933 = vmatprep.subr.mxu0 0.0
    %2934 = vmatpush1.msra.mxu0 0.0
    %2935 = vmatprep.subr.mxu0 0.0
    %2936 = vmatpush1.msra.mxu0 0.0
    %2937 = vmatprep.subr.mxu0 0.0
    %2938 = vmatpush1.msra.mxu0 0.0
    %2939 = vmatprep.subr.mxu0 0.0
    %2940 = vmatpush1.msra.mxu0 0.0
    %2941 = vmatprep.subr.mxu0 0.0
    %2942 = vmatpush1.msra.mxu0 0.0
    %2943 = vmatprep.subr.mxu0 0.0
    %2944 = vmatpush1.msra.mxu0 0.0
    %2945 = vmatprep.subr.mxu0 0.0
    %2946 = vmatpush1.msra.mxu0 0.0
    %2947 = vmatprep.subr.mxu0 0.0
    %2948 = vmatpush1.msra.mxu0 0.0
    %2949 = vmatprep.subr.mxu0 0.0
    %2950 = vmatpush1.msra.mxu0 0.0
    %2951 = vmatprep.subr.mxu0 0.0
    %2952 = vmatpush1.msra.mxu0 0.0
    %2953 = vmatprep.subr.mxu0 0.0
    %2954 = vmatpush1.msra.mxu0 0.0
    %2955 = vmatprep.subr.mxu0 0.0
    %2956 = vmatpush1.msra.mxu0 0.0
    %2957 = vmatprep.mubr.f32.mxu0 0.0
    %2958 = vmatmul.mubr.f32.gmra.mrb[0].mxu0 %v2888
    %v2959 = vpop.f32.mrb[0].mxu0
    %v2960 = vadd.f32 0.0, %v2959
    %v2961 = vpop.f32.mrb[0].mxu0
    %2962 = vmatprep.mubr.f32.mxu0 0.0
    %2963 = vmatmul.mubr.f32.gmra.mrb[0].mxu0 %v2891
    %v2964 = vpop.f32.mrb[0].mxu0
    %v2965 = vadd.f32 0.0, %v2964
    %v2966 = vpop.f32.mrb[0].mxu0
    %2967 = vdwg.mxu0
    %v2968 = vadd.f32 %v2685, %v2960
    %v2969 = vadd.f32 %v2686, %v2965
    %v2970 = vadd.f32 %v1701, %v2968
    %v2971 = vadd.f32 %v1702, %v2969
    %s2972 = scalar_lea.vmem %s8, 1
    %v2973 = vld [vmem:[%s2972] sm:$0x1]
    %v2975 = vlaneseq
    %v2976 = vshrl.u32 %v2975, 7
    %v2977 = vsub.s32 0, %v2976
    %v2978 = vrot.slane %v2973, %v2977
    %v2980 = vadd.f32 %v2970, %v2978
    %v2981 = vadd.f32 %v2971, %v2978
    %s2982 = scalar_lea.vmem %s9, 1
    %v2983 = vld [vmem:[%s2982] sm:$0x1]
    %s2984 = scalar_lea.vmem %s10, 1
    %v2985 = vld [vmem:[%s2984] sm:$0x1]
    %v2986 = vsel %vm173, %v2980, 0.0
    %2987 = vadd.xlane.f32.xlu0 %v2986
    %v2988 = vpop.xlane.xlu0 %2987
    %v2989 = vsel %vm173, %v2981, 0.0
    %2990 = vadd.xlane.f32.xlu0 %v2989
    %v2991 = vpop.xlane.xlu0 %2990
    %v2992 = vmul.f32 %v2988, %v180
    %v2993 = vmul.f32 %v2991, %v180
    %v2994 = vsub.f32 %v2980, %v2992
    %v2995 = vsub.f32 %v2981, %v2993
    %v2996 = vmul.f32 %v2994, %v2994
    %v2997 = vmul.f32 %v2995, %v2995
    %v2998 = vsel %vm173, %v2996, 0.0
    %2999 = vadd.xlane.f32.xlu0 %v2998
    %v3000 = vpop.xlane.xlu0 %2999
    %v3001 = vsel %vm173, %v2997, 0.0
    %3002 = vadd.xlane.f32.xlu0 %v3001
    %v3003 = vpop.xlane.xlu0 %3002
    %v3004 = vmul.f32 %v3000, %v180
    %v3005 = vmul.f32 %v3003, %v180
    %v3006 = vadd.f32 %v3004, 1e-05
    %v3007 = vadd.f32 %v3005, 1e-05
    %v3008 = vrsqrt.pop %v3006
    %v3009 = vrsqrt.pop %v3007
    %v3010 = vmul.f32 %v2994, %v3008
    %v3011 = vmul.f32 %v2995, %v3009
    %v3013 = vlaneseq
    %v3014 = vshrl.u32 %v3013, 7
    %v3015 = vsub.s32 0, %v3014
    %v3016 = vrot.slane %v2983, %v3015
    %v3018 = vmul.f32 %v3010, %v3016
    %v3019 = vmul.f32 %v3011, %v3016
    %v3021 = vlaneseq
    %v3022 = vshrl.u32 %v3021, 7
    %v3023 = vsub.s32 0, %v3022
    %v3024 = vrot.slane %v2985, %v3023
    %v3026 = vadd.f32 %v3018, %v3024
    %v3027 = vadd.f32 %v3019, %v3024
    %s3028 = scalar_lea.vmem %s11, 32
    %v3029 = vld [vmem:[%s3028] sm:$0xff]
    %v3030 = vld [vmem:[%s3028 + $0x8] sm:$0xff]
    %v3031 = vld [vmem:[%s3028 + $0x10] sm:$0xff]
    %v3032 = vld [vmem:[%s3028 + $0x18] sm:$0xff]
    %s3033 = scalar_lea.vmem %s12, 1
    %v3034 = vld [vmem:[%s3033] sm:$0x1]
    %v3036 = vlaneseq
    %v3037 = vshrl.u32 %v3036, 7
    %v3038 = vsub.s32 0, %v3037
    %v3039 = vrot.slane %v3034, %v3038
    %v3042 = vsel %vm173, %v3026, 0
    %v3045 = vsel %vm173, %v3027, 0
    %3047 = vmatprep.subr.mxu0 0.0
    %3048 = vmatpush1.msra.mxu0 %v3029
    %3049 = vmatprep.subr.mxu0 0.0
    %3050 = vmatpush1.msra.mxu0 %v3030
    %3051 = vmatprep.subr.mxu0 0.0
    %3052 = vmatpush1.msra.mxu0 %v3031
    %3053 = vmatprep.subr.mxu0 0.0
    %3054 = vmatpush1.msra.mxu0 %v3032
    %3055 = vmatprep.subr.mxu0 0.0
    %3056 = vmatpush1.msra.mxu0 0.0
    %3057 = vmatprep.subr.mxu0 0.0
    %3058 = vmatpush1.msra.mxu0 0.0
    %3059 = vmatprep.subr.mxu0 0.0
    %3060 = vmatpush1.msra.mxu0 0.0
    %3061 = vmatprep.subr.mxu0 0.0
    %3062 = vmatpush1.msra.mxu0 0.0
    %3063 = vmatprep.subr.mxu0 0.0
    %3064 = vmatpush1.msra.mxu0 0.0
    %3065 = vmatprep.subr.mxu0 0.0
    %3066 = vmatpush1.msra.mxu0 0.0
    %3067 = vmatprep.subr.mxu0 0.0
    %3068 = vmatpush1.msra.mxu0 0.0
    %3069 = vmatprep.subr.mxu0 0.0
    %3070 = vmatpush1.msra.mxu0 0.0
    %3071 = vmatprep.subr.mxu0 0.0
    %3072 = vmatpush1.msra.mxu0 0.0
    %3073 = vmatprep.subr.mxu0 0.0
    %3074 = vmatpush1.msra.mxu0 0.0
    %3075 = vmatprep.subr.mxu0 0.0
    %3076 = vmatpush1.msra.mxu0 0.0
    %3077 = vmatprep.subr.mxu0 0.0
    %3078 = vmatpush1.msra.mxu0 0.0
    %3079 = vmatprep.subr.mxu0 0.0
    %3080 = vmatpush1.msra.mxu0 0.0
    %3081 = vmatprep.subr.mxu0 0.0
    %3082 = vmatpush1.msra.mxu0 0.0
    %3083 = vmatprep.subr.mxu0 0.0
    %3084 = vmatpush1.msra.mxu0 0.0
    %3085 = vmatprep.subr.mxu0 0.0
    %3086 = vmatpush1.msra.mxu0 0.0
    %3087 = vmatprep.subr.mxu0 0.0
    %3088 = vmatpush1.msra.mxu0 0.0
    %3089 = vmatprep.subr.mxu0 0.0
    %3090 = vmatpush1.msra.mxu0 0.0
    %3091 = vmatprep.subr.mxu0 0.0
    %3092 = vmatpush1.msra.mxu0 0.0
    %3093 = vmatprep.subr.mxu0 0.0
    %3094 = vmatpush1.msra.mxu0 0.0
    %3095 = vmatprep.subr.mxu0 0.0
    %3096 = vmatpush1.msra.mxu0 0.0
    %3097 = vmatprep.subr.mxu0 0.0
    %3098 = vmatpush1.msra.mxu0 0.0
    %3099 = vmatprep.subr.mxu0 0.0
    %3100 = vmatpush1.msra.mxu0 0.0
    %3101 = vmatprep.subr.mxu0 0.0
    %3102 = vmatpush1.msra.mxu0 0.0
    %3103 = vmatprep.subr.mxu0 0.0
    %3104 = vmatpush1.msra.mxu0 0.0
    %3105 = vmatprep.subr.mxu0 0.0
    %3106 = vmatpush1.msra.mxu0 0.0
    %3107 = vmatprep.subr.mxu0 0.0
    %3108 = vmatpush1.msra.mxu0 0.0
    %3109 = vmatprep.subr.mxu0 0.0
    %3110 = vmatpush1.msra.mxu0 0.0
    %3111 = vmatprep.mubr.f32.mxu0 0.0
    %3112 = vmatmul.mubr.f32.gmra.mrb[0].mxu0 %v3042
    %v3113 = vpop.f32.mrb[0].mxu0
    %v3114 = vadd.f32 %v3039, %v3113
    %v3115 = vpop.f32.mrb[0].mxu0
    %3116 = vmatprep.mubr.f32.mxu0 0.0
    %3117 = vmatmul.mubr.f32.gmra.mrb[0].mxu0 %v3045
    %v3118 = vpop.f32.mrb[0].mxu0
    %v3119 = vadd.f32 %v3039, %v3118
    %v3120 = vpop.f32.mrb[0].mxu0
    %3121 = vdwg.mxu0
    %v3122 = vmul.f32 %v3114, 0.5
    %v3123 = vmul.f32 %v3119, 0.5
    %v3124 = vmul.f32 %v3114, %v3114
    %v3125 = vmul.f32 %v3119, %v3119
    %v3126 = vmul.f32 %v3114, %v3124
    %v3127 = vmul.f32 %v3119, %v3125
    %v3128 = vmul.f32 %v3126, 0.044715
    %v3129 = vmul.f32 %v3127, 0.044715
    %v3130 = vadd.f32 %v3114, %v3128
    %v3131 = vadd.f32 %v3119, %v3129
    %v3132 = vmul.f32 %v3130, 0.7978845
    %v3133 = vmul.f32 %v3131, 0.7978845
    %v3134 = vtanh.pop %v3132
    %v3135 = vtanh.pop %v3133
    %v3136 = vadd.f32 %v3134, 1.0
    %v3137 = vadd.f32 %v3135, 1.0
    %v3138 = vmul.f32 %v3122, %v3136
    %v3139 = vmul.f32 %v3123, %v3137
    %s3140 = scalar_lea.vmem %s13, 128
    %v3141 = vld [vmem:[%s3140] sm:$0xff]
    %v3142 = vld [vmem:[%s3140 + $0x8] sm:$0xff]
    %v3143 = vld [vmem:[%s3140 + $0x10] sm:$0xff]
    %v3144 = vld [vmem:[%s3140 + $0x18] sm:$0xff]
    %v3145 = vld [vmem:[%s3140 + $0x20] sm:$0xff]
    %v3146 = vld [vmem:[%s3140 + $0x28] sm:$0xff]
    %v3147 = vld [vmem:[%s3140 + $0x30] sm:$0xff]
    %v3148 = vld [vmem:[%s3140 + $0x38] sm:$0xff]
    %v3149 = vld [vmem:[%s3140 + $0x40] sm:$0xff]
    %v3150 = vld [vmem:[%s3140 + $0x48] sm:$0xff]
    %v3151 = vld [vmem:[%s3140 + $0x50] sm:$0xff]
    %v3152 = vld [vmem:[%s3140 + $0x58] sm:$0xff]
    %v3153 = vld [vmem:[%s3140 + $0x60] sm:$0xff]
    %v3154 = vld [vmem:[%s3140 + $0x68] sm:$0xff]
    %v3155 = vld [vmem:[%s3140 + $0x70] sm:$0xff]
    %v3156 = vld [vmem:[%s3140 + $0x78] sm:$0xff]
    %s3157 = scalar_lea.vmem %s14, 1
    %v3158 = vld [vmem:[%s3157] sm:$0x1]
    %v3160 = vlaneseq
    %v3161 = vshrl.u32 %v3160, 7
    %v3162 = vsub.s32 0, %v3161
    %v3163 = vrot.slane %v3158, %v3162
    %3165 = vmatprep.subr.mxu0 0.0
    %3166 = vmatpush1.msra.mxu0 %v3141
    %3167 = vmatprep.subr.mxu0 0.0
    %3168 = vmatpush1.msra.mxu0 %v3142
    %3169 = vmatprep.subr.mxu0 0.0
    %3170 = vmatpush1.msra.mxu0 %v3143
    %3171 = vmatprep.subr.mxu0 0.0
    %3172 = vmatpush1.msra.mxu0 %v3144
    %3173 = vmatprep.subr.mxu0 0.0
    %3174 = vmatpush1.msra.mxu0 %v3145
    %3175 = vmatprep.subr.mxu0 0.0
    %3176 = vmatpush1.msra.mxu0 %v3146
    %3177 = vmatprep.subr.mxu0 0.0
    %3178 = vmatpush1.msra.mxu0 %v3147
    %3179 = vmatprep.subr.mxu0 0.0
    %3180 = vmatpush1.msra.mxu0 %v3148
    %3181 = vmatprep.subr.mxu0 0.0
    %3182 = vmatpush1.msra.mxu0 %v3149
    %3183 = vmatprep.subr.mxu0 0.0
    %3184 = vmatpush1.msra.mxu0 %v3150
    %3185 = vmatprep.subr.mxu0 0.0
    %3186 = vmatpush1.msra.mxu0 %v3151
    %3187 = vmatprep.subr.mxu0 0.0
    %3188 = vmatpush1.msra.mxu0 %v3152
    %3189 = vmatprep.subr.mxu0 0.0
    %3190 = vmatpush1.msra.mxu0 %v3153
    %3191 = vmatprep.subr.mxu0 0.0
    %3192 = vmatpush1.msra.mxu0 %v3154
    %3193 = vmatprep.subr.mxu0 0.0
    %3194 = vmatpush1.msra.mxu0 %v3155
    %3195 = vmatprep.subr.mxu0 0.0
    %3196 = vmatpush1.msra.mxu0 %v3156
    %3197 = vmatprep.subr.mxu0 0.0
    %3198 = vmatpush1.msra.mxu0 0.0
    %3199 = vmatprep.subr.mxu0 0.0
    %3200 = vmatpush1.msra.mxu0 0.0
    %3201 = vmatprep.subr.mxu0 0.0
    %3202 = vmatpush1.msra.mxu0 0.0
    %3203 = vmatprep.subr.mxu0 0.0
    %3204 = vmatpush1.msra.mxu0 0.0
    %3205 = vmatprep.subr.mxu0 0.0
    %3206 = vmatpush1.msra.mxu0 0.0
    %3207 = vmatprep.subr.mxu0 0.0
    %3208 = vmatpush1.msra.mxu0 0.0
    %3209 = vmatprep.subr.mxu0 0.0
    %3210 = vmatpush1.msra.mxu0 0.0
    %3211 = vmatprep.subr.mxu0 0.0
    %3212 = vmatpush1.msra.mxu0 0.0
    %3213 = vmatprep.subr.mxu0 0.0
    %3214 = vmatpush1.msra.mxu0 0.0
    %3215 = vmatprep.subr.mxu0 0.0
    %3216 = vmatpush1.msra.mxu0 0.0
    %3217 = vmatprep.subr.mxu0 0.0
    %3218 = vmatpush1.msra.mxu0 0.0
    %3219 = vmatprep.subr.mxu0 0.0
    %3220 = vmatpush1.msra.mxu0 0.0
    %3221 = vmatprep.subr.mxu0 0.0
    %3222 = vmatpush1.msra.mxu0 0.0
    %3223 = vmatprep.subr.mxu0 0.0
    %3224 = vmatpush1.msra.mxu0 0.0
    %3225 = vmatprep.subr.mxu0 0.0
    %3226 = vmatpush1.msra.mxu0 0.0
    %3227 = vmatprep.subr.mxu0 0.0
    %3228 = vmatpush1.msra.mxu0 0.0
    %3229 = vmatprep.mubr.f32.mxu0 0.0
    %3230 = vmatmul.mubr.f32.gmra.mrb[0].mxu0 %v3138
    %v3231 = vpop.f32.mrb[0].mxu0
    %v3232 = vadd.f32 %v3163, %v3231
    %v3233 = vpop.f32.mrb[0].mxu0
    %3234 = vmatprep.mubr.f32.mxu0 0.0
    %3235 = vmatmul.mubr.f32.gmra.mrb[0].mxu0 %v3139
    %v3236 = vpop.f32.mrb[0].mxu0
    %v3237 = vadd.f32 %v3163, %v3236
    %v3238 = vpop.f32.mrb[0].mxu0
    %3239 = vdwg.mxu0
    %v3240 = vadd.f32 %v2980, %v3232
    %v3241 = vadd.f32 %v2981, %v3237
    %v3242 = vld [vmem:[%s15] sm:$0x1]
    %v3243 = vld [vmem:[%s16] sm:$0x1]
    %v3244 = vsel %vm173, %v3240, 0.0
    %3245 = vadd.xlane.f32.xlu0 %v3244
    %v3246 = vpop.xlane.xlu0 %3245
    %v3247 = vsel %vm173, %v3241, 0.0
    %3248 = vadd.xlane.f32.xlu0 %v3247
    %v3249 = vpop.xlane.xlu0 %3248
    %v3250 = vmul.f32 %v3246, %v180
    %v3251 = vmul.f32 %v3249, %v180
    %v3252 = vsub.f32 %v3240, %v3250
    %v3253 = vsub.f32 %v3241, %v3251
    %v3254 = vmul.f32 %v3252, %v3252
    %v3255 = vmul.f32 %v3253, %v3253
    %v3256 = vsel %vm173, %v3254, 0.0
    %3257 = vadd.xlane.f32.xlu0 %v3256
    %v3258 = vpop.xlane.xlu0 %3257
    %v3259 = vsel %vm173, %v3255, 0.0
    %3260 = vadd.xlane.f32.xlu0 %v3259
    %v3261 = vpop.xlane.xlu0 %3260
    %v3262 = vmul.f32 %v3258, %v180
    %v3263 = vmul.f32 %v3261, %v180
    %v3264 = vadd.f32 %v3262, 1e-05
    %v3265 = vadd.f32 %v3263, 1e-05
    %v3266 = vrsqrt.pop %v3264
    %v3267 = vrsqrt.pop %v3265
    %v3268 = vmul.f32 %v3252, %v3266
    %v3269 = vmul.f32 %v3253, %v3267
    %v3271 = vlaneseq
    %v3272 = vshrl.u32 %v3271, 7
    %v3273 = vsub.s32 0, %v3272
    %v3274 = vrot.slane %v3242, %v3273
    %v3276 = vmul.f32 %v3268, %v3274
    %v3277 = vmul.f32 %v3269, %v3274
    %v3279 = vlaneseq
    %v3280 = vshrl.u32 %v3279, 7
    %v3281 = vsub.s32 0, %v3280
    %v3282 = vrot.slane %v3243, %v3281
    %v3284 = vadd.f32 %v3276, %v3282
    %v3285 = vadd.f32 %v3277, %v3282
    %v3286 = vld [vmem:[%s17] sm:$0xff]
    %v3287 = vld [vmem:[%s17 + $0x8] sm:$0xff]
    %v3288 = vld [vmem:[%s17 + $0x10] sm:$0xff]
    %v3289 = vld [vmem:[%s17 + $0x18] sm:$0xff]
    %v3291 = vsel %vm173, %v3284, 0
    %v3294 = vsel %vm173, %v3285, 0
    %3296 = vmatprep.subr.mxu0 0.0
    %3297 = vmatpush1.msra.mxu0 %v3286
    %3298 = vmatprep.subr.mxu0 0.0
    %3299 = vmatpush1.msra.mxu0 %v3287
    %3300 = vmatprep.subr.mxu0 0.0
    %3301 = vmatpush1.msra.mxu0 %v3288
    %3302 = vmatprep.subr.mxu0 0.0
    %3303 = vmatpush1.msra.mxu0 %v3289
    %3304 = vmatprep.subr.mxu0 0.0
    %3305 = vmatpush1.msra.mxu0 0.0
    %3306 = vmatprep.subr.mxu0 0.0
    %3307 = vmatpush1.msra.mxu0 0.0
    %3308 = vmatprep.subr.mxu0 0.0
    %3309 = vmatpush1.msra.mxu0 0.0
    %3310 = vmatprep.subr.mxu0 0.0
    %3311 = vmatpush1.msra.mxu0 0.0
    %3312 = vmatprep.subr.mxu0 0.0
    %3313 = vmatpush1.msra.mxu0 0.0
    %3314 = vmatprep.subr.mxu0 0.0
    %3315 = vmatpush1.msra.mxu0 0.0
    %3316 = vmatprep.subr.mxu0 0.0
    %3317 = vmatpush1.msra.mxu0 0.0
    %3318 = vmatprep.subr.mxu0 0.0
    %3319 = vmatpush1.msra.mxu0 0.0
    %3320 = vmatprep.subr.mxu0 0.0
    %3321 = vmatpush1.msra.mxu0 0.0
    %3322 = vmatprep.subr.mxu0 0.0
    %3323 = vmatpush1.msra.mxu0 0.0
    %3324 = vmatprep.subr.mxu0 0.0
    %3325 = vmatpush1.msra.mxu0 0.0
    %3326 = vmatprep.subr.mxu0 0.0
    %3327 = vmatpush1.msra.mxu0 0.0
    %3328 = vmatprep.subr.mxu0 0.0
    %3329 = vmatpush1.msra.mxu0 0.0
    %3330 = vmatprep.subr.mxu0 0.0
    %3331 = vmatpush1.msra.mxu0 0.0
    %3332 = vmatprep.subr.mxu0 0.0
    %3333 = vmatpush1.msra.mxu0 0.0
    %3334 = vmatprep.subr.mxu0 0.0
    %3335 = vmatpush1.msra.mxu0 0.0
    %3336 = vmatprep.subr.mxu0 0.0
    %3337 = vmatpush1.msra.mxu0 0.0
    %3338 = vmatprep.subr.mxu0 0.0
    %3339 = vmatpush1.msra.mxu0 0.0
    %3340 = vmatprep.subr.mxu0 0.0
    %3341 = vmatpush1.msra.mxu0 0.0
    %3342 = vmatprep.subr.mxu0 0.0
    %3343 = vmatpush1.msra.mxu0 0.0
    %3344 = vmatprep.subr.mxu0 0.0
    %3345 = vmatpush1.msra.mxu0 0.0
    %3346 = vmatprep.subr.mxu0 0.0
    %3347 = vmatpush1.msra.mxu0 0.0
    %3348 = vmatprep.subr.mxu0 0.0
    %3349 = vmatpush1.msra.mxu0 0.0
    %3350 = vmatprep.subr.mxu0 0.0
    %3351 = vmatpush1.msra.mxu0 0.0
    %3352 = vmatprep.subr.mxu0 0.0
    %3353 = vmatpush1.msra.mxu0 0.0
    %3354 = vmatprep.subr.mxu0 0.0
    %3355 = vmatpush1.msra.mxu0 0.0
    %3356 = vmatprep.subr.mxu0 0.0
    %3357 = vmatpush1.msra.mxu0 0.0
    %3358 = vmatprep.subr.mxu0 0.0
    %3359 = vmatpush1.msra.mxu0 0.0
    %3360 = vmatprep.mubr.f32.mxu0 0.0
    %3361 = vmatmul.mubr.f32.gmra.mrb[0].mxu0 %v3291
    %v3362 = vpop.f32.mrb[0].mxu0
    %v3363 = vadd.f32 0.0, %v3362
    %v3364 = vpop.f32.mrb[0].mxu0
    %3365 = vmatprep.mubr.f32.mxu0 0.0
    %3366 = vmatmul.mubr.f32.gmra.mrb[0].mxu0 %v3294
    %v3367 = vpop.f32.mrb[0].mxu0
    %v3368 = vadd.f32 0.0, %v3367
    %v3369 = vpop.f32.mrb[0].mxu0
    %3370 = vdwg.mxu0
    %3371 = vst [vmem:[#allocation2] sm:$0xff] %v3363
    %3372 = vst [vmem:[#allocation2 + $0x8] sm:$0xff] %v3368
    // Predicated region
    $region74: #{_lambda_.1} parent=1 // pred_check
      _
    $region75: #{_lambda_.1} parent=1 // pred_check_branch
      %3374 = sbr.rel (0) target = $region77
    $region76: #{_lambda_.1} parent=1 // pred_region
      %s3376 = ssub.s32 256, 256
      %3377 = vsyncadd [#allocation3], %s3376
      %s3378 = sshll.u32 [#allocation2], 4
      %s3379 = int_to_ptr.vmem [resolvable:$true] %s3378
      %3384 = dma.vmem_to_hbm [thread:$0]  %s3379, 256, %s18, [#allocation3], 128, 128, 8
    $region77: #{_lambda_.1} parent=1 // pred_fallthru
      _
    // Predicated region
    $region78: #{_lambda_.1} parent=1 // pred_check
      _
    $region79: #{_lambda_.1} parent=1 // pred_check_branch
      %3386 = sbr.rel (0) target = $region81
    $region80: #{_lambda_.1} parent=1 // pred_region
      %3387 = dma.done [#allocation3], 256
    $region81: #{_lambda_.1} parent=1 // pred_fallthru
      _
    %3388 = vsyncpa [#allocation3], 1

</llo_original>
